<compile_context>
chip_gen: v5e
topology: v5e:2x2
jax: 0.10.0
libtpu: 0.0.40
codegen_flags: <defaults>
</compile_context>

<pallas_src>
import jax
import jax.numpy as jnp
import numpy as np
from jax.experimental import pallas as pl
from jax.experimental.pallas import tpu as pltpu  # noqa: F401  (kept for TPU-specific tuning hooks)


def _round_up(x, m):
    return ((x + m - 1) // m) * m


def gru_linear_kernel(gi_ref, wh_ref, bhn_ref, wl_ref, bl_ref, out_ref, hfin_ref):
    # gi_ref:  (T, Bp, 3*Hp) f32   precomputed input projections (+ fused biases)
    # wh_ref:  (Hp, 3*Hp)    bf16  [W_hr | W_hz | W_hn] transposed, zero-padded
    # bhn_ref: (1, Hp)       f32   b_hn
    # wl_ref:  (Hp, Vp)      bf16  Linear weight transposed, zero-padded
    # bl_ref:  (1, Vp)       f32   Linear bias, zero-padded
    # out_ref: (T*Bp, Vp)    f32   logits, row t*Bp + b
    # hfin_ref:(Bp, Hp)      f32   final hidden state
    T, Bp, _ = gi_ref.shape
    Hp = hfin_ref.shape[-1]
    bhn = bhn_ref[...]

    h = jnp.zeros((Bp, Hp), jnp.float32)
    h_steps = []
    # T is a small compile-time constant (8): fully unrolled, static indices.
    for t in range(T):
        gi = gi_ref[t]                                                   # (Bp, 3Hp) f32
        # Recurrent matmul on the critical path: bf16 operands, f32 accumulate.
        gh = jnp.dot(h.astype(jnp.bfloat16), wh_ref[...],
                     preferred_element_type=jnp.float32)                 # (Bp, 3Hp)
        # PyTorch GRU gate equations (gate order r, z, n); slices are
        # lane-aligned because Hp is a multiple of 128.  Elementwise in f32.
        r = jax.nn.sigmoid(gi[:, 0:Hp] + gh[:, 0:Hp])
        z = jax.nn.sigmoid(gi[:, Hp:2 * Hp] + gh[:, Hp:2 * Hp])
        n = jnp.tanh(gi[:, 2 * Hp:3 * Hp] + r * (gh[:, 2 * Hp:3 * Hp] + bhn))
        h = (1.0 - z) * n + z * h
        h_steps.append(h.astype(jnp.bfloat16))

    hfin_ref[...] = h

    # Epilogue: one lane-dense matmul over all time steps at once, directly
    # from register-resident per-step hidden states (no VMEM scratch round-trip).
    hall = jnp.concatenate(h_steps, axis=0)                              # (T*Bp, Hp) bf16
    out_ref[...] = (jnp.dot(hall, wl_ref[...],
                            preferred_element_type=jnp.float32) + bl_ref[...])


def model5_forward(tokens, params):
    """tokens: (B, T) int32. Returns (out (B*T, V), h (1, B, H))."""
    B, T = tokens.shape
    emb = params["embed"]                     # (V, E)
    V, E = emb.shape
    H = params["whr"].shape[0]

    Hp = _round_up(H, 128)                    # 250 -> 256
    Vp = _round_up(V, 128)                    # 50  -> 128
    Bp = _round_up(B, 8)                      # 2   -> 8

    def pad2(a, r, c):
        return jnp.pad(a, ((0, r - a.shape[0]), (0, c - a.shape[1])))

    # Fused + padded weights (gate order r, z, n). Zero padding keeps padded
    # hidden lanes exactly 0 through the recurrence and out of the logits.
    wi_all = jnp.concatenate(
        [pad2(params["wir"], E, Hp),
         pad2(params["wiz"], E, Hp),
         pad2(params["win"], E, Hp)], axis=1)                         # (E, 3Hp) f32
    bi_all = jnp.concatenate(
        [pad2(params["bir"] + params["bhr"], 1, Hp),
         pad2(params["biz"] + params["bhz"], 1, Hp),
         pad2(params["bin"], 1, Hp)], axis=1)                         # (1, 3Hp) f32
    wh_all = jnp.concatenate(
        [pad2(params["whr"], Hp, Hp),
         pad2(params["whz"], Hp, Hp),
         pad2(params["whn"], Hp, Hp)], axis=1).astype(jnp.bfloat16)   # (Hp, 3Hp) bf16
    bhn = pad2(params["bhn"], 1, Hp)                                  # (1, Hp) f32
    wl = pad2(params["wl"], Hp, Vp).astype(jnp.bfloat16)              # (Hp, Vp) bf16
    bl = pad2(params["bl"], 1, Vp)                                    # (1, Vp) f32

    # Fold the embedding lookup into the (non-recurrent) input projection:
    # P[v] = emb[v] @ [W_ir|W_iz|W_in].  The gather is done as XLA glue.
    # TODO(synk): gather stays outside the kernel (row gather is cheap XLA at these sizes).
    proj = jnp.dot(emb, wi_all)                                       # (V, 3Hp) f32
    gi = proj[tokens] + bi_all                                        # (B, T, 3Hp)
    gi = jnp.pad(gi, ((0, Bp - B), (0, 0), (0, 0)))                   # (Bp, T, 3Hp)
    gi_tm = jnp.transpose(gi, (1, 0, 2)).astype(jnp.float32)          # (T, Bp, 3Hp)

    out_p, hfin_p = pl.pallas_call(
        gru_linear_kernel,
        out_shape=(jax.ShapeDtypeStruct((T * Bp, Vp), jnp.float32),
                   jax.ShapeDtypeStruct((Bp, Hp), jnp.float32)),
    )(gi_tm, wh_all, bhn, wl, bl)

    # PyTorch: out (B, T, H) -> view(B*T, H) -> linear -> (B*T, V); row = b*T + t.
    logits = out_p.reshape(T, Bp, Vp)[:, :B, :V]                      # (T, B, V)
    out = jnp.transpose(logits, (1, 0, 2)).reshape(B * T, V)
    h = hfin_p[:B, :H][None]                                          # (1, B, H)
    return out, h


def _reference_forward(tokens, params):
    """Pure-JAX f32 reference of the PyTorch forward (for correctness check)."""
    B, T = tokens.shape
    emb = params["embed"]
    V, E = emb.shape
    H = params["whr"].shape[0]
    x = emb[tokens]                                                   # (B, T, E)
    h = jnp.zeros((B, H), jnp.float32)
    outs = []
    for t in range(T):
        x_t = x[:, t, :]
        r = jax.nn.sigmoid(x_t @ params["wir"] + params["bir"] + h @ params["whr"] + params["bhr"])
        z = jax.nn.sigmoid(x_t @ params["wiz"] + params["biz"] + h @ params["whz"] + params["bhz"])
        n = jnp.tanh(x_t @ params["win"] + params["bin"] + r * (h @ params["whn"] + params["bhn"]))
        h = (1.0 - z) * n + z * h
        outs.append(h)
    hs = jnp.stack(outs, axis=1)                                      # (B, T, H)
    out = hs.reshape(B * T, H) @ params["wl"] + params["bl"]
    return out, h[None]


def init_params(key, vocab_size, embed_size, hidden_size):
    ks = jax.random.split(key, 16)
    bound = 1.0 / float(np.sqrt(hidden_size))

    def u(k, shape, b):
        return jax.random.uniform(k, shape, jnp.float32, -b, b)

    params = {
        # nn.Embedding default init: N(0, 1)
        "embed": jax.random.normal(ks[0], (vocab_size, embed_size), jnp.float32),
        # nn.GRU default init: U(-1/sqrt(H), 1/sqrt(H)); stored transposed + split by gate (r, z, n)
        "wir": u(ks[1], (embed_size, hidden_size), bound),
        "wiz": u(ks[2], (embed_size, hidden_size), bound),
        "win": u(ks[3], (embed_size, hidden_size), bound),
        "whr": u(ks[4], (hidden_size, hidden_size), bound),
        "whz": u(ks[5], (hidden_size, hidden_size), bound),
        "whn": u(ks[6], (hidden_size, hidden_size), bound),
        "bir": u(ks[7], (1, hidden_size), bound),
        "biz": u(ks[8], (1, hidden_size), bound),
        "bin": u(ks[9], (1, hidden_size), bound),
        "bhr": u(ks[10], (1, hidden_size), bound),
        "bhz": u(ks[11], (1, hidden_size), bound),
        "bhn": u(ks[12], (1, hidden_size), bound),
        # init_weights(): linear.weight ~ U(-0.1, 0.1), linear.bias = 0
        "wl": jax.random.uniform(ks[13], (hidden_size, vocab_size), jnp.float32, -0.1, 0.1),
        "bl": jnp.zeros((1, vocab_size), jnp.float32),
    }
    return params


if __name__ == "__main__":
    # Small shapes consistent with the module (module fixes hidden_size=250).
    VOCAB = 50
    EMBED = 32
    HIDDEN = 250
    B, T = 2, 8

    key = jax.random.PRNGKey(0)
    kp, kx = jax.random.split(key)
    params = init_params(kp, VOCAB, EMBED, HIDDEN)
    tokens = jax.random.randint(kx, (B, T), 0, VOCAB, dtype=jnp.int32)

    out, h = jax.jit(model5_forward)(tokens, params)
    jax.block_until_ready((out, h))
    assert out.shape == (B * T, VOCAB)
    assert h.shape == (1, B, HIDDEN)
    assert bool(jnp.all(jnp.isfinite(out))) and bool(jnp.all(jnp.isfinite(h)))

    # Correctness vs pure-JAX f32 reference (generous tolerance for the
    # documented bf16-MXU-operand drift).
    out_ref, h_ref = _reference_forward(tokens, params)
    assert float(jnp.max(jnp.abs(out - out_ref))) < 0.1
    assert float(jnp.max(jnp.abs(h - h_ref))) < 0.1

    print("KERNEL_OK")
</pallas_src>

<mosaic_0001>
module attributes {stable_mosaic.version = 11 : i64} {
  func.func @gru_linear_kernel(%arg0: memref<8x8x768xf32, #tpu.memory_space<vmem>>, %arg1: memref<256x768xbf16, #tpu.memory_space<vmem>>, %arg2: memref<1x256xf32, #tpu.memory_space<vmem>>, %arg3: memref<256x128xbf16, #tpu.memory_space<vmem>>, %arg4: memref<1x128xf32, #tpu.memory_space<vmem>>, %arg5: memref<64x128xf32, #tpu.memory_space<vmem>>, %arg6: memref<8x256xf32, #tpu.memory_space<vmem>>) attributes {dimension_semantics = [], scalar_prefetch = 0 : i64, scratch_operands = 0 : i64, tpu.core_type = #tpu.core_type<tc>} {
    %c0 = arith.constant 0 : index
    %c0_0 = arith.constant 0 : index
    %0 = vector.load %arg2[%c0, %c0_0] : memref<1x256xf32, #tpu.memory_space<vmem>>, vector<1x256xf32>
    %cst = arith.constant 0.000000e+00 : f32
    %1 = vector.broadcast %cst : f32 to vector<8x256xf32>
    %c0_1 = arith.constant 0 : index
    %c0_2 = arith.constant 0 : index
    %c0_3 = arith.constant 0 : index
    %2 = vector.load %arg0[%c0_1, %c0_2, %c0_3] : memref<8x8x768xf32, #tpu.memory_space<vmem>>, vector<1x8x768xf32>
    %3 = vector.shape_cast %2 : vector<1x8x768xf32> to vector<8x768xf32>
    %4 = arith.truncf %1 : vector<8x256xf32> to vector<8x256xbf16>
    %c0_4 = arith.constant 0 : index
    %c0_5 = arith.constant 0 : index
    %5 = vector.load %arg1[%c0_4, %c0_5] : memref<256x768xbf16, #tpu.memory_space<vmem>>, vector<256x768xbf16>
    %cst_6 = arith.constant dense<0.000000e+00> : vector<8x768xf32>
    %6 = tpu.matmul %4, %5, %cst_6 {dimension_numbers = #tpu.dot_dimension_numbers<[1], [0], [0], [1], [0, 0, 1, 1], [], []>} : vector<8x256xbf16>, vector<256x768xbf16>, vector<8x768xf32> -> vector<8x768xf32>
    %7 = vector.extract_strided_slice %3 {offsets = [0, 0], sizes = [8, 256], strides = [1, 1]} : vector<8x768xf32> to vector<8x256xf32>
    %8 = vector.extract_strided_slice %6 {offsets = [0, 0], sizes = [8, 256], strides = [1, 1]} : vector<8x768xf32> to vector<8x256xf32>
    %9 = arith.addf %7, %8 : vector<8x256xf32>
    %10 = arith.negf %9 : vector<8x256xf32>
    %11 = math.exp %10 : vector<8x256xf32>
    %cst_7 = arith.constant 1.000000e+00 : f32
    %12 = vector.broadcast %cst_7 : f32 to vector<8x256xf32>
    %13 = arith.addf %12, %11 : vector<8x256xf32>
    %14 = arith.divf %12, %13 : vector<8x256xf32>
    %15 = vector.extract_strided_slice %3 {offsets = [0, 256], sizes = [8, 256], strides = [1, 1]} : vector<8x768xf32> to vector<8x256xf32>
    %16 = vector.extract_strided_slice %6 {offsets = [0, 256], sizes = [8, 256], strides = [1, 1]} : vector<8x768xf32> to vector<8x256xf32>
    %17 = arith.addf %15, %16 : vector<8x256xf32>
    %18 = arith.negf %17 : vector<8x256xf32>
    %19 = math.exp %18 : vector<8x256xf32>
    %cst_8 = arith.constant 1.000000e+00 : f32
    %20 = vector.broadcast %cst_8 : f32 to vector<8x256xf32>
    %21 = arith.addf %20, %19 : vector<8x256xf32>
    %22 = arith.divf %20, %21 : vector<8x256xf32>
    %23 = vector.extract_strided_slice %3 {offsets = [0, 512], sizes = [8, 256], strides = [1, 1]} : vector<8x768xf32> to vector<8x256xf32>
    %24 = vector.extract_strided_slice %6 {offsets = [0, 512], sizes = [8, 256], strides = [1, 1]} : vector<8x768xf32> to vector<8x256xf32>
    %25 = vector.broadcast %0 : vector<1x256xf32> to vector<8x256xf32>
    %26 = arith.addf %24, %25 : vector<8x256xf32>
    %27 = arith.mulf %14, %26 : vector<8x256xf32>
    %28 = arith.addf %23, %27 : vector<8x256xf32>
    %29 = math.tanh %28 : vector<8x256xf32>
    %cst_9 = arith.constant 1.000000e+00 : f32
    %30 = vector.broadcast %cst_9 : f32 to vector<8x256xf32>
    %31 = arith.subf %30, %22 : vector<8x256xf32>
    %32 = arith.mulf %31, %29 : vector<8x256xf32>
    %33 = arith.mulf %22, %1 : vector<8x256xf32>
    %34 = arith.addf %32, %33 : vector<8x256xf32>
    %35 = arith.truncf %34 : vector<8x256xf32> to vector<8x256xbf16>
    %c1 = arith.constant 1 : index
    %c0_10 = arith.constant 0 : index
    %c0_11 = arith.constant 0 : index
    %36 = vector.load %arg0[%c1, %c0_10, %c0_11] : memref<8x8x768xf32, #tpu.memory_space<vmem>>, vector<1x8x768xf32>
    %37 = vector.shape_cast %36 : vector<1x8x768xf32> to vector<8x768xf32>
    %38 = arith.truncf %34 : vector<8x256xf32> to vector<8x256xbf16>
    %c0_12 = arith.constant 0 : index
    %c0_13 = arith.constant 0 : index
    %39 = vector.load %arg1[%c0_12, %c0_13] : memref<256x768xbf16, #tpu.memory_space<vmem>>, vector<256x768xbf16>
    %cst_14 = arith.constant dense<0.000000e+00> : vector<8x768xf32>
    %40 = tpu.matmul %38, %39, %cst_14 {dimension_numbers = #tpu.dot_dimension_numbers<[1], [0], [0], [1], [0, 0, 1, 1], [], []>} : vector<8x256xbf16>, vector<256x768xbf16>, vector<8x768xf32> -> vector<8x768xf32>
    %41 = vector.extract_strided_slice %37 {offsets = [0, 0], sizes = [8, 256], strides = [1, 1]} : vector<8x768xf32> to vector<8x256xf32>
    %42 = vector.extract_strided_slice %40 {offsets = [0, 0], sizes = [8, 256], strides = [1, 1]} : vector<8x768xf32> to vector<8x256xf32>
    %43 = arith.addf %41, %42 : vector<8x256xf32>
    %44 = arith.negf %43 : vector<8x256xf32>
    %45 = math.exp %44 : vector<8x256xf32>
    %cst_15 = arith.constant 1.000000e+00 : f32
    %46 = vector.broadcast %cst_15 : f32 to vector<8x256xf32>
    %47 = arith.addf %46, %45 : vector<8x256xf32>
    %48 = arith.divf %46, %47 : vector<8x256xf32>
    %49 = vector.extract_strided_slice %37 {offsets = [0, 256], sizes = [8, 256], strides = [1, 1]} : vector<8x768xf32> to vector<8x256xf32>
    %50 = vector.extract_strided_slice %40 {offsets = [0, 256], sizes = [8, 256], strides = [1, 1]} : vector<8x768xf32> to vector<8x256xf32>
    %51 = arith.addf %49, %50 : vector<8x256xf32>
    %52 = arith.negf %51 : vector<8x256xf32>
    %53 = math.exp %52 : vector<8x256xf32>
    %cst_16 = arith.constant 1.000000e+00 : f32
    %54 = vector.broadcast %cst_16 : f32 to vector<8x256xf32>
    %55 = arith.addf %54, %53 : vector<8x256xf32>
    %56 = arith.divf %54, %55 : vector<8x256xf32>
    %57 = vector.extract_strided_slice %37 {offsets = [0, 512], sizes = [8, 256], strides = [1, 1]} : vector<8x768xf32> to vector<8x256xf32>
    %58 = vector.extract_strided_slice %40 {offsets = [0, 512], sizes = [8, 256], strides = [1, 1]} : vector<8x768xf32> to vector<8x256xf32>
    %59 = vector.broadcast %0 : vector<1x256xf32> to vector<8x256xf32>
    %60 = arith.addf %58, %59 : vector<8x256xf32>
    %61 = arith.mulf %48, %60 : vector<8x256xf32>
    %62 = arith.addf %57, %61 : vector<8x256xf32>
    %63 = math.tanh %62 : vector<8x256xf32>
    %cst_17 = arith.constant 1.000000e+00 : f32
    %64 = vector.broadcast %cst_17 : f32 to vector<8x256xf32>
    %65 = arith.subf %64, %56 : vector<8x256xf32>
    %66 = arith.mulf %65, %63 : vector<8x256xf32>
    %67 = arith.mulf %56, %34 : vector<8x256xf32>
    %68 = arith.addf %66, %67 : vector<8x256xf32>
    %69 = arith.truncf %68 : vector<8x256xf32> to vector<8x256xbf16>
    %c2 = arith.constant 2 : index
    %c0_18 = arith.constant 0 : index
    %c0_19 = arith.constant 0 : index
    %70 = vector.load %arg0[%c2, %c0_18, %c0_19] : memref<8x8x768xf32, #tpu.memory_space<vmem>>, vector<1x8x768xf32>
    %71 = vector.shape_cast %70 : vector<1x8x768xf32> to vector<8x768xf32>
    %72 = arith.truncf %68 : vector<8x256xf32> to vector<8x256xbf16>
    %c0_20 = arith.constant 0 : index
    %c0_21 = arith.constant 0 : index
    %73 = vector.load %arg1[%c0_20, %c0_21] : memref<256x768xbf16, #tpu.memory_space<vmem>>, vector<256x768xbf16>
    %cst_22 = arith.constant dense<0.000000e+00> : vector<8x768xf32>
    %74 = tpu.matmul %72, %73, %cst_22 {dimension_numbers = #tpu.dot_dimension_numbers<[1], [0], [0], [1], [0, 0, 1, 1], [], []>} : vector<8x256xbf16>, vector<256x768xbf16>, vector<8x768xf32> -> vector<8x768xf32>
    %75 = vector.extract_strided_slice %71 {offsets = [0, 0], sizes = [8, 256], strides = [1, 1]} : vector<8x768xf32> to vector<8x256xf32>
    %76 = vector.extract_strided_slice %74 {offsets = [0, 0], sizes = [8, 256], strides = [1, 1]} : vector<8x768xf32> to vector<8x256xf32>
    %77 = arith.addf %75, %76 : vector<8x256xf32>
    %78 = arith.negf %77 : vector<8x256xf32>
    %79 = math.exp %78 : vector<8x256xf32>
    %cst_23 = arith.constant 1.000000e+00 : f32
    %80 = vector.broadcast %cst_23 : f32 to vector<8x256xf32>
    %81 = arith.addf %80, %79 : vector<8x256xf32>
    %82 = arith.divf %80, %81 : vector<8x256xf32>
    %83 = vector.extract_strided_slice %71 {offsets = [0, 256], sizes = [8, 256], strides = [1, 1]} : vector<8x768xf32> to vector<8x256xf32>
    %84 = vector.extract_strided_slice %74 {offsets = [0, 256], sizes = [8, 256], strides = [1, 1]} : vector<8x768xf32> to vector<8x256xf32>
    %85 = arith.addf %83, %84 : vector<8x256xf32>
    %86 = arith.negf %85 : vector<8x256xf32>
    %87 = math.exp %86 : vector<8x256xf32>
    %cst_24 = arith.constant 1.000000e+00 : f32
    %88 = vector.broadcast %cst_24 : f32 to vector<8x256xf32>
    %89 = arith.addf %88, %87 : vector<8x256xf32>
    %90 = arith.divf %88, %89 : vector<8x256xf32>
    %91 = vector.extract_strided_slice %71 {offsets = [0, 512], sizes = [8, 256], strides = [1, 1]} : vector<8x768xf32> to vector<8x256xf32>
    %92 = vector.extract_strided_slice %74 {offsets = [0, 512], sizes = [8, 256], strides = [1, 1]} : vector<8x768xf32> to vector<8x256xf32>
    %93 = vector.broadcast %0 : vector<1x256xf32> to vector<8x256xf32>
    %94 = arith.addf %92, %93 : vector<8x256xf32>
    %95 = arith.mulf %82, %94 : vector<8x256xf32>
    %96 = arith.addf %91, %95 : vector<8x256xf32>
    %97 = math.tanh %96 : vector<8x256xf32>
    %cst_25 = arith.constant 1.000000e+00 : f32
    %98 = vector.broadcast %cst_25 : f32 to vector<8x256xf32>
    %99 = arith.subf %98, %90 : vector<8x256xf32>
    %100 = arith.mulf %99, %97 : vector<8x256xf32>
    %101 = arith.mulf %90, %68 : vector<8x256xf32>
    %102 = arith.addf %100, %101 : vector<8x256xf32>
    %103 = arith.truncf %102 : vector<8x256xf32> to vector<8x256xbf16>
    %c3 = arith.constant 3 : index
    %c0_26 = arith.constant 0 : index
    %c0_27 = arith.constant 0 : index
    %104 = vector.load %arg0[%c3, %c0_26, %c0_27] : memref<8x8x768xf32, #tpu.memory_space<vmem>>, vector<1x8x768xf32>
    %105 = vector.shape_cast %104 : vector<1x8x768xf32> to vector<8x768xf32>
    %106 = arith.truncf %102 : vector<8x256xf32> to vector<8x256xbf16>
    %c0_28 = arith.constant 0 : index
    %c0_29 = arith.constant 0 : index
    %107 = vector.load %arg1[%c0_28, %c0_29] : memref<256x768xbf16, #tpu.memory_space<vmem>>, vector<256x768xbf16>
    %cst_30 = arith.constant dense<0.000000e+00> : vector<8x768xf32>
    %108 = tpu.matmul %106, %107, %cst_30 {dimension_numbers = #tpu.dot_dimension_numbers<[1], [0], [0], [1], [0, 0, 1, 1], [], []>} : vector<8x256xbf16>, vector<256x768xbf16>, vector<8x768xf32> -> vector<8x768xf32>
    %109 = vector.extract_strided_slice %105 {offsets = [0, 0], sizes = [8, 256], strides = [1, 1]} : vector<8x768xf32> to vector<8x256xf32>
    %110 = vector.extract_strided_slice %108 {offsets = [0, 0], sizes = [8, 256], strides = [1, 1]} : vector<8x768xf32> to vector<8x256xf32>
    %111 = arith.addf %109, %110 : vector<8x256xf32>
    %112 = arith.negf %111 : vector<8x256xf32>
    %113 = math.exp %112 : vector<8x256xf32>
    %cst_31 = arith.constant 1.000000e+00 : f32
    %114 = vector.broadcast %cst_31 : f32 to vector<8x256xf32>
    %115 = arith.addf %114, %113 : vector<8x256xf32>
    %116 = arith.divf %114, %115 : vector<8x256xf32>
    %117 = vector.extract_strided_slice %105 {offsets = [0, 256], sizes = [8, 256], strides = [1, 1]} : vector<8x768xf32> to vector<8x256xf32>
    %118 = vector.extract_strided_slice %108 {offsets = [0, 256], sizes = [8, 256], strides = [1, 1]} : vector<8x768xf32> to vector<8x256xf32>
    %119 = arith.addf %117, %118 : vector<8x256xf32>
    %120 = arith.negf %119 : vector<8x256xf32>
    %121 = math.exp %120 : vector<8x256xf32>
    %cst_32 = arith.constant 1.000000e+00 : f32
    %122 = vector.broadcast %cst_32 : f32 to vector<8x256xf32>
    %123 = arith.addf %122, %121 : vector<8x256xf32>
    %124 = arith.divf %122, %123 : vector<8x256xf32>
    %125 = vector.extract_strided_slice %105 {offsets = [0, 512], sizes = [8, 256], strides = [1, 1]} : vector<8x768xf32> to vector<8x256xf32>
    %126 = vector.extract_strided_slice %108 {offsets = [0, 512], sizes = [8, 256], strides = [1, 1]} : vector<8x768xf32> to vector<8x256xf32>
    %127 = vector.broadcast %0 : vector<1x256xf32> to vector<8x256xf32>
    %128 = arith.addf %126, %127 : vector<8x256xf32>
    %129 = arith.mulf %116, %128 : vector<8x256xf32>
    %130 = arith.addf %125, %129 : vector<8x256xf32>
    %131 = math.tanh %130 : vector<8x256xf32>
    %cst_33 = arith.constant 1.000000e+00 : f32
    %132 = vector.broadcast %cst_33 : f32 to vector<8x256xf32>
    %133 = arith.subf %132, %124 : vector<8x256xf32>
    %134 = arith.mulf %133, %131 : vector<8x256xf32>
    %135 = arith.mulf %124, %102 : vector<8x256xf32>
    %136 = arith.addf %134, %135 : vector<8x256xf32>
    %137 = arith.truncf %136 : vector<8x256xf32> to vector<8x256xbf16>
    %c4 = arith.constant 4 : index
    %c0_34 = arith.constant 0 : index
    %c0_35 = arith.constant 0 : index
    %138 = vector.load %arg0[%c4, %c0_34, %c0_35] : memref<8x8x768xf32, #tpu.memory_space<vmem>>, vector<1x8x768xf32>
    %139 = vector.shape_cast %138 : vector<1x8x768xf32> to vector<8x768xf32>
    %140 = arith.truncf %136 : vector<8x256xf32> to vector<8x256xbf16>
    %c0_36 = arith.constant 0 : index
    %c0_37 = arith.constant 0 : index
    %141 = vector.load %arg1[%c0_36, %c0_37] : memref<256x768xbf16, #tpu.memory_space<vmem>>, vector<256x768xbf16>
    %cst_38 = arith.constant dense<0.000000e+00> : vector<8x768xf32>
    %142 = tpu.matmul %140, %141, %cst_38 {dimension_numbers = #tpu.dot_dimension_numbers<[1], [0], [0], [1], [0, 0, 1, 1], [], []>} : vector<8x256xbf16>, vector<256x768xbf16>, vector<8x768xf32> -> vector<8x768xf32>
    %143 = vector.extract_strided_slice %139 {offsets = [0, 0], sizes = [8, 256], strides = [1, 1]} : vector<8x768xf32> to vector<8x256xf32>
    %144 = vector.extract_strided_slice %142 {offsets = [0, 0], sizes = [8, 256], strides = [1, 1]} : vector<8x768xf32> to vector<8x256xf32>
    %145 = arith.addf %143, %144 : vector<8x256xf32>
    %146 = arith.negf %145 : vector<8x256xf32>
    %147 = math.exp %146 : vector<8x256xf32>
    %cst_39 = arith.constant 1.000000e+00 : f32
    %148 = vector.broadcast %cst_39 : f32 to vector<8x256xf32>
    %149 = arith.addf %148, %147 : vector<8x256xf32>
    %150 = arith.divf %148, %149 : vector<8x256xf32>
    %151 = vector.extract_strided_slice %139 {offsets = [0, 256], sizes = [8, 256], strides = [1, 1]} : vector<8x768xf32> to vector<8x256xf32>
    %152 = vector.extract_strided_slice %142 {offsets = [0, 256], sizes = [8, 256], strides = [1, 1]} : vector<8x768xf32> to vector<8x256xf32>
    %153 = arith.addf %151, %152 : vector<8x256xf32>
    %154 = arith.negf %153 : vector<8x256xf32>
    %155 = math.exp %154 : vector<8x256xf32>
    %cst_40 = arith.constant 1.000000e+00 : f32
    %156 = vector.broadcast %cst_40 : f32 to vector<8x256xf32>
    %157 = arith.addf %156, %155 : vector<8x256xf32>
    %158 = arith.divf %156, %157 : vector<8x256xf32>
    %159 = vector.extract_strided_slice %139 {offsets = [0, 512], sizes = [8, 256], strides = [1, 1]} : vector<8x768xf32> to vector<8x256xf32>
    %160 = vector.extract_strided_slice %142 {offsets = [0, 512], sizes = [8, 256], strides = [1, 1]} : vector<8x768xf32> to vector<8x256xf32>
    %161 = vector.broadcast %0 : vector<1x256xf32> to vector<8x256xf32>
    %162 = arith.addf %160, %161 : vector<8x256xf32>
    %163 = arith.mulf %150, %162 : vector<8x256xf32>
    %164 = arith.addf %159, %163 : vector<8x256xf32>
    %165 = math.tanh %164 : vector<8x256xf32>
    %cst_41 = arith.constant 1.000000e+00 : f32
    %166 = vector.broadcast %cst_41 : f32 to vector<8x256xf32>
    %167 = arith.subf %166, %158 : vector<8x256xf32>
    %168 = arith.mulf %167, %165 : vector<8x256xf32>
    %169 = arith.mulf %158, %136 : vector<8x256xf32>
    %170 = arith.addf %168, %169 : vector<8x256xf32>
    %171 = arith.truncf %170 : vector<8x256xf32> to vector<8x256xbf16>
    %c5 = arith.constant 5 : index
    %c0_42 = arith.constant 0 : index
    %c0_43 = arith.constant 0 : index
    %172 = vector.load %arg0[%c5, %c0_42, %c0_43] : memref<8x8x768xf32, #tpu.memory_space<vmem>>, vector<1x8x768xf32>
    %173 = vector.shape_cast %172 : vector<1x8x768xf32> to vector<8x768xf32>
    %174 = arith.truncf %170 : vector<8x256xf32> to vector<8x256xbf16>
    %c0_44 = arith.constant 0 : index
    %c0_45 = arith.constant 0 : index
    %175 = vector.load %arg1[%c0_44, %c0_45] : memref<256x768xbf16, #tpu.memory_space<vmem>>, vector<256x768xbf16>
    %cst_46 = arith.constant dense<0.000000e+00> : vector<8x768xf32>
    %176 = tpu.matmul %174, %175, %cst_46 {dimension_numbers = #tpu.dot_dimension_numbers<[1], [0], [0], [1], [0, 0, 1, 1], [], []>} : vector<8x256xbf16>, vector<256x768xbf16>, vector<8x768xf32> -> vector<8x768xf32>
    %177 = vector.extract_strided_slice %173 {offsets = [0, 0], sizes = [8, 256], strides = [1, 1]} : vector<8x768xf32> to vector<8x256xf32>
    %178 = vector.extract_strided_slice %176 {offsets = [0, 0], sizes = [8, 256], strides = [1, 1]} : vector<8x768xf32> to vector<8x256xf32>
    %179 = arith.addf %177, %178 : vector<8x256xf32>
    %180 = arith.negf %179 : vector<8x256xf32>
    %181 = math.exp %180 : vector<8x256xf32>
    %cst_47 = arith.constant 1.000000e+00 : f32
    %182 = vector.broadcast %cst_47 : f32 to vector<8x256xf32>
    %183 = arith.addf %182, %181 : vector<8x256xf32>
    %184 = arith.divf %182, %183 : vector<8x256xf32>
    %185 = vector.extract_strided_slice %173 {offsets = [0, 256], sizes = [8, 256], strides = [1, 1]} : vector<8x768xf32> to vector<8x256xf32>
    %186 = vector.extract_strided_slice %176 {offsets = [0, 256], sizes = [8, 256], strides = [1, 1]} : vector<8x768xf32> to vector<8x256xf32>
    %187 = arith.addf %185, %186 : vector<8x256xf32>
    %188 = arith.negf %187 : vector<8x256xf32>
    %189 = math.exp %188 : vector<8x256xf32>
    %cst_48 = arith.constant 1.000000e+00 : f32
    %190 = vector.broadcast %cst_48 : f32 to vector<8x256xf32>
    %191 = arith.addf %190, %189 : vector<8x256xf32>
    %192 = arith.divf %190, %191 : vector<8x256xf32>
    %193 = vector.extract_strided_slice %173 {offsets = [0, 512], sizes = [8, 256], strides = [1, 1]} : vector<8x768xf32> to vector<8x256xf32>
    %194 = vector.extract_strided_slice %176 {offsets = [0, 512], sizes = [8, 256], strides = [1, 1]} : vector<8x768xf32> to vector<8x256xf32>
    %195 = vector.broadcast %0 : vector<1x256xf32> to vector<8x256xf32>
    %196 = arith.addf %194, %195 : vector<8x256xf32>
    %197 = arith.mulf %184, %196 : vector<8x256xf32>
    %198 = arith.addf %193, %197 : vector<8x256xf32>
    %199 = math.tanh %198 : vector<8x256xf32>
    %cst_49 = arith.constant 1.000000e+00 : f32
    %200 = vector.broadcast %cst_49 : f32 to vector<8x256xf32>
    %201 = arith.subf %200, %192 : vector<8x256xf32>
    %202 = arith.mulf %201, %199 : vector<8x256xf32>
    %203 = arith.mulf %192, %170 : vector<8x256xf32>
    %204 = arith.addf %202, %203 : vector<8x256xf32>
    %205 = arith.truncf %204 : vector<8x256xf32> to vector<8x256xbf16>
    %c6 = arith.constant 6 : index
    %c0_50 = arith.constant 0 : index
    %c0_51 = arith.constant 0 : index
    %206 = vector.load %arg0[%c6, %c0_50, %c0_51] : memref<8x8x768xf32, #tpu.memory_space<vmem>>, vector<1x8x768xf32>
    %207 = vector.shape_cast %206 : vector<1x8x768xf32> to vector<8x768xf32>
    %208 = arith.truncf %204 : vector<8x256xf32> to vector<8x256xbf16>
    %c0_52 = arith.constant 0 : index
    %c0_53 = arith.constant 0 : index
    %209 = vector.load %arg1[%c0_52, %c0_53] : memref<256x768xbf16, #tpu.memory_space<vmem>>, vector<256x768xbf16>
    %cst_54 = arith.constant dense<0.000000e+00> : vector<8x768xf32>
    %210 = tpu.matmul %208, %209, %cst_54 {dimension_numbers = #tpu.dot_dimension_numbers<[1], [0], [0], [1], [0, 0, 1, 1], [], []>} : vector<8x256xbf16>, vector<256x768xbf16>, vector<8x768xf32> -> vector<8x768xf32>
    %211 = vector.extract_strided_slice %207 {offsets = [0, 0], sizes = [8, 256], strides = [1, 1]} : vector<8x768xf32> to vector<8x256xf32>
    %212 = vector.extract_strided_slice %210 {offsets = [0, 0], sizes = [8, 256], strides = [1, 1]} : vector<8x768xf32> to vector<8x256xf32>
    %213 = arith.addf %211, %212 : vector<8x256xf32>
    %214 = arith.negf %213 : vector<8x256xf32>
    %215 = math.exp %214 : vector<8x256xf32>
    %cst_55 = arith.constant 1.000000e+00 : f32
    %216 = vector.broadcast %cst_55 : f32 to vector<8x256xf32>
    %217 = arith.addf %216, %215 : vector<8x256xf32>
    %218 = arith.divf %216, %217 : vector<8x256xf32>
    %219 = vector.extract_strided_slice %207 {offsets = [0, 256], sizes = [8, 256], strides = [1, 1]} : vector<8x768xf32> to vector<8x256xf32>
    %220 = vector.extract_strided_slice %210 {offsets = [0, 256], sizes = [8, 256], strides = [1, 1]} : vector<8x768xf32> to vector<8x256xf32>
    %221 = arith.addf %219, %220 : vector<8x256xf32>
    %222 = arith.negf %221 : vector<8x256xf32>
    %223 = math.exp %222 : vector<8x256xf32>
    %cst_56 = arith.constant 1.000000e+00 : f32
    %224 = vector.broadcast %cst_56 : f32 to vector<8x256xf32>
    %225 = arith.addf %224, %223 : vector<8x256xf32>
    %226 = arith.divf %224, %225 : vector<8x256xf32>
    %227 = vector.extract_strided_slice %207 {offsets = [0, 512], sizes = [8, 256], strides = [1, 1]} : vector<8x768xf32> to vector<8x256xf32>
    %228 = vector.extract_strided_slice %210 {offsets = [0, 512], sizes = [8, 256], strides = [1, 1]} : vector<8x768xf32> to vector<8x256xf32>
    %229 = vector.broadcast %0 : vector<1x256xf32> to vector<8x256xf32>
    %230 = arith.addf %228, %229 : vector<8x256xf32>
    %231 = arith.mulf %218, %230 : vector<8x256xf32>
    %232 = arith.addf %227, %231 : vector<8x256xf32>
    %233 = math.tanh %232 : vector<8x256xf32>
    %cst_57 = arith.constant 1.000000e+00 : f32
    %234 = vector.broadcast %cst_57 : f32 to vector<8x256xf32>
    %235 = arith.subf %234, %226 : vector<8x256xf32>
    %236 = arith.mulf %235, %233 : vector<8x256xf32>
    %237 = arith.mulf %226, %204 : vector<8x256xf32>
    %238 = arith.addf %236, %237 : vector<8x256xf32>
    %239 = arith.truncf %238 : vector<8x256xf32> to vector<8x256xbf16>
    %c7 = arith.constant 7 : index
    %c0_58 = arith.constant 0 : index
    %c0_59 = arith.constant 0 : index
    %240 = vector.load %arg0[%c7, %c0_58, %c0_59] : memref<8x8x768xf32, #tpu.memory_space<vmem>>, vector<1x8x768xf32>
    %241 = vector.shape_cast %240 : vector<1x8x768xf32> to vector<8x768xf32>
    %242 = arith.truncf %238 : vector<8x256xf32> to vector<8x256xbf16>
    %c0_60 = arith.constant 0 : index
    %c0_61 = arith.constant 0 : index
    %243 = vector.load %arg1[%c0_60, %c0_61] : memref<256x768xbf16, #tpu.memory_space<vmem>>, vector<256x768xbf16>
    %cst_62 = arith.constant dense<0.000000e+00> : vector<8x768xf32>
    %244 = tpu.matmul %242, %243, %cst_62 {dimension_numbers = #tpu.dot_dimension_numbers<[1], [0], [0], [1], [0, 0, 1, 1], [], []>} : vector<8x256xbf16>, vector<256x768xbf16>, vector<8x768xf32> -> vector<8x768xf32>
    %245 = vector.extract_strided_slice %241 {offsets = [0, 0], sizes = [8, 256], strides = [1, 1]} : vector<8x768xf32> to vector<8x256xf32>
    %246 = vector.extract_strided_slice %244 {offsets = [0, 0], sizes = [8, 256], strides = [1, 1]} : vector<8x768xf32> to vector<8x256xf32>
    %247 = arith.addf %245, %246 : vector<8x256xf32>
    %248 = arith.negf %247 : vector<8x256xf32>
    %249 = math.exp %248 : vector<8x256xf32>
    %cst_63 = arith.constant 1.000000e+00 : f32
    %250 = vector.broadcast %cst_63 : f32 to vector<8x256xf32>
    %251 = arith.addf %250, %249 : vector<8x256xf32>
    %252 = arith.divf %250, %251 : vector<8x256xf32>
    %253 = vector.extract_strided_slice %241 {offsets = [0, 256], sizes = [8, 256], strides = [1, 1]} : vector<8x768xf32> to vector<8x256xf32>
    %254 = vector.extract_strided_slice %244 {offsets = [0, 256], sizes = [8, 256], strides = [1, 1]} : vector<8x768xf32> to vector<8x256xf32>
    %255 = arith.addf %253, %254 : vector<8x256xf32>
    %256 = arith.negf %255 : vector<8x256xf32>
    %257 = math.exp %256 : vector<8x256xf32>
    %cst_64 = arith.constant 1.000000e+00 : f32
    %258 = vector.broadcast %cst_64 : f32 to vector<8x256xf32>
    %259 = arith.addf %258, %257 : vector<8x256xf32>
    %260 = arith.divf %258, %259 : vector<8x256xf32>
    %261 = vector.extract_strided_slice %241 {offsets = [0, 512], sizes = [8, 256], strides = [1, 1]} : vector<8x768xf32> to vector<8x256xf32>
    %262 = vector.extract_strided_slice %244 {offsets = [0, 512], sizes = [8, 256], strides = [1, 1]} : vector<8x768xf32> to vector<8x256xf32>
    %263 = vector.broadcast %0 : vector<1x256xf32> to vector<8x256xf32>
    %264 = arith.addf %262, %263 : vector<8x256xf32>
    %265 = arith.mulf %252, %264 : vector<8x256xf32>
    %266 = arith.addf %261, %265 : vector<8x256xf32>
    %267 = math.tanh %266 : vector<8x256xf32>
    %cst_65 = arith.constant 1.000000e+00 : f32
    %268 = vector.broadcast %cst_65 : f32 to vector<8x256xf32>
    %269 = arith.subf %268, %260 : vector<8x256xf32>
    %270 = arith.mulf %269, %267 : vector<8x256xf32>
    %271 = arith.mulf %260, %238 : vector<8x256xf32>
    %272 = arith.addf %270, %271 : vector<8x256xf32>
    %273 = arith.truncf %272 : vector<8x256xf32> to vector<8x256xbf16>
    %c0_66 = arith.constant 0 : index
    %c0_67 = arith.constant 0 : index
    %274 = vector.load %arg6[%c0_66, %c0_67] : memref<8x256xf32, #tpu.memory_space<vmem>>, vector<8x256xf32>
    tpu.vector_store %arg6[%c0_66, %c0_67], %272 {strides = array<i32>} : memref<8x256xf32, #tpu.memory_space<vmem>>, vector<8x256xf32>,
    %275 = tpu.concatenate %35, %69, %103, %137, %171, %205, %239, %273 in 0 : vector<8x256xbf16>, vector<8x256xbf16>, vector<8x256xbf16>, vector<8x256xbf16>, vector<8x256xbf16>, vector<8x256xbf16>, vector<8x256xbf16>, vector<8x256xbf16> -> vector<64x256xbf16>
    %c0_68 = arith.constant 0 : index
    %c0_69 = arith.constant 0 : index
    %276 = vector.load %arg3[%c0_68, %c0_69] : memref<256x128xbf16, #tpu.memory_space<vmem>>, vector<256x128xbf16>
    %cst_70 = arith.constant dense<0.000000e+00> : vector<64x128xf32>
    %277 = tpu.matmul %275, %276, %cst_70 {dimension_numbers = #tpu.dot_dimension_numbers<[1], [0], [0], [1], [0, 0, 1, 1], [], []>} : vector<64x256xbf16>, vector<256x128xbf16>, vector<64x128xf32> -> vector<64x128xf32>
    %c0_71 = arith.constant 0 : index
    %c0_72 = arith.constant 0 : index
    %278 = vector.load %arg4[%c0_71, %c0_72] : memref<1x128xf32, #tpu.memory_space<vmem>>, vector<1x128xf32>
    %279 = vector.broadcast %278 : vector<1x128xf32> to vector<64x128xf32>
    %280 = arith.addf %277, %279 : vector<64x128xf32>
    %c0_73 = arith.constant 0 : index
    %c0_74 = arith.constant 0 : index
    %281 = vector.load %arg5[%c0_73, %c0_74] : memref<64x128xf32, #tpu.memory_space<vmem>>, vector<64x128xf32>
    tpu.vector_store %arg5[%c0_73, %c0_74], %280 {strides = array<i32>} : memref<64x128xf32, #tpu.memory_space<vmem>>, vector<64x128xf32>,
    return
  }
}

</mosaic_0001>

<llo_original>
// kernel: model5_forward.1
$region0: #{model5_forward.1}
  #allocation0 [shape = 'u32[]', space=smem, size = 0x4, offset = 0x4, fixed_abs, tag = 'smem constant byte address 0x4 - core index']
  #allocation1 [shape = 'u32[72,128]{1,0:T(1,128)}', space=vmem, size = 0x9000, scoped, tag = 'internal scratch']
  %s0 = inlined_call_operand.vmem [shape: f32[8,8,768], index: 0, kind: input, shape index: {}]
  %s1 = inlined_call_operand.vmem [shape: bf16[256,768], index: 1, kind: input, shape index: {}]
  %s2 = inlined_call_operand.vmem [shape: f32[1,256], index: 2, kind: input, shape index: {}]
  %s3 = inlined_call_operand.vmem [shape: bf16[256,128], index: 3, kind: input, shape index: {}]
  %s4 = inlined_call_operand.vmem [shape: f32[1,128], index: 4, kind: input, shape index: {}]
  %s5 = inlined_call_operand.vmem [shape: f32[64,128], index: 5, kind: output, shape index: {0}]
  %s6 = inlined_call_operand.vmem [shape: f32[8,256], index: 6, kind: output, shape index: {1}]
  %7 = xla_tuple %s5, %s6
  %s8 = sld [smem:[#allocation0]]
  $region38: #{model5_forward.1} parent=0
    _
  %s10 = ssub.s32 1, %s8
  %s11 = scalar_select 0, %s10, %s8
  // Predicated region
  $region2: #{model5_forward.1} parent=0 // pred_check
    _
  $region3: #{model5_forward.1} parent=0 // pred_check_branch
    %13 = sbr.rel (0) target = $region5
  $region4: #{model5_forward.1} parent=0 // pred_region
    _
  $region5: #{model5_forward.1} parent=0 // pred_fallthru
    _
  // Predicated region
  $region6: #{model5_forward.1} parent=0 // pred_check
    _
  $region7: #{model5_forward.1} parent=0 // pred_check_branch
    %15 = sbr.rel (0) target = $region9
  $region8: #{model5_forward.1} parent=0 // pred_region
    _
  $region9: #{model5_forward.1} parent=0 // pred_fallthru
    _
  // Predicated region
  $region10: #{model5_forward.1} parent=0 // pred_check
    _
  $region11: #{model5_forward.1} parent=0 // pred_check_branch
    %17 = sbr.rel (0) target = $region13
  $region12: #{model5_forward.1} parent=0 // pred_region
    _
  $region13: #{model5_forward.1} parent=0 // pred_fallthru
    _
  // Predicated region
  $region14: #{model5_forward.1} parent=0 // pred_check
    _
  $region15: #{model5_forward.1} parent=0 // pred_check_branch
    %19 = sbr.rel (0) target = $region17
  $region16: #{model5_forward.1} parent=0 // pred_region
    _
  $region17: #{model5_forward.1} parent=0 // pred_fallthru
    _
  // Predicated region
  $region18: #{model5_forward.1} parent=0 // pred_check
    _
  $region19: #{model5_forward.1} parent=0 // pred_check_branch
    %21 = sbr.rel (0) target = $region21
  $region20: #{model5_forward.1} parent=0 // pred_region
    _
  $region21: #{model5_forward.1} parent=0 // pred_fallthru
    _
  %v23 = vld [vmem:[%s2] sm:$0x3]
  %v24 = vld [vmem:[%s0] sm:$0xff]
  %v25 = vld [vmem:[%s0 + $0x8] sm:$0xff]
  %v26 = vld [vmem:[%s0 + $0x10] sm:$0xff]
  %v27 = vld [vmem:[%s0 + $0x18] sm:$0xff]
  %v28 = vld [vmem:[%s0 + $0x20] sm:$0xff]
  %v29 = vld [vmem:[%s0 + $0x28] sm:$0xff]
  %v30 = vld [vmem:[%s1] sm:$0xff]
  %v31 = vld [vmem:[%s1 + $0x8] sm:$0xff]
  %v32 = vld [vmem:[%s1 + $0x10] sm:$0xff]
  %v33 = vld [vmem:[%s1 + $0x18] sm:$0xff]
  %v34 = vld [vmem:[%s1 + $0x20] sm:$0xff]
  %v35 = vld [vmem:[%s1 + $0x28] sm:$0xff]
  %v36 = vld [vmem:[%s1 + $0x30] sm:$0xff]
  %v37 = vld [vmem:[%s1 + $0x38] sm:$0xff]
  %v38 = vld [vmem:[%s1 + $0x40] sm:$0xff]
  %v39 = vld [vmem:[%s1 + $0x48] sm:$0xff]
  %v40 = vld [vmem:[%s1 + $0x50] sm:$0xff]
  %v41 = vld [vmem:[%s1 + $0x58] sm:$0xff]
  %v42 = vld [vmem:[%s1 + $0x60] sm:$0xff]
  %v43 = vld [vmem:[%s1 + $0x68] sm:$0xff]
  %v44 = vld [vmem:[%s1 + $0x70] sm:$0xff]
  %v45 = vld [vmem:[%s1 + $0x78] sm:$0xff]
  %v46 = vld [vmem:[%s1 + $0x80] sm:$0xff]
  %v47 = vld [vmem:[%s1 + $0x88] sm:$0xff]
  %v48 = vld [vmem:[%s1 + $0x90] sm:$0xff]
  %v49 = vld [vmem:[%s1 + $0x98] sm:$0xff]
  %v50 = vld [vmem:[%s1 + $0xa0] sm:$0xff]
  %v51 = vld [vmem:[%s1 + $0xa8] sm:$0xff]
  %v52 = vld [vmem:[%s1 + $0xb0] sm:$0xff]
  %v53 = vld [vmem:[%s1 + $0xb8] sm:$0xff]
  %v54 = vld [vmem:[%s1 + $0xc0] sm:$0xff]
  %v55 = vld [vmem:[%s1 + $0xc8] sm:$0xff]
  %v56 = vld [vmem:[%s1 + $0xd0] sm:$0xff]
  %v57 = vld [vmem:[%s1 + $0xd8] sm:$0xff]
  %v58 = vld [vmem:[%s1 + $0xe0] sm:$0xff]
  %v59 = vld [vmem:[%s1 + $0xe8] sm:$0xff]
  %v60 = vld [vmem:[%s1 + $0xf0] sm:$0xff]
  %v61 = vld [vmem:[%s1 + $0xf8] sm:$0xff]
  %v62 = vld [vmem:[%s1 + $0x100] sm:$0xff]
  %v63 = vld [vmem:[%s1 + $0x108] sm:$0xff]
  %v64 = vld [vmem:[%s1 + $0x110] sm:$0xff]
  %v65 = vld [vmem:[%s1 + $0x118] sm:$0xff]
  %v66 = vld [vmem:[%s1 + $0x120] sm:$0xff]
  %v67 = vld [vmem:[%s1 + $0x128] sm:$0xff]
  %v68 = vld [vmem:[%s1 + $0x130] sm:$0xff]
  %v69 = vld [vmem:[%s1 + $0x138] sm:$0xff]
  %v70 = vld [vmem:[%s1 + $0x140] sm:$0xff]
  %v71 = vld [vmem:[%s1 + $0x148] sm:$0xff]
  %v72 = vld [vmem:[%s1 + $0x150] sm:$0xff]
  %v73 = vld [vmem:[%s1 + $0x158] sm:$0xff]
  %v74 = vld [vmem:[%s1 + $0x160] sm:$0xff]
  %v75 = vld [vmem:[%s1 + $0x168] sm:$0xff]
  %v76 = vld [vmem:[%s1 + $0x170] sm:$0xff]
  %v77 = vld [vmem:[%s1 + $0x178] sm:$0xff]
  %v78 = vld [vmem:[%s1 + $0x180] sm:$0xff]
  %v79 = vld [vmem:[%s1 + $0x188] sm:$0xff]
  %v80 = vld [vmem:[%s1 + $0x190] sm:$0xff]
  %v81 = vld [vmem:[%s1 + $0x198] sm:$0xff]
  %v82 = vld [vmem:[%s1 + $0x1a0] sm:$0xff]
  %v83 = vld [vmem:[%s1 + $0x1a8] sm:$0xff]
  %v84 = vld [vmem:[%s1 + $0x1b0] sm:$0xff]
  %v85 = vld [vmem:[%s1 + $0x1b8] sm:$0xff]
  %v86 = vld [vmem:[%s1 + $0x1c0] sm:$0xff]
  %v87 = vld [vmem:[%s1 + $0x1c8] sm:$0xff]
  %v88 = vld [vmem:[%s1 + $0x1d0] sm:$0xff]
  %v89 = vld [vmem:[%s1 + $0x1d8] sm:$0xff]
  %v90 = vld [vmem:[%s1 + $0x1e0] sm:$0xff]
  %v91 = vld [vmem:[%s1 + $0x1e8] sm:$0xff]
  %v92 = vld [vmem:[%s1 + $0x1f0] sm:$0xff]
  %v93 = vld [vmem:[%s1 + $0x1f8] sm:$0xff]
  %v94 = vld [vmem:[%s1 + $0x200] sm:$0xff]
  %v95 = vld [vmem:[%s1 + $0x208] sm:$0xff]
  %v96 = vld [vmem:[%s1 + $0x210] sm:$0xff]
  %v97 = vld [vmem:[%s1 + $0x218] sm:$0xff]
  %v98 = vld [vmem:[%s1 + $0x220] sm:$0xff]
  %v99 = vld [vmem:[%s1 + $0x228] sm:$0xff]
  %v100 = vld [vmem:[%s1 + $0x230] sm:$0xff]
  %v101 = vld [vmem:[%s1 + $0x238] sm:$0xff]
  %v102 = vld [vmem:[%s1 + $0x240] sm:$0xff]
  %v103 = vld [vmem:[%s1 + $0x248] sm:$0xff]
  %v104 = vld [vmem:[%s1 + $0x250] sm:$0xff]
  %v105 = vld [vmem:[%s1 + $0x258] sm:$0xff]
  %v106 = vld [vmem:[%s1 + $0x260] sm:$0xff]
  %v107 = vld [vmem:[%s1 + $0x268] sm:$0xff]
  %v108 = vld [vmem:[%s1 + $0x270] sm:$0xff]
  %v109 = vld [vmem:[%s1 + $0x278] sm:$0xff]
  %v110 = vld [vmem:[%s1 + $0x280] sm:$0xff]
  %v111 = vld [vmem:[%s1 + $0x288] sm:$0xff]
  %v112 = vld [vmem:[%s1 + $0x290] sm:$0xff]
  %v113 = vld [vmem:[%s1 + $0x298] sm:$0xff]
  %v114 = vld [vmem:[%s1 + $0x2a0] sm:$0xff]
  %v115 = vld [vmem:[%s1 + $0x2a8] sm:$0xff]
  %v116 = vld [vmem:[%s1 + $0x2b0] sm:$0xff]
  %v117 = vld [vmem:[%s1 + $0x2b8] sm:$0xff]
  %v118 = vld [vmem:[%s1 + $0x2c0] sm:$0xff]
  %v119 = vld [vmem:[%s1 + $0x2c8] sm:$0xff]
  %v120 = vld [vmem:[%s1 + $0x2d0] sm:$0xff]
  %v121 = vld [vmem:[%s1 + $0x2d8] sm:$0xff]
  %v122 = vld [vmem:[%s1 + $0x2e0] sm:$0xff]
  %v123 = vld [vmem:[%s1 + $0x2e8] sm:$0xff]
  %v124 = vld [vmem:[%s1 + $0x2f0] sm:$0xff]
  %v125 = vld [vmem:[%s1 + $0x2f8] sm:$0xff]
  %v222 = vunpack.c.l.b16 %v30
  %v223 = vunpack.c.h.b16 %v30
  %v224 = vunpack.c.l.b16 %v31
  %v225 = vunpack.c.h.b16 %v31
  %v226 = vunpack.c.l.b16 %v32
  %v227 = vunpack.c.h.b16 %v32
  %v228 = vunpack.c.l.b16 %v33
  %v229 = vunpack.c.h.b16 %v33
  %v230 = vunpack.c.l.b16 %v34
  %v231 = vunpack.c.h.b16 %v34
  %v232 = vunpack.c.l.b16 %v35
  %v233 = vunpack.c.h.b16 %v35
  %v234 = vunpack.c.l.b16 %v36
  %v235 = vunpack.c.h.b16 %v36
  %v236 = vunpack.c.l.b16 %v37
  %v237 = vunpack.c.h.b16 %v37
  %v238 = vunpack.c.l.b16 %v38
  %v239 = vunpack.c.h.b16 %v38
  %v240 = vunpack.c.l.b16 %v39
  %v241 = vunpack.c.h.b16 %v39
  %v242 = vunpack.c.l.b16 %v40
  %v243 = vunpack.c.h.b16 %v40
  %v244 = vunpack.c.l.b16 %v41
  %v245 = vunpack.c.h.b16 %v41
  %v246 = vunpack.c.l.b16 %v42
  %v247 = vunpack.c.h.b16 %v42
  %v248 = vunpack.c.l.b16 %v43
  %v249 = vunpack.c.h.b16 %v43
  %v250 = vunpack.c.l.b16 %v44
  %v251 = vunpack.c.h.b16 %v44
  %v252 = vunpack.c.l.b16 %v45
  %v253 = vunpack.c.h.b16 %v45
  %v254 = vunpack.c.l.b16 %v46
  %v255 = vunpack.c.h.b16 %v46
  %v256 = vunpack.c.l.b16 %v47
  %v257 = vunpack.c.h.b16 %v47
  %v258 = vunpack.c.l.b16 %v48
  %v259 = vunpack.c.h.b16 %v48
  %v260 = vunpack.c.l.b16 %v49
  %v261 = vunpack.c.h.b16 %v49
  %v262 = vunpack.c.l.b16 %v50
  %v263 = vunpack.c.h.b16 %v50
  %v264 = vunpack.c.l.b16 %v51
  %v265 = vunpack.c.h.b16 %v51
  %v266 = vunpack.c.l.b16 %v52
  %v267 = vunpack.c.h.b16 %v52
  %v268 = vunpack.c.l.b16 %v53
  %v269 = vunpack.c.h.b16 %v53
  %v270 = vunpack.c.l.b16 %v54
  %v271 = vunpack.c.h.b16 %v54
  %v272 = vunpack.c.l.b16 %v55
  %v273 = vunpack.c.h.b16 %v55
  %v274 = vunpack.c.l.b16 %v56
  %v275 = vunpack.c.h.b16 %v56
  %v276 = vunpack.c.l.b16 %v57
  %v277 = vunpack.c.h.b16 %v57
  %v278 = vunpack.c.l.b16 %v58
  %v279 = vunpack.c.h.b16 %v58
  %v280 = vunpack.c.l.b16 %v59
  %v281 = vunpack.c.h.b16 %v59
  %v282 = vunpack.c.l.b16 %v60
  %v283 = vunpack.c.h.b16 %v60
  %v284 = vunpack.c.l.b16 %v61
  %v285 = vunpack.c.h.b16 %v61
  %v286 = vunpack.c.l.b16 %v62
  %v287 = vunpack.c.h.b16 %v62
  %v288 = vunpack.c.l.b16 %v63
  %v289 = vunpack.c.h.b16 %v63
  %v290 = vunpack.c.l.b16 %v64
  %v291 = vunpack.c.h.b16 %v64
  %v292 = vunpack.c.l.b16 %v65
  %v293 = vunpack.c.h.b16 %v65
  %v294 = vunpack.c.l.b16 %v66
  %v295 = vunpack.c.h.b16 %v66
  %v296 = vunpack.c.l.b16 %v67
  %v297 = vunpack.c.h.b16 %v67
  %v298 = vunpack.c.l.b16 %v68
  %v299 = vunpack.c.h.b16 %v68
  %v300 = vunpack.c.l.b16 %v69
  %v301 = vunpack.c.h.b16 %v69
  %v302 = vunpack.c.l.b16 %v70
  %v303 = vunpack.c.h.b16 %v70
  %v304 = vunpack.c.l.b16 %v71
  %v305 = vunpack.c.h.b16 %v71
  %v306 = vunpack.c.l.b16 %v72
  %v307 = vunpack.c.h.b16 %v72
  %v308 = vunpack.c.l.b16 %v73
  %v309 = vunpack.c.h.b16 %v73
  %v310 = vunpack.c.l.b16 %v74
  %v311 = vunpack.c.h.b16 %v74
  %v312 = vunpack.c.l.b16 %v75
  %v313 = vunpack.c.h.b16 %v75
  %v314 = vunpack.c.l.b16 %v76
  %v315 = vunpack.c.h.b16 %v76
  %v316 = vunpack.c.l.b16 %v77
  %v317 = vunpack.c.h.b16 %v77
  %v318 = vunpack.c.l.b16 %v78
  %v319 = vunpack.c.h.b16 %v78
  %v320 = vunpack.c.l.b16 %v79
  %v321 = vunpack.c.h.b16 %v79
  %v322 = vunpack.c.l.b16 %v80
  %v323 = vunpack.c.h.b16 %v80
  %v324 = vunpack.c.l.b16 %v81
  %v325 = vunpack.c.h.b16 %v81
  %v326 = vunpack.c.l.b16 %v82
  %v327 = vunpack.c.h.b16 %v82
  %v328 = vunpack.c.l.b16 %v83
  %v329 = vunpack.c.h.b16 %v83
  %v330 = vunpack.c.l.b16 %v84
  %v331 = vunpack.c.h.b16 %v84
  %v332 = vunpack.c.l.b16 %v85
  %v333 = vunpack.c.h.b16 %v85
  %v334 = vunpack.c.l.b16 %v86
  %v335 = vunpack.c.h.b16 %v86
  %v336 = vunpack.c.l.b16 %v87
  %v337 = vunpack.c.h.b16 %v87
  %v338 = vunpack.c.l.b16 %v88
  %v339 = vunpack.c.h.b16 %v88
  %v340 = vunpack.c.l.b16 %v89
  %v341 = vunpack.c.h.b16 %v89
  %v342 = vunpack.c.l.b16 %v90
  %v343 = vunpack.c.h.b16 %v90
  %v344 = vunpack.c.l.b16 %v91
  %v345 = vunpack.c.h.b16 %v91
  %v346 = vunpack.c.l.b16 %v92
  %v347 = vunpack.c.h.b16 %v92
  %v348 = vunpack.c.l.b16 %v93
  %v349 = vunpack.c.h.b16 %v93
  %v350 = vunpack.c.l.b16 %v94
  %v351 = vunpack.c.h.b16 %v94
  %v352 = vunpack.c.l.b16 %v95
  %v353 = vunpack.c.h.b16 %v95
  %v354 = vunpack.c.l.b16 %v96
  %v355 = vunpack.c.h.b16 %v96
  %v356 = vunpack.c.l.b16 %v97
  %v357 = vunpack.c.h.b16 %v97
  %v358 = vunpack.c.l.b16 %v98
  %v359 = vunpack.c.h.b16 %v98
  %v360 = vunpack.c.l.b16 %v99
  %v361 = vunpack.c.h.b16 %v99
  %v362 = vunpack.c.l.b16 %v100
  %v363 = vunpack.c.h.b16 %v100
  %v364 = vunpack.c.l.b16 %v101
  %v365 = vunpack.c.h.b16 %v101
  %v366 = vunpack.c.l.b16 %v102
  %v367 = vunpack.c.h.b16 %v102
  %v368 = vunpack.c.l.b16 %v103
  %v369 = vunpack.c.h.b16 %v103
  %v370 = vunpack.c.l.b16 %v104
  %v371 = vunpack.c.h.b16 %v104
  %v372 = vunpack.c.l.b16 %v105
  %v373 = vunpack.c.h.b16 %v105
  %v374 = vunpack.c.l.b16 %v106
  %v375 = vunpack.c.h.b16 %v106
  %v376 = vunpack.c.l.b16 %v107
  %v377 = vunpack.c.h.b16 %v107
  %v378 = vunpack.c.l.b16 %v108
  %v379 = vunpack.c.h.b16 %v108
  %v380 = vunpack.c.l.b16 %v109
  %v381 = vunpack.c.h.b16 %v109
  %v382 = vunpack.c.l.b16 %v110
  %v383 = vunpack.c.h.b16 %v110
  %v384 = vunpack.c.l.b16 %v111
  %v385 = vunpack.c.h.b16 %v111
  %v386 = vunpack.c.l.b16 %v112
  %v387 = vunpack.c.h.b16 %v112
  %v388 = vunpack.c.l.b16 %v113
  %v389 = vunpack.c.h.b16 %v113
  %v390 = vunpack.c.l.b16 %v114
  %v391 = vunpack.c.h.b16 %v114
  %v392 = vunpack.c.l.b16 %v115
  %v393 = vunpack.c.h.b16 %v115
  %v394 = vunpack.c.l.b16 %v116
  %v395 = vunpack.c.h.b16 %v116
  %v396 = vunpack.c.l.b16 %v117
  %v397 = vunpack.c.h.b16 %v117
  %v398 = vunpack.c.l.b16 %v118
  %v399 = vunpack.c.h.b16 %v118
  %v400 = vunpack.c.l.b16 %v119
  %v401 = vunpack.c.h.b16 %v119
  %v402 = vunpack.c.l.b16 %v120
  %v403 = vunpack.c.h.b16 %v120
  %v404 = vunpack.c.l.b16 %v121
  %v405 = vunpack.c.h.b16 %v121
  %v406 = vunpack.c.l.b16 %v122
  %v407 = vunpack.c.h.b16 %v122
  %v408 = vunpack.c.l.b16 %v123
  %v409 = vunpack.c.h.b16 %v123
  %v410 = vunpack.c.l.b16 %v124
  %v411 = vunpack.c.h.b16 %v124
  %v412 = vunpack.c.l.b16 %v125
  %v413 = vunpack.c.h.b16 %v125
  %v414 = vpack.c.b16 %v228, %v222
  %v415 = vpack.c.b16 %v229, %v223
  %v416 = vpack.c.b16 %v230, %v224
  %v417 = vpack.c.b16 %v231, %v225
  %v418 = vpack.c.b16 %v232, %v226
  %v419 = vpack.c.b16 %v233, %v227
  %v420 = vpack.c.b16 %v240, %v234
  %v421 = vpack.c.b16 %v241, %v235
  %v422 = vpack.c.b16 %v242, %v236
  %v423 = vpack.c.b16 %v243, %v237
  %v424 = vpack.c.b16 %v244, %v238
  %v425 = vpack.c.b16 %v245, %v239
  %v426 = vpack.c.b16 %v252, %v246
  %v427 = vpack.c.b16 %v253, %v247
  %v428 = vpack.c.b16 %v254, %v248
  %v429 = vpack.c.b16 %v255, %v249
  %v430 = vpack.c.b16 %v256, %v250
  %v431 = vpack.c.b16 %v257, %v251
  %v432 = vpack.c.b16 %v264, %v258
  %v433 = vpack.c.b16 %v265, %v259
  %v434 = vpack.c.b16 %v266, %v260
  %v435 = vpack.c.b16 %v267, %v261
  %v436 = vpack.c.b16 %v268, %v262
  %v437 = vpack.c.b16 %v269, %v263
  %v438 = vpack.c.b16 %v276, %v270
  %v439 = vpack.c.b16 %v277, %v271
  %v440 = vpack.c.b16 %v278, %v272
  %v441 = vpack.c.b16 %v279, %v273
  %v442 = vpack.c.b16 %v280, %v274
  %v443 = vpack.c.b16 %v281, %v275
  %v444 = vpack.c.b16 %v288, %v282
  %v445 = vpack.c.b16 %v289, %v283
  %v446 = vpack.c.b16 %v290, %v284
  %v447 = vpack.c.b16 %v291, %v285
  %v448 = vpack.c.b16 %v292, %v286
  %v449 = vpack.c.b16 %v293, %v287
  %v450 = vpack.c.b16 %v300, %v294
  %v451 = vpack.c.b16 %v301, %v295
  %v452 = vpack.c.b16 %v302, %v296
  %v453 = vpack.c.b16 %v303, %v297
  %v454 = vpack.c.b16 %v304, %v298
  %v455 = vpack.c.b16 %v305, %v299
  %v456 = vpack.c.b16 %v312, %v306
  %v457 = vpack.c.b16 %v313, %v307
  %v458 = vpack.c.b16 %v314, %v308
  %v459 = vpack.c.b16 %v315, %v309
  %v460 = vpack.c.b16 %v316, %v310
  %v461 = vpack.c.b16 %v317, %v311
  %v462 = vpack.c.b16 %v324, %v318
  %v463 = vpack.c.b16 %v325, %v319
  %v464 = vpack.c.b16 %v326, %v320
  %v465 = vpack.c.b16 %v327, %v321
  %v466 = vpack.c.b16 %v328, %v322
  %v467 = vpack.c.b16 %v329, %v323
  %v468 = vpack.c.b16 %v336, %v330
  %v469 = vpack.c.b16 %v337, %v331
  %v470 = vpack.c.b16 %v338, %v332
  %v471 = vpack.c.b16 %v339, %v333
  %v472 = vpack.c.b16 %v340, %v334
  %v473 = vpack.c.b16 %v341, %v335
  %v474 = vpack.c.b16 %v348, %v342
  %v475 = vpack.c.b16 %v349, %v343
  %v476 = vpack.c.b16 %v350, %v344
  %v477 = vpack.c.b16 %v351, %v345
  %v478 = vpack.c.b16 %v352, %v346
  %v479 = vpack.c.b16 %v353, %v347
  %v480 = vpack.c.b16 %v360, %v354
  %v481 = vpack.c.b16 %v361, %v355
  %v482 = vpack.c.b16 %v362, %v356
  %v483 = vpack.c.b16 %v363, %v357
  %v484 = vpack.c.b16 %v364, %v358
  %v485 = vpack.c.b16 %v365, %v359
  %v486 = vpack.c.b16 %v372, %v366
  %v487 = vpack.c.b16 %v373, %v367
  %v488 = vpack.c.b16 %v374, %v368
  %v489 = vpack.c.b16 %v375, %v369
  %v490 = vpack.c.b16 %v376, %v370
  %v491 = vpack.c.b16 %v377, %v371
  %v492 = vpack.c.b16 %v384, %v378
  %v493 = vpack.c.b16 %v385, %v379
  %v494 = vpack.c.b16 %v386, %v380
  %v495 = vpack.c.b16 %v387, %v381
  %v496 = vpack.c.b16 %v388, %v382
  %v497 = vpack.c.b16 %v389, %v383
  %v498 = vpack.c.b16 %v396, %v390
  %v499 = vpack.c.b16 %v397, %v391
  %v500 = vpack.c.b16 %v398, %v392
  %v501 = vpack.c.b16 %v399, %v393
  %v502 = vpack.c.b16 %v400, %v394
  %v503 = vpack.c.b16 %v401, %v395
  %v504 = vpack.c.b16 %v408, %v402
  %v505 = vpack.c.b16 %v409, %v403
  %v506 = vpack.c.b16 %v410, %v404
  %v507 = vpack.c.b16 %v411, %v405
  %v508 = vpack.c.b16 %v412, %v406
  %v509 = vpack.c.b16 %v413, %v407
  %606 = vmatpush.bf16.msra.mxu0 %v456
  %607 = vmatpush.bf16.msra.mxu0 %v450
  %608 = vmatpush.bf16.msra.mxu0 %v444
  %609 = vmatpush.bf16.msra.mxu0 %v438
  %610 = vmatpush.bf16.msra.mxu0 %v432
  %611 = vmatpush.bf16.msra.mxu0 %v426
  %612 = vmatpush.bf16.msra.mxu0 %v420
  %613 = vmatpush.bf16.msra.mxu0 %v414
  %614 = vmatmul.bf16.gmra.mxu0 0
  %v615 = vpop.f32.mrf.mxu0
  %v616 = vadd.f32 0.0, %v615
  %v617 = vpop.f32.mrf.mxu0
  %618 = vdwg.mxu0
  %619 = vmatpush.bf16.msra.mxu0 %v504
  %620 = vmatpush.bf16.msra.mxu0 %v498
  %621 = vmatpush.bf16.msra.mxu0 %v492
  %622 = vmatpush.bf16.msra.mxu0 %v486
  %623 = vmatpush.bf16.msra.mxu0 %v480
  %624 = vmatpush.bf16.msra.mxu0 %v474
  %625 = vmatpush.bf16.msra.mxu0 %v468
  %626 = vmatpush.bf16.msra.mxu0 %v462
  %627 = vmatmul.bf16.gmra.mxu0 0
  %v628 = vpop.f32.mrf.mxu0
  %v629 = vadd.f32 %v616, %v628
  %v630 = vpop.f32.mrf.mxu0
  %631 = vdwg.mxu0
  %632 = vmatpush.bf16.msra.mxu0 %v457
  %633 = vmatpush.bf16.msra.mxu0 %v451
  %634 = vmatpush.bf16.msra.mxu0 %v445
  %635 = vmatpush.bf16.msra.mxu0 %v439
  %636 = vmatpush.bf16.msra.mxu0 %v433
  %637 = vmatpush.bf16.msra.mxu0 %v427
  %638 = vmatpush.bf16.msra.mxu0 %v421
  %639 = vmatpush.bf16.msra.mxu0 %v415
  %640 = vmatmul.bf16.gmra.mxu0 0
  %v641 = vpop.f32.mrf.mxu0
  %v642 = vadd.f32 0.0, %v641
  %v643 = vpop.f32.mrf.mxu0
  %644 = vdwg.mxu0
  %645 = vmatpush.bf16.msra.mxu0 %v505
  %646 = vmatpush.bf16.msra.mxu0 %v499
  %647 = vmatpush.bf16.msra.mxu0 %v493
  %648 = vmatpush.bf16.msra.mxu0 %v487
  %649 = vmatpush.bf16.msra.mxu0 %v481
  %650 = vmatpush.bf16.msra.mxu0 %v475
  %651 = vmatpush.bf16.msra.mxu0 %v469
  %652 = vmatpush.bf16.msra.mxu0 %v463
  %653 = vmatmul.bf16.gmra.mxu0 0
  %v654 = vpop.f32.mrf.mxu0
  %v655 = vadd.f32 %v642, %v654
  %v656 = vpop.f32.mrf.mxu0
  %657 = vdwg.mxu0
  %658 = vmatpush.bf16.msra.mxu0 %v458
  %659 = vmatpush.bf16.msra.mxu0 %v452
  %660 = vmatpush.bf16.msra.mxu0 %v446
  %661 = vmatpush.bf16.msra.mxu0 %v440
  %662 = vmatpush.bf16.msra.mxu0 %v434
  %663 = vmatpush.bf16.msra.mxu0 %v428
  %664 = vmatpush.bf16.msra.mxu0 %v422
  %665 = vmatpush.bf16.msra.mxu0 %v416
  %666 = vmatmul.bf16.gmra.mxu0 0
  %v667 = vpop.f32.mrf.mxu0
  %v668 = vadd.f32 0.0, %v667
  %v669 = vpop.f32.mrf.mxu0
  %670 = vdwg.mxu0
  %671 = vmatpush.bf16.msra.mxu0 %v506
  %672 = vmatpush.bf16.msra.mxu0 %v500
  %673 = vmatpush.bf16.msra.mxu0 %v494
  %674 = vmatpush.bf16.msra.mxu0 %v488
  %675 = vmatpush.bf16.msra.mxu0 %v482
  %676 = vmatpush.bf16.msra.mxu0 %v476
  %677 = vmatpush.bf16.msra.mxu0 %v470
  %678 = vmatpush.bf16.msra.mxu0 %v464
  %679 = vmatmul.bf16.gmra.mxu0 0
  %v680 = vpop.f32.mrf.mxu0
  %v681 = vadd.f32 %v668, %v680
  %v682 = vpop.f32.mrf.mxu0
  %683 = vdwg.mxu0
  %684 = vmatpush.bf16.msra.mxu0 %v459
  %685 = vmatpush.bf16.msra.mxu0 %v453
  %686 = vmatpush.bf16.msra.mxu0 %v447
  %687 = vmatpush.bf16.msra.mxu0 %v441
  %688 = vmatpush.bf16.msra.mxu0 %v435
  %689 = vmatpush.bf16.msra.mxu0 %v429
  %690 = vmatpush.bf16.msra.mxu0 %v423
  %691 = vmatpush.bf16.msra.mxu0 %v417
  %692 = vmatmul.bf16.gmra.mxu0 0
  %v693 = vpop.f32.mrf.mxu0
  %v694 = vadd.f32 0.0, %v693
  %v695 = vpop.f32.mrf.mxu0
  %696 = vdwg.mxu0
  %697 = vmatpush.bf16.msra.mxu0 %v507
  %698 = vmatpush.bf16.msra.mxu0 %v501
  %699 = vmatpush.bf16.msra.mxu0 %v495
  %700 = vmatpush.bf16.msra.mxu0 %v489
  %701 = vmatpush.bf16.msra.mxu0 %v483
  %702 = vmatpush.bf16.msra.mxu0 %v477
  %703 = vmatpush.bf16.msra.mxu0 %v471
  %704 = vmatpush.bf16.msra.mxu0 %v465
  %705 = vmatmul.bf16.gmra.mxu0 0
  %v706 = vpop.f32.mrf.mxu0
  %v707 = vadd.f32 %v694, %v706
  %v708 = vpop.f32.mrf.mxu0
  %709 = vdwg.mxu0
  %710 = vmatpush.bf16.msra.mxu0 %v460
  %711 = vmatpush.bf16.msra.mxu0 %v454
  %712 = vmatpush.bf16.msra.mxu0 %v448
  %713 = vmatpush.bf16.msra.mxu0 %v442
  %714 = vmatpush.bf16.msra.mxu0 %v436
  %715 = vmatpush.bf16.msra.mxu0 %v430
  %716 = vmatpush.bf16.msra.mxu0 %v424
  %717 = vmatpush.bf16.msra.mxu0 %v418
  %718 = vmatmul.bf16.gmra.mxu0 0
  %v719 = vpop.f32.mrf.mxu0
  %v720 = vadd.f32 0.0, %v719
  %v721 = vpop.f32.mrf.mxu0
  %722 = vdwg.mxu0
  %723 = vmatpush.bf16.msra.mxu0 %v508
  %724 = vmatpush.bf16.msra.mxu0 %v502
  %725 = vmatpush.bf16.msra.mxu0 %v496
  %726 = vmatpush.bf16.msra.mxu0 %v490
  %727 = vmatpush.bf16.msra.mxu0 %v484
  %728 = vmatpush.bf16.msra.mxu0 %v478
  %729 = vmatpush.bf16.msra.mxu0 %v472
  %730 = vmatpush.bf16.msra.mxu0 %v466
  %731 = vmatmul.bf16.gmra.mxu0 0
  %v732 = vpop.f32.mrf.mxu0
  %v733 = vadd.f32 %v720, %v732
  %v734 = vpop.f32.mrf.mxu0
  %735 = vdwg.mxu0
  %736 = vmatpush.bf16.msra.mxu0 %v461
  %737 = vmatpush.bf16.msra.mxu0 %v455
  %738 = vmatpush.bf16.msra.mxu0 %v449
  %739 = vmatpush.bf16.msra.mxu0 %v443
  %740 = vmatpush.bf16.msra.mxu0 %v437
  %741 = vmatpush.bf16.msra.mxu0 %v431
  %742 = vmatpush.bf16.msra.mxu0 %v425
  %743 = vmatpush.bf16.msra.mxu0 %v419
  %744 = vmatmul.bf16.gmra.mxu0 0
  %v745 = vpop.f32.mrf.mxu0
  %v746 = vadd.f32 0.0, %v745
  %v747 = vpop.f32.mrf.mxu0
  %748 = vdwg.mxu0
  %749 = vmatpush.bf16.msra.mxu0 %v509
  %750 = vmatpush.bf16.msra.mxu0 %v503
  %751 = vmatpush.bf16.msra.mxu0 %v497
  %752 = vmatpush.bf16.msra.mxu0 %v491
  %753 = vmatpush.bf16.msra.mxu0 %v485
  %754 = vmatpush.bf16.msra.mxu0 %v479
  %755 = vmatpush.bf16.msra.mxu0 %v473
  %756 = vmatpush.bf16.msra.mxu0 %v467
  %757 = vmatmul.bf16.gmra.mxu0 0
  %v758 = vpop.f32.mrf.mxu0
  %v759 = vadd.f32 %v746, %v758
  %v760 = vpop.f32.mrf.mxu0
  %761 = vdwg.mxu0
  %v762 = vadd.f32 %v24, %v629
  %v763 = vadd.f32 %v25, %v655
  %v764 = vxor.u32 %v762, 2147483648
  %v765 = vxor.u32 %v763, 2147483648
  %v766 = vmul.f32 %v764, 1.442695
  %v767 = vpow.pop %v766
  %v768 = vmul.f32 %v765, 1.442695
  %v769 = vpow.pop %v768
  %v770 = vadd.f32 %v767, 1.0
  %v771 = vadd.f32 %v769, 1.0
  %v772 = vrcp.pop %v770
  %v773 = vmul.f32 %v770, %v772
  %v774 = vsub.f32 1.0, %v773
  %v775 = vmul.f32 %v772, %v774
  %v776 = vadd.f32 %v772, %v775
  %vm777 = vweird.f32 %v770
  %vm778 = vweird.f32 %v772
  %vm779 = vmor %vm777, %vm778
  %v780 = vsel %vm779, %v772, %v776
  %v781 = vand.u32 2147483647, %v770
  %vm782 = vcmp.eq.f32.partialorder %v781, 8.507059e+37
  %v783 = vand.u32 %v770, 2147483648
  %v784 = vor.u32 1.1754944e-38, %v783
  %v785 = vsel %vm782, %v784, %v780
  %v786 = vmul.f32 1.0, %v785
  %v787 = vrcp.pop %v771
  %v788 = vmul.f32 %v771, %v787
  %v789 = vsub.f32 1.0, %v788
  %v790 = vmul.f32 %v787, %v789
  %v791 = vadd.f32 %v787, %v790
  %vm792 = vweird.f32 %v771
  %vm793 = vweird.f32 %v787
  %vm794 = vmor %vm792, %vm793
  %v795 = vsel %vm794, %v787, %v791
  %v796 = vand.u32 2147483647, %v771
  %vm797 = vcmp.eq.f32.partialorder %v796, 8.507059e+37
  %v798 = vand.u32 %v771, 2147483648
  %v799 = vor.u32 1.1754944e-38, %v798
  %v800 = vsel %vm797, %v799, %v795
  %v801 = vmul.f32 1.0, %v800
  %v802 = vadd.f32 %v26, %v681
  %v803 = vadd.f32 %v27, %v707
  %v804 = vxor.u32 %v802, 2147483648
  %v805 = vxor.u32 %v803, 2147483648
  %v806 = vmul.f32 %v804, 1.442695
  %v807 = vpow.pop %v806
  %v808 = vmul.f32 %v805, 1.442695
  %v809 = vpow.pop %v808
  %v810 = vadd.f32 %v807, 1.0
  %v811 = vadd.f32 %v809, 1.0
  %v812 = vrcp.pop %v810
  %v813 = vmul.f32 %v810, %v812
  %v814 = vsub.f32 1.0, %v813
  %v815 = vmul.f32 %v812, %v814
  %v816 = vadd.f32 %v812, %v815
  %vm817 = vweird.f32 %v810
  %vm818 = vweird.f32 %v812
  %vm819 = vmor %vm817, %vm818
  %v820 = vsel %vm819, %v812, %v816
  %v821 = vand.u32 2147483647, %v810
  %vm822 = vcmp.eq.f32.partialorder %v821, 8.507059e+37
  %v823 = vand.u32 %v810, 2147483648
  %v824 = vor.u32 1.1754944e-38, %v823
  %v825 = vsel %vm822, %v824, %v820
  %v826 = vmul.f32 1.0, %v825
  %v827 = vrcp.pop %v811
  %v828 = vmul.f32 %v811, %v827
  %v829 = vsub.f32 1.0, %v828
  %v830 = vmul.f32 %v827, %v829
  %v831 = vadd.f32 %v827, %v830
  %vm832 = vweird.f32 %v811
  %vm833 = vweird.f32 %v827
  %vm834 = vmor %vm832, %vm833
  %v835 = vsel %vm834, %v827, %v831
  %v836 = vand.u32 2147483647, %v811
  %vm837 = vcmp.eq.f32.partialorder %v836, 8.507059e+37
  %v838 = vand.u32 %v811, 2147483648
  %v839 = vor.u32 1.1754944e-38, %v838
  %v840 = vsel %vm837, %v839, %v835
  %v841 = vmul.f32 1.0, %v840
  %v843 = vperm.slane %v23, 0
  %v844 = vperm.slane %v23, 1
  %v847 = vadd.f32 %v733, %v843
  %v848 = vadd.f32 %v759, %v844
  %v849 = vmul.f32 %v786, %v847
  %v850 = vmul.f32 %v801, %v848
  %v851 = vadd.f32 %v28, %v849
  %v852 = vadd.f32 %v29, %v850
  %v853 = vtanh.pop %v851
  %v854 = vtanh.pop %v852
  %v855 = vsub.f32 1.0, %v826
  %v856 = vsub.f32 1.0, %v841
  %v857 = vmul.f32 %v855, %v853
  %v858 = vmul.f32 %v856, %v854
  %v859 = vmul.f32 %v826, 0.0
  %v860 = vmul.f32 %v841, 0.0
  %v861 = vadd.f32 %v857, %v859
  %v862 = vadd.f32 %v858, %v860
  %v863 = vpack.c.bf16 %v862, %v861
  %s864 = scalar_lea.vmem %s0, 48
  %v865 = vld [vmem:[%s864] sm:$0xff]
  %v866 = vld [vmem:[%s864 + $0x8] sm:$0xff]
  %v867 = vld [vmem:[%s864 + $0x10] sm:$0xff]
  %v868 = vld [vmem:[%s864 + $0x18] sm:$0xff]
  %v869 = vld [vmem:[%s864 + $0x20] sm:$0xff]
  %v870 = vld [vmem:[%s864 + $0x28] sm:$0xff]
  %v872 = vunpack.c.l.b16 %v863
  %v873 = vunpack.c.h.b16 %v863
  %v874 = vpack.c.b16 %v872, %v872
  %v875 = vpack.c.b16 %v873, %v873
  %878 = vmatpush.bf16.msra.mxu0 %v456
  %879 = vmatpush.bf16.msra.mxu0 %v450
  %880 = vmatpush.bf16.msra.mxu0 %v444
  %881 = vmatpush.bf16.msra.mxu0 %v438
  %882 = vmatpush.bf16.msra.mxu0 %v432
  %883 = vmatpush.bf16.msra.mxu0 %v426
  %884 = vmatpush.bf16.msra.mxu0 %v420
  %885 = vmatpush.bf16.msra.mxu0 %v414
  %886 = vmatmul.bf16.gmra.mxu0 %v874
  %v887 = vpop.f32.mrf.mxu0
  %v888 = vadd.f32 0.0, %v887
  %v889 = vpop.f32.mrf.mxu0
  %890 = vdwg.mxu0
  %891 = vmatpush.bf16.msra.mxu0 %v504
  %892 = vmatpush.bf16.msra.mxu0 %v498
  %893 = vmatpush.bf16.msra.mxu0 %v492
  %894 = vmatpush.bf16.msra.mxu0 %v486
  %895 = vmatpush.bf16.msra.mxu0 %v480
  %896 = vmatpush.bf16.msra.mxu0 %v474
  %897 = vmatpush.bf16.msra.mxu0 %v468
  %898 = vmatpush.bf16.msra.mxu0 %v462
  %899 = vmatmul.bf16.gmra.mxu0 %v875
  %v900 = vpop.f32.mrf.mxu0
  %v901 = vadd.f32 %v888, %v900
  %v902 = vpop.f32.mrf.mxu0
  %903 = vdwg.mxu0
  %904 = vmatpush.bf16.msra.mxu0 %v457
  %905 = vmatpush.bf16.msra.mxu0 %v451
  %906 = vmatpush.bf16.msra.mxu0 %v445
  %907 = vmatpush.bf16.msra.mxu0 %v439
  %908 = vmatpush.bf16.msra.mxu0 %v433
  %909 = vmatpush.bf16.msra.mxu0 %v427
  %910 = vmatpush.bf16.msra.mxu0 %v421
  %911 = vmatpush.bf16.msra.mxu0 %v415
  %912 = vmatmul.bf16.gmra.mxu0 %v874
  %v913 = vpop.f32.mrf.mxu0
  %v914 = vadd.f32 0.0, %v913
  %v915 = vpop.f32.mrf.mxu0
  %916 = vdwg.mxu0
  %917 = vmatpush.bf16.msra.mxu0 %v505
  %918 = vmatpush.bf16.msra.mxu0 %v499
  %919 = vmatpush.bf16.msra.mxu0 %v493
  %920 = vmatpush.bf16.msra.mxu0 %v487
  %921 = vmatpush.bf16.msra.mxu0 %v481
  %922 = vmatpush.bf16.msra.mxu0 %v475
  %923 = vmatpush.bf16.msra.mxu0 %v469
  %924 = vmatpush.bf16.msra.mxu0 %v463
  %925 = vmatmul.bf16.gmra.mxu0 %v875
  %v926 = vpop.f32.mrf.mxu0
  %v927 = vadd.f32 %v914, %v926
  %v928 = vpop.f32.mrf.mxu0
  %929 = vdwg.mxu0
  %930 = vmatpush.bf16.msra.mxu0 %v458
  %931 = vmatpush.bf16.msra.mxu0 %v452
  %932 = vmatpush.bf16.msra.mxu0 %v446
  %933 = vmatpush.bf16.msra.mxu0 %v440
  %934 = vmatpush.bf16.msra.mxu0 %v434
  %935 = vmatpush.bf16.msra.mxu0 %v428
  %936 = vmatpush.bf16.msra.mxu0 %v422
  %937 = vmatpush.bf16.msra.mxu0 %v416
  %938 = vmatmul.bf16.gmra.mxu0 %v874
  %v939 = vpop.f32.mrf.mxu0
  %v940 = vadd.f32 0.0, %v939
  %v941 = vpop.f32.mrf.mxu0
  %942 = vdwg.mxu0
  %943 = vmatpush.bf16.msra.mxu0 %v506
  %944 = vmatpush.bf16.msra.mxu0 %v500
  %945 = vmatpush.bf16.msra.mxu0 %v494
  %946 = vmatpush.bf16.msra.mxu0 %v488
  %947 = vmatpush.bf16.msra.mxu0 %v482
  %948 = vmatpush.bf16.msra.mxu0 %v476
  %949 = vmatpush.bf16.msra.mxu0 %v470
  %950 = vmatpush.bf16.msra.mxu0 %v464
  %951 = vmatmul.bf16.gmra.mxu0 %v875
  %v952 = vpop.f32.mrf.mxu0
  %v953 = vadd.f32 %v940, %v952
  %v954 = vpop.f32.mrf.mxu0
  %955 = vdwg.mxu0
  %956 = vmatpush.bf16.msra.mxu0 %v459
  %957 = vmatpush.bf16.msra.mxu0 %v453
  %958 = vmatpush.bf16.msra.mxu0 %v447
  %959 = vmatpush.bf16.msra.mxu0 %v441
  %960 = vmatpush.bf16.msra.mxu0 %v435
  %961 = vmatpush.bf16.msra.mxu0 %v429
  %962 = vmatpush.bf16.msra.mxu0 %v423
  %963 = vmatpush.bf16.msra.mxu0 %v417
  %964 = vmatmul.bf16.gmra.mxu0 %v874
  %v965 = vpop.f32.mrf.mxu0
  %v966 = vadd.f32 0.0, %v965
  %v967 = vpop.f32.mrf.mxu0
  %968 = vdwg.mxu0
  %969 = vmatpush.bf16.msra.mxu0 %v507
  %970 = vmatpush.bf16.msra.mxu0 %v501
  %971 = vmatpush.bf16.msra.mxu0 %v495
  %972 = vmatpush.bf16.msra.mxu0 %v489
  %973 = vmatpush.bf16.msra.mxu0 %v483
  %974 = vmatpush.bf16.msra.mxu0 %v477
  %975 = vmatpush.bf16.msra.mxu0 %v471
  %976 = vmatpush.bf16.msra.mxu0 %v465
  %977 = vmatmul.bf16.gmra.mxu0 %v875
  %v978 = vpop.f32.mrf.mxu0
  %v979 = vadd.f32 %v966, %v978
  %v980 = vpop.f32.mrf.mxu0
  %981 = vdwg.mxu0
  %982 = vmatpush.bf16.msra.mxu0 %v460
  %983 = vmatpush.bf16.msra.mxu0 %v454
  %984 = vmatpush.bf16.msra.mxu0 %v448
  %985 = vmatpush.bf16.msra.mxu0 %v442
  %986 = vmatpush.bf16.msra.mxu0 %v436
  %987 = vmatpush.bf16.msra.mxu0 %v430
  %988 = vmatpush.bf16.msra.mxu0 %v424
  %989 = vmatpush.bf16.msra.mxu0 %v418
  %990 = vmatmul.bf16.gmra.mxu0 %v874
  %v991 = vpop.f32.mrf.mxu0
  %v992 = vadd.f32 0.0, %v991
  %v993 = vpop.f32.mrf.mxu0
  %994 = vdwg.mxu0
  %995 = vmatpush.bf16.msra.mxu0 %v508
  %996 = vmatpush.bf16.msra.mxu0 %v502
  %997 = vmatpush.bf16.msra.mxu0 %v496
  %998 = vmatpush.bf16.msra.mxu0 %v490
  %999 = vmatpush.bf16.msra.mxu0 %v484
  %1000 = vmatpush.bf16.msra.mxu0 %v478
  %1001 = vmatpush.bf16.msra.mxu0 %v472
  %1002 = vmatpush.bf16.msra.mxu0 %v466
  %1003 = vmatmul.bf16.gmra.mxu0 %v875
  %v1004 = vpop.f32.mrf.mxu0
  %v1005 = vadd.f32 %v992, %v1004
  %v1006 = vpop.f32.mrf.mxu0
  %1007 = vdwg.mxu0
  %1008 = vmatpush.bf16.msra.mxu0 %v461
  %1009 = vmatpush.bf16.msra.mxu0 %v455
  %1010 = vmatpush.bf16.msra.mxu0 %v449
  %1011 = vmatpush.bf16.msra.mxu0 %v443
  %1012 = vmatpush.bf16.msra.mxu0 %v437
  %1013 = vmatpush.bf16.msra.mxu0 %v431
  %1014 = vmatpush.bf16.msra.mxu0 %v425
  %1015 = vmatpush.bf16.msra.mxu0 %v419
  %1016 = vmatmul.bf16.gmra.mxu0 %v874
  %v1017 = vpop.f32.mrf.mxu0
  %v1018 = vadd.f32 0.0, %v1017
  %v1019 = vpop.f32.mrf.mxu0
  %1020 = vdwg.mxu0
  %1021 = vmatpush.bf16.msra.mxu0 %v509
  %1022 = vmatpush.bf16.msra.mxu0 %v503
  %1023 = vmatpush.bf16.msra.mxu0 %v497
  %1024 = vmatpush.bf16.msra.mxu0 %v491
  %1025 = vmatpush.bf16.msra.mxu0 %v485
  %1026 = vmatpush.bf16.msra.mxu0 %v479
  %1027 = vmatpush.bf16.msra.mxu0 %v473
  %1028 = vmatpush.bf16.msra.mxu0 %v467
  %1029 = vmatmul.bf16.gmra.mxu0 %v875
  %v1030 = vpop.f32.mrf.mxu0
  %v1031 = vadd.f32 %v1018, %v1030
  %v1032 = vpop.f32.mrf.mxu0
  %1033 = vdwg.mxu0
  %v1034 = vadd.f32 %v865, %v901
  %v1035 = vadd.f32 %v866, %v927
  %v1036 = vxor.u32 %v1034, 2147483648
  %v1037 = vxor.u32 %v1035, 2147483648
  %v1038 = vmul.f32 %v1036, 1.442695
  %v1039 = vpow.pop %v1038
  %v1040 = vmul.f32 %v1037, 1.442695
  %v1041 = vpow.pop %v1040
  %v1042 = vadd.f32 %v1039, 1.0
  %v1043 = vadd.f32 %v1041, 1.0
  %v1044 = vrcp.pop %v1042
  %v1045 = vmul.f32 %v1042, %v1044
  %v1046 = vsub.f32 1.0, %v1045
  %v1047 = vmul.f32 %v1044, %v1046
  %v1048 = vadd.f32 %v1044, %v1047
  %vm1049 = vweird.f32 %v1042
  %vm1050 = vweird.f32 %v1044
  %vm1051 = vmor %vm1049, %vm1050
  %v1052 = vsel %vm1051, %v1044, %v1048
  %v1053 = vand.u32 2147483647, %v1042
  %vm1054 = vcmp.eq.f32.partialorder %v1053, 8.507059e+37
  %v1055 = vand.u32 %v1042, 2147483648
  %v1056 = vor.u32 1.1754944e-38, %v1055
  %v1057 = vsel %vm1054, %v1056, %v1052
  %v1058 = vmul.f32 1.0, %v1057
  %v1059 = vrcp.pop %v1043
  %v1060 = vmul.f32 %v1043, %v1059
  %v1061 = vsub.f32 1.0, %v1060
  %v1062 = vmul.f32 %v1059, %v1061
  %v1063 = vadd.f32 %v1059, %v1062
  %vm1064 = vweird.f32 %v1043
  %vm1065 = vweird.f32 %v1059
  %vm1066 = vmor %vm1064, %vm1065
  %v1067 = vsel %vm1066, %v1059, %v1063
  %v1068 = vand.u32 2147483647, %v1043
  %vm1069 = vcmp.eq.f32.partialorder %v1068, 8.507059e+37
  %v1070 = vand.u32 %v1043, 2147483648
  %v1071 = vor.u32 1.1754944e-38, %v1070
  %v1072 = vsel %vm1069, %v1071, %v1067
  %v1073 = vmul.f32 1.0, %v1072
  %v1074 = vadd.f32 %v867, %v953
  %v1075 = vadd.f32 %v868, %v979
  %v1076 = vxor.u32 %v1074, 2147483648
  %v1077 = vxor.u32 %v1075, 2147483648
  %v1078 = vmul.f32 %v1076, 1.442695
  %v1079 = vpow.pop %v1078
  %v1080 = vmul.f32 %v1077, 1.442695
  %v1081 = vpow.pop %v1080
  %v1082 = vadd.f32 %v1079, 1.0
  %v1083 = vadd.f32 %v1081, 1.0
  %v1084 = vrcp.pop %v1082
  %v1085 = vmul.f32 %v1082, %v1084
  %v1086 = vsub.f32 1.0, %v1085
  %v1087 = vmul.f32 %v1084, %v1086
  %v1088 = vadd.f32 %v1084, %v1087
  %vm1089 = vweird.f32 %v1082
  %vm1090 = vweird.f32 %v1084
  %vm1091 = vmor %vm1089, %vm1090
  %v1092 = vsel %vm1091, %v1084, %v1088
  %v1093 = vand.u32 2147483647, %v1082
  %vm1094 = vcmp.eq.f32.partialorder %v1093, 8.507059e+37
  %v1095 = vand.u32 %v1082, 2147483648
  %v1096 = vor.u32 1.1754944e-38, %v1095
  %v1097 = vsel %vm1094, %v1096, %v1092
  %v1098 = vmul.f32 1.0, %v1097
  %v1099 = vrcp.pop %v1083
  %v1100 = vmul.f32 %v1083, %v1099
  %v1101 = vsub.f32 1.0, %v1100
  %v1102 = vmul.f32 %v1099, %v1101
  %v1103 = vadd.f32 %v1099, %v1102
  %vm1104 = vweird.f32 %v1083
  %vm1105 = vweird.f32 %v1099
  %vm1106 = vmor %vm1104, %vm1105
  %v1107 = vsel %vm1106, %v1099, %v1103
  %v1108 = vand.u32 2147483647, %v1083
  %vm1109 = vcmp.eq.f32.partialorder %v1108, 8.507059e+37
  %v1110 = vand.u32 %v1083, 2147483648
  %v1111 = vor.u32 1.1754944e-38, %v1110
  %v1112 = vsel %vm1109, %v1111, %v1107
  %v1113 = vmul.f32 1.0, %v1112
  %v1114 = vadd.f32 %v1005, %v843
  %v1115 = vadd.f32 %v1031, %v844
  %v1116 = vmul.f32 %v1058, %v1114
  %v1117 = vmul.f32 %v1073, %v1115
  %v1118 = vadd.f32 %v869, %v1116
  %v1119 = vadd.f32 %v870, %v1117
  %v1120 = vtanh.pop %v1118
  %v1121 = vtanh.pop %v1119
  %v1122 = vsub.f32 1.0, %v1098
  %v1123 = vsub.f32 1.0, %v1113
  %v1124 = vmul.f32 %v1122, %v1120
  %v1125 = vmul.f32 %v1123, %v1121
  %v1126 = vmul.f32 %v1098, %v861
  %v1127 = vmul.f32 %v1113, %v862
  %v1128 = vadd.f32 %v1124, %v1126
  %v1129 = vadd.f32 %v1125, %v1127
  %v1130 = vpack.c.bf16 %v1129, %v1128
  %s1131 = scalar_lea.vmem %s0, 96
  %v1132 = vld [vmem:[%s1131] sm:$0xff]
  %v1133 = vld [vmem:[%s1131 + $0x8] sm:$0xff]
  %v1134 = vld [vmem:[%s1131 + $0x10] sm:$0xff]
  %v1135 = vld [vmem:[%s1131 + $0x18] sm:$0xff]
  %v1136 = vld [vmem:[%s1131 + $0x20] sm:$0xff]
  %v1137 = vld [vmem:[%s1131 + $0x28] sm:$0xff]
  %v1139 = vunpack.c.l.b16 %v1130
  %v1140 = vunpack.c.h.b16 %v1130
  %v1141 = vpack.c.b16 %v1139, %v1139
  %v1142 = vpack.c.b16 %v1140, %v1140
  %1145 = vmatpush.bf16.msra.mxu0 %v456
  %1146 = vmatpush.bf16.msra.mxu0 %v450
  %1147 = vmatpush.bf16.msra.mxu0 %v444
  %1148 = vmatpush.bf16.msra.mxu0 %v438
  %1149 = vmatpush.bf16.msra.mxu0 %v432
  %1150 = vmatpush.bf16.msra.mxu0 %v426
  %1151 = vmatpush.bf16.msra.mxu0 %v420
  %1152 = vmatpush.bf16.msra.mxu0 %v414
  %1153 = vmatmul.bf16.gmra.mxu0 %v1141
  %v1154 = vpop.f32.mrf.mxu0
  %v1155 = vadd.f32 0.0, %v1154
  %v1156 = vpop.f32.mrf.mxu0
  %1157 = vdwg.mxu0
  %1158 = vmatpush.bf16.msra.mxu0 %v504
  %1159 = vmatpush.bf16.msra.mxu0 %v498
  %1160 = vmatpush.bf16.msra.mxu0 %v492
  %1161 = vmatpush.bf16.msra.mxu0 %v486
  %1162 = vmatpush.bf16.msra.mxu0 %v480
  %1163 = vmatpush.bf16.msra.mxu0 %v474
  %1164 = vmatpush.bf16.msra.mxu0 %v468
  %1165 = vmatpush.bf16.msra.mxu0 %v462
  %1166 = vmatmul.bf16.gmra.mxu0 %v1142
  %v1167 = vpop.f32.mrf.mxu0
  %v1168 = vadd.f32 %v1155, %v1167
  %v1169 = vpop.f32.mrf.mxu0
  %1170 = vdwg.mxu0
  %1171 = vmatpush.bf16.msra.mxu0 %v457
  %1172 = vmatpush.bf16.msra.mxu0 %v451
  %1173 = vmatpush.bf16.msra.mxu0 %v445
  %1174 = vmatpush.bf16.msra.mxu0 %v439
  %1175 = vmatpush.bf16.msra.mxu0 %v433
  %1176 = vmatpush.bf16.msra.mxu0 %v427
  %1177 = vmatpush.bf16.msra.mxu0 %v421
  %1178 = vmatpush.bf16.msra.mxu0 %v415
  %1179 = vmatmul.bf16.gmra.mxu0 %v1141
  %v1180 = vpop.f32.mrf.mxu0
  %v1181 = vadd.f32 0.0, %v1180
  %v1182 = vpop.f32.mrf.mxu0
  %1183 = vdwg.mxu0
  %1184 = vmatpush.bf16.msra.mxu0 %v505
  %1185 = vmatpush.bf16.msra.mxu0 %v499
  %1186 = vmatpush.bf16.msra.mxu0 %v493
  %1187 = vmatpush.bf16.msra.mxu0 %v487
  %1188 = vmatpush.bf16.msra.mxu0 %v481
  %1189 = vmatpush.bf16.msra.mxu0 %v475
  %1190 = vmatpush.bf16.msra.mxu0 %v469
  %1191 = vmatpush.bf16.msra.mxu0 %v463
  %1192 = vmatmul.bf16.gmra.mxu0 %v1142
  %v1193 = vpop.f32.mrf.mxu0
  %v1194 = vadd.f32 %v1181, %v1193
  %v1195 = vpop.f32.mrf.mxu0
  %1196 = vdwg.mxu0
  %1197 = vmatpush.bf16.msra.mxu0 %v458
  %1198 = vmatpush.bf16.msra.mxu0 %v452
  %1199 = vmatpush.bf16.msra.mxu0 %v446
  %1200 = vmatpush.bf16.msra.mxu0 %v440
  %1201 = vmatpush.bf16.msra.mxu0 %v434
  %1202 = vmatpush.bf16.msra.mxu0 %v428
  %1203 = vmatpush.bf16.msra.mxu0 %v422
  %1204 = vmatpush.bf16.msra.mxu0 %v416
  %1205 = vmatmul.bf16.gmra.mxu0 %v1141
  %v1206 = vpop.f32.mrf.mxu0
  %v1207 = vadd.f32 0.0, %v1206
  %v1208 = vpop.f32.mrf.mxu0
  %1209 = vdwg.mxu0
  %1210 = vmatpush.bf16.msra.mxu0 %v506
  %1211 = vmatpush.bf16.msra.mxu0 %v500
  %1212 = vmatpush.bf16.msra.mxu0 %v494
  %1213 = vmatpush.bf16.msra.mxu0 %v488
  %1214 = vmatpush.bf16.msra.mxu0 %v482
  %1215 = vmatpush.bf16.msra.mxu0 %v476
  %1216 = vmatpush.bf16.msra.mxu0 %v470
  %1217 = vmatpush.bf16.msra.mxu0 %v464
  %1218 = vmatmul.bf16.gmra.mxu0 %v1142
  %v1219 = vpop.f32.mrf.mxu0
  %v1220 = vadd.f32 %v1207, %v1219
  %v1221 = vpop.f32.mrf.mxu0
  %1222 = vdwg.mxu0
  %1223 = vmatpush.bf16.msra.mxu0 %v459
  %1224 = vmatpush.bf16.msra.mxu0 %v453
  %1225 = vmatpush.bf16.msra.mxu0 %v447
  %1226 = vmatpush.bf16.msra.mxu0 %v441
  %1227 = vmatpush.bf16.msra.mxu0 %v435
  %1228 = vmatpush.bf16.msra.mxu0 %v429
  %1229 = vmatpush.bf16.msra.mxu0 %v423
  %1230 = vmatpush.bf16.msra.mxu0 %v417
  %1231 = vmatmul.bf16.gmra.mxu0 %v1141
  %v1232 = vpop.f32.mrf.mxu0
  %v1233 = vadd.f32 0.0, %v1232
  %v1234 = vpop.f32.mrf.mxu0
  %1235 = vdwg.mxu0
  %1236 = vmatpush.bf16.msra.mxu0 %v507
  %1237 = vmatpush.bf16.msra.mxu0 %v501
  %1238 = vmatpush.bf16.msra.mxu0 %v495
  %1239 = vmatpush.bf16.msra.mxu0 %v489
  %1240 = vmatpush.bf16.msra.mxu0 %v483
  %1241 = vmatpush.bf16.msra.mxu0 %v477
  %1242 = vmatpush.bf16.msra.mxu0 %v471
  %1243 = vmatpush.bf16.msra.mxu0 %v465
  %1244 = vmatmul.bf16.gmra.mxu0 %v1142
  %v1245 = vpop.f32.mrf.mxu0
  %v1246 = vadd.f32 %v1233, %v1245
  %v1247 = vpop.f32.mrf.mxu0
  %1248 = vdwg.mxu0
  %1249 = vmatpush.bf16.msra.mxu0 %v460
  %1250 = vmatpush.bf16.msra.mxu0 %v454
  %1251 = vmatpush.bf16.msra.mxu0 %v448
  %1252 = vmatpush.bf16.msra.mxu0 %v442
  %1253 = vmatpush.bf16.msra.mxu0 %v436
  %1254 = vmatpush.bf16.msra.mxu0 %v430
  %1255 = vmatpush.bf16.msra.mxu0 %v424
  %1256 = vmatpush.bf16.msra.mxu0 %v418
  %1257 = vmatmul.bf16.gmra.mxu0 %v1141
  %v1258 = vpop.f32.mrf.mxu0
  %v1259 = vadd.f32 0.0, %v1258
  %v1260 = vpop.f32.mrf.mxu0
  %1261 = vdwg.mxu0
  %1262 = vmatpush.bf16.msra.mxu0 %v508
  %1263 = vmatpush.bf16.msra.mxu0 %v502
  %1264 = vmatpush.bf16.msra.mxu0 %v496
  %1265 = vmatpush.bf16.msra.mxu0 %v490
  %1266 = vmatpush.bf16.msra.mxu0 %v484
  %1267 = vmatpush.bf16.msra.mxu0 %v478
  %1268 = vmatpush.bf16.msra.mxu0 %v472
  %1269 = vmatpush.bf16.msra.mxu0 %v466
  %1270 = vmatmul.bf16.gmra.mxu0 %v1142
  %v1271 = vpop.f32.mrf.mxu0
  %v1272 = vadd.f32 %v1259, %v1271
  %v1273 = vpop.f32.mrf.mxu0
  %1274 = vdwg.mxu0
  %1275 = vmatpush.bf16.msra.mxu0 %v461
  %1276 = vmatpush.bf16.msra.mxu0 %v455
  %1277 = vmatpush.bf16.msra.mxu0 %v449
  %1278 = vmatpush.bf16.msra.mxu0 %v443
  %1279 = vmatpush.bf16.msra.mxu0 %v437
  %1280 = vmatpush.bf16.msra.mxu0 %v431
  %1281 = vmatpush.bf16.msra.mxu0 %v425
  %1282 = vmatpush.bf16.msra.mxu0 %v419
  %1283 = vmatmul.bf16.gmra.mxu0 %v1141
  %v1284 = vpop.f32.mrf.mxu0
  %v1285 = vadd.f32 0.0, %v1284
  %v1286 = vpop.f32.mrf.mxu0
  %1287 = vdwg.mxu0
  %1288 = vmatpush.bf16.msra.mxu0 %v509
  %1289 = vmatpush.bf16.msra.mxu0 %v503
  %1290 = vmatpush.bf16.msra.mxu0 %v497
  %1291 = vmatpush.bf16.msra.mxu0 %v491
  %1292 = vmatpush.bf16.msra.mxu0 %v485
  %1293 = vmatpush.bf16.msra.mxu0 %v479
  %1294 = vmatpush.bf16.msra.mxu0 %v473
  %1295 = vmatpush.bf16.msra.mxu0 %v467
  %1296 = vmatmul.bf16.gmra.mxu0 %v1142
  %v1297 = vpop.f32.mrf.mxu0
  %v1298 = vadd.f32 %v1285, %v1297
  %v1299 = vpop.f32.mrf.mxu0
  %1300 = vdwg.mxu0
  %v1301 = vadd.f32 %v1132, %v1168
  %v1302 = vadd.f32 %v1133, %v1194
  %v1303 = vxor.u32 %v1301, 2147483648
  %v1304 = vxor.u32 %v1302, 2147483648
  %v1305 = vmul.f32 %v1303, 1.442695
  %v1306 = vpow.pop %v1305
  %v1307 = vmul.f32 %v1304, 1.442695
  %v1308 = vpow.pop %v1307
  %v1309 = vadd.f32 %v1306, 1.0
  %v1310 = vadd.f32 %v1308, 1.0
  %v1311 = vrcp.pop %v1309
  %v1312 = vmul.f32 %v1309, %v1311
  %v1313 = vsub.f32 1.0, %v1312
  %v1314 = vmul.f32 %v1311, %v1313
  %v1315 = vadd.f32 %v1311, %v1314
  %vm1316 = vweird.f32 %v1309
  %vm1317 = vweird.f32 %v1311
  %vm1318 = vmor %vm1316, %vm1317
  %v1319 = vsel %vm1318, %v1311, %v1315
  %v1320 = vand.u32 2147483647, %v1309
  %vm1321 = vcmp.eq.f32.partialorder %v1320, 8.507059e+37
  %v1322 = vand.u32 %v1309, 2147483648
  %v1323 = vor.u32 1.1754944e-38, %v1322
  %v1324 = vsel %vm1321, %v1323, %v1319
  %v1325 = vmul.f32 1.0, %v1324
  %v1326 = vrcp.pop %v1310
  %v1327 = vmul.f32 %v1310, %v1326
  %v1328 = vsub.f32 1.0, %v1327
  %v1329 = vmul.f32 %v1326, %v1328
  %v1330 = vadd.f32 %v1326, %v1329
  %vm1331 = vweird.f32 %v1310
  %vm1332 = vweird.f32 %v1326
  %vm1333 = vmor %vm1331, %vm1332
  %v1334 = vsel %vm1333, %v1326, %v1330
  %v1335 = vand.u32 2147483647, %v1310
  %vm1336 = vcmp.eq.f32.partialorder %v1335, 8.507059e+37
  %v1337 = vand.u32 %v1310, 2147483648
  %v1338 = vor.u32 1.1754944e-38, %v1337
  %v1339 = vsel %vm1336, %v1338, %v1334
  %v1340 = vmul.f32 1.0, %v1339
  %v1341 = vadd.f32 %v1134, %v1220
  %v1342 = vadd.f32 %v1135, %v1246
  %v1343 = vxor.u32 %v1341, 2147483648
  %v1344 = vxor.u32 %v1342, 2147483648
  %v1345 = vmul.f32 %v1343, 1.442695
  %v1346 = vpow.pop %v1345
  %v1347 = vmul.f32 %v1344, 1.442695
  %v1348 = vpow.pop %v1347
  %v1349 = vadd.f32 %v1346, 1.0
  %v1350 = vadd.f32 %v1348, 1.0
  %v1351 = vrcp.pop %v1349
  %v1352 = vmul.f32 %v1349, %v1351
  %v1353 = vsub.f32 1.0, %v1352
  %v1354 = vmul.f32 %v1351, %v1353
  %v1355 = vadd.f32 %v1351, %v1354
  %vm1356 = vweird.f32 %v1349
  %vm1357 = vweird.f32 %v1351
  %vm1358 = vmor %vm1356, %vm1357
  %v1359 = vsel %vm1358, %v1351, %v1355
  %v1360 = vand.u32 2147483647, %v1349
  %vm1361 = vcmp.eq.f32.partialorder %v1360, 8.507059e+37
  %v1362 = vand.u32 %v1349, 2147483648
  %v1363 = vor.u32 1.1754944e-38, %v1362
  %v1364 = vsel %vm1361, %v1363, %v1359
  %v1365 = vmul.f32 1.0, %v1364
  %v1366 = vrcp.pop %v1350
  %v1367 = vmul.f32 %v1350, %v1366
  %v1368 = vsub.f32 1.0, %v1367
  %v1369 = vmul.f32 %v1366, %v1368
  %v1370 = vadd.f32 %v1366, %v1369
  %vm1371 = vweird.f32 %v1350
  %vm1372 = vweird.f32 %v1366
  %vm1373 = vmor %vm1371, %vm1372
  %v1374 = vsel %vm1373, %v1366, %v1370
  %v1375 = vand.u32 2147483647, %v1350
  %vm1376 = vcmp.eq.f32.partialorder %v1375, 8.507059e+37
  %v1377 = vand.u32 %v1350, 2147483648
  %v1378 = vor.u32 1.1754944e-38, %v1377
  %v1379 = vsel %vm1376, %v1378, %v1374
  %v1380 = vmul.f32 1.0, %v1379
  %v1381 = vadd.f32 %v1272, %v843
  %v1382 = vadd.f32 %v1298, %v844
  %v1383 = vmul.f32 %v1325, %v1381
  %v1384 = vmul.f32 %v1340, %v1382
  %v1385 = vadd.f32 %v1136, %v1383
  %v1386 = vadd.f32 %v1137, %v1384
  %v1387 = vtanh.pop %v1385
  %v1388 = vtanh.pop %v1386
  %v1389 = vsub.f32 1.0, %v1365
  %v1390 = vsub.f32 1.0, %v1380
  %v1391 = vmul.f32 %v1389, %v1387
  %v1392 = vmul.f32 %v1390, %v1388
  %v1393 = vmul.f32 %v1365, %v1128
  %v1394 = vmul.f32 %v1380, %v1129
  %v1395 = vadd.f32 %v1391, %v1393
  %v1396 = vadd.f32 %v1392, %v1394
  %v1397 = vpack.c.bf16 %v1396, %v1395
  %s1398 = scalar_lea.vmem %s0, 144
  %v1399 = vld [vmem:[%s1398] sm:$0xff]
  %v1400 = vld [vmem:[%s1398 + $0x8] sm:$0xff]
  %v1401 = vld [vmem:[%s1398 + $0x10] sm:$0xff]
  %v1402 = vld [vmem:[%s1398 + $0x18] sm:$0xff]
  %v1403 = vld [vmem:[%s1398 + $0x20] sm:$0xff]
  %v1404 = vld [vmem:[%s1398 + $0x28] sm:$0xff]
  %v1406 = vunpack.c.l.b16 %v1397
  %v1407 = vunpack.c.h.b16 %v1397
  %v1408 = vpack.c.b16 %v1406, %v1406
  %v1409 = vpack.c.b16 %v1407, %v1407
  %1412 = vmatpush.bf16.msra.mxu0 %v456
  %1413 = vmatpush.bf16.msra.mxu0 %v450
  %1414 = vmatpush.bf16.msra.mxu0 %v444
  %1415 = vmatpush.bf16.msra.mxu0 %v438
  %1416 = vmatpush.bf16.msra.mxu0 %v432
  %1417 = vmatpush.bf16.msra.mxu0 %v426
  %1418 = vmatpush.bf16.msra.mxu0 %v420
  %1419 = vmatpush.bf16.msra.mxu0 %v414
  %1420 = vmatmul.bf16.gmra.mxu0 %v1408
  %v1421 = vpop.f32.mrf.mxu0
  %v1422 = vadd.f32 0.0, %v1421
  %v1423 = vpop.f32.mrf.mxu0
  %1424 = vdwg.mxu0
  %1425 = vmatpush.bf16.msra.mxu0 %v504
  %1426 = vmatpush.bf16.msra.mxu0 %v498
  %1427 = vmatpush.bf16.msra.mxu0 %v492
  %1428 = vmatpush.bf16.msra.mxu0 %v486
  %1429 = vmatpush.bf16.msra.mxu0 %v480
  %1430 = vmatpush.bf16.msra.mxu0 %v474
  %1431 = vmatpush.bf16.msra.mxu0 %v468
  %1432 = vmatpush.bf16.msra.mxu0 %v462
  %1433 = vmatmul.bf16.gmra.mxu0 %v1409
  %v1434 = vpop.f32.mrf.mxu0
  %v1435 = vadd.f32 %v1422, %v1434
  %v1436 = vpop.f32.mrf.mxu0
  %1437 = vdwg.mxu0
  %1438 = vmatpush.bf16.msra.mxu0 %v457
  %1439 = vmatpush.bf16.msra.mxu0 %v451
  %1440 = vmatpush.bf16.msra.mxu0 %v445
  %1441 = vmatpush.bf16.msra.mxu0 %v439
  %1442 = vmatpush.bf16.msra.mxu0 %v433
  %1443 = vmatpush.bf16.msra.mxu0 %v427
  %1444 = vmatpush.bf16.msra.mxu0 %v421
  %1445 = vmatpush.bf16.msra.mxu0 %v415
  %1446 = vmatmul.bf16.gmra.mxu0 %v1408
  %v1447 = vpop.f32.mrf.mxu0
  %v1448 = vadd.f32 0.0, %v1447
  %v1449 = vpop.f32.mrf.mxu0
  %1450 = vdwg.mxu0
  %1451 = vmatpush.bf16.msra.mxu0 %v505
  %1452 = vmatpush.bf16.msra.mxu0 %v499
  %1453 = vmatpush.bf16.msra.mxu0 %v493
  %1454 = vmatpush.bf16.msra.mxu0 %v487
  %1455 = vmatpush.bf16.msra.mxu0 %v481
  %1456 = vmatpush.bf16.msra.mxu0 %v475
  %1457 = vmatpush.bf16.msra.mxu0 %v469
  %1458 = vmatpush.bf16.msra.mxu0 %v463
  %1459 = vmatmul.bf16.gmra.mxu0 %v1409
  %v1460 = vpop.f32.mrf.mxu0
  %v1461 = vadd.f32 %v1448, %v1460
  %v1462 = vpop.f32.mrf.mxu0
  %1463 = vdwg.mxu0
  %1464 = vmatpush.bf16.msra.mxu0 %v458
  %1465 = vmatpush.bf16.msra.mxu0 %v452
  %1466 = vmatpush.bf16.msra.mxu0 %v446
  %1467 = vmatpush.bf16.msra.mxu0 %v440
  %1468 = vmatpush.bf16.msra.mxu0 %v434
  %1469 = vmatpush.bf16.msra.mxu0 %v428
  %1470 = vmatpush.bf16.msra.mxu0 %v422
  %1471 = vmatpush.bf16.msra.mxu0 %v416
  %1472 = vmatmul.bf16.gmra.mxu0 %v1408
  %v1473 = vpop.f32.mrf.mxu0
  %v1474 = vadd.f32 0.0, %v1473
  %v1475 = vpop.f32.mrf.mxu0
  %1476 = vdwg.mxu0
  %1477 = vmatpush.bf16.msra.mxu0 %v506
  %1478 = vmatpush.bf16.msra.mxu0 %v500
  %1479 = vmatpush.bf16.msra.mxu0 %v494
  %1480 = vmatpush.bf16.msra.mxu0 %v488
  %1481 = vmatpush.bf16.msra.mxu0 %v482
  %1482 = vmatpush.bf16.msra.mxu0 %v476
  %1483 = vmatpush.bf16.msra.mxu0 %v470
  %1484 = vmatpush.bf16.msra.mxu0 %v464
  %1485 = vmatmul.bf16.gmra.mxu0 %v1409
  %v1486 = vpop.f32.mrf.mxu0
  %v1487 = vadd.f32 %v1474, %v1486
  %v1488 = vpop.f32.mrf.mxu0
  %1489 = vdwg.mxu0
  %1490 = vmatpush.bf16.msra.mxu0 %v459
  %1491 = vmatpush.bf16.msra.mxu0 %v453
  %1492 = vmatpush.bf16.msra.mxu0 %v447
  %1493 = vmatpush.bf16.msra.mxu0 %v441
  %1494 = vmatpush.bf16.msra.mxu0 %v435
  %1495 = vmatpush.bf16.msra.mxu0 %v429
  %1496 = vmatpush.bf16.msra.mxu0 %v423
  %1497 = vmatpush.bf16.msra.mxu0 %v417
  %1498 = vmatmul.bf16.gmra.mxu0 %v1408
  %v1499 = vpop.f32.mrf.mxu0
  %v1500 = vadd.f32 0.0, %v1499
  %v1501 = vpop.f32.mrf.mxu0
  %1502 = vdwg.mxu0
  %1503 = vmatpush.bf16.msra.mxu0 %v507
  %1504 = vmatpush.bf16.msra.mxu0 %v501
  %1505 = vmatpush.bf16.msra.mxu0 %v495
  %1506 = vmatpush.bf16.msra.mxu0 %v489
  %1507 = vmatpush.bf16.msra.mxu0 %v483
  %1508 = vmatpush.bf16.msra.mxu0 %v477
  %1509 = vmatpush.bf16.msra.mxu0 %v471
  %1510 = vmatpush.bf16.msra.mxu0 %v465
  %1511 = vmatmul.bf16.gmra.mxu0 %v1409
  %v1512 = vpop.f32.mrf.mxu0
  %v1513 = vadd.f32 %v1500, %v1512
  %v1514 = vpop.f32.mrf.mxu0
  %1515 = vdwg.mxu0
  %1516 = vmatpush.bf16.msra.mxu0 %v460
  %1517 = vmatpush.bf16.msra.mxu0 %v454
  %1518 = vmatpush.bf16.msra.mxu0 %v448
  %1519 = vmatpush.bf16.msra.mxu0 %v442
  %1520 = vmatpush.bf16.msra.mxu0 %v436
  %1521 = vmatpush.bf16.msra.mxu0 %v430
  %1522 = vmatpush.bf16.msra.mxu0 %v424
  %1523 = vmatpush.bf16.msra.mxu0 %v418
  %1524 = vmatmul.bf16.gmra.mxu0 %v1408
  %v1525 = vpop.f32.mrf.mxu0
  %v1526 = vadd.f32 0.0, %v1525
  %v1527 = vpop.f32.mrf.mxu0
  %1528 = vdwg.mxu0
  %1529 = vmatpush.bf16.msra.mxu0 %v508
  %1530 = vmatpush.bf16.msra.mxu0 %v502
  %1531 = vmatpush.bf16.msra.mxu0 %v496
  %1532 = vmatpush.bf16.msra.mxu0 %v490
  %1533 = vmatpush.bf16.msra.mxu0 %v484
  %1534 = vmatpush.bf16.msra.mxu0 %v478
  %1535 = vmatpush.bf16.msra.mxu0 %v472
  %1536 = vmatpush.bf16.msra.mxu0 %v466
  %1537 = vmatmul.bf16.gmra.mxu0 %v1409
  %v1538 = vpop.f32.mrf.mxu0
  %v1539 = vadd.f32 %v1526, %v1538
  %v1540 = vpop.f32.mrf.mxu0
  %1541 = vdwg.mxu0
  %1542 = vmatpush.bf16.msra.mxu0 %v461
  %1543 = vmatpush.bf16.msra.mxu0 %v455
  %1544 = vmatpush.bf16.msra.mxu0 %v449
  %1545 = vmatpush.bf16.msra.mxu0 %v443
  %1546 = vmatpush.bf16.msra.mxu0 %v437
  %1547 = vmatpush.bf16.msra.mxu0 %v431
  %1548 = vmatpush.bf16.msra.mxu0 %v425
  %1549 = vmatpush.bf16.msra.mxu0 %v419
  %1550 = vmatmul.bf16.gmra.mxu0 %v1408
  %v1551 = vpop.f32.mrf.mxu0
  %v1552 = vadd.f32 0.0, %v1551
  %v1553 = vpop.f32.mrf.mxu0
  %1554 = vdwg.mxu0
  %1555 = vmatpush.bf16.msra.mxu0 %v509
  %1556 = vmatpush.bf16.msra.mxu0 %v503
  %1557 = vmatpush.bf16.msra.mxu0 %v497
  %1558 = vmatpush.bf16.msra.mxu0 %v491
  %1559 = vmatpush.bf16.msra.mxu0 %v485
  %1560 = vmatpush.bf16.msra.mxu0 %v479
  %1561 = vmatpush.bf16.msra.mxu0 %v473
  %1562 = vmatpush.bf16.msra.mxu0 %v467
  %1563 = vmatmul.bf16.gmra.mxu0 %v1409
  %v1564 = vpop.f32.mrf.mxu0
  %v1565 = vadd.f32 %v1552, %v1564
  %v1566 = vpop.f32.mrf.mxu0
  %1567 = vdwg.mxu0
  %v1568 = vadd.f32 %v1399, %v1435
  %v1569 = vadd.f32 %v1400, %v1461
  %v1570 = vxor.u32 %v1568, 2147483648
  %v1571 = vxor.u32 %v1569, 2147483648
  %v1572 = vmul.f32 %v1570, 1.442695
  %v1573 = vpow.pop %v1572
  %v1574 = vmul.f32 %v1571, 1.442695
  %v1575 = vpow.pop %v1574
  %v1576 = vadd.f32 %v1573, 1.0
  %v1577 = vadd.f32 %v1575, 1.0
  %v1578 = vrcp.pop %v1576
  %v1579 = vmul.f32 %v1576, %v1578
  %v1580 = vsub.f32 1.0, %v1579
  %v1581 = vmul.f32 %v1578, %v1580
  %v1582 = vadd.f32 %v1578, %v1581
  %vm1583 = vweird.f32 %v1576
  %vm1584 = vweird.f32 %v1578
  %vm1585 = vmor %vm1583, %vm1584
  %v1586 = vsel %vm1585, %v1578, %v1582
  %v1587 = vand.u32 2147483647, %v1576
  %vm1588 = vcmp.eq.f32.partialorder %v1587, 8.507059e+37
  %v1589 = vand.u32 %v1576, 2147483648
  %v1590 = vor.u32 1.1754944e-38, %v1589
  %v1591 = vsel %vm1588, %v1590, %v1586
  %v1592 = vmul.f32 1.0, %v1591
  %v1593 = vrcp.pop %v1577
  %v1594 = vmul.f32 %v1577, %v1593
  %v1595 = vsub.f32 1.0, %v1594
  %v1596 = vmul.f32 %v1593, %v1595
  %v1597 = vadd.f32 %v1593, %v1596
  %vm1598 = vweird.f32 %v1577
  %vm1599 = vweird.f32 %v1593
  %vm1600 = vmor %vm1598, %vm1599
  %v1601 = vsel %vm1600, %v1593, %v1597
  %v1602 = vand.u32 2147483647, %v1577
  %vm1603 = vcmp.eq.f32.partialorder %v1602, 8.507059e+37
  %v1604 = vand.u32 %v1577, 2147483648
  %v1605 = vor.u32 1.1754944e-38, %v1604
  %v1606 = vsel %vm1603, %v1605, %v1601
  %v1607 = vmul.f32 1.0, %v1606
  %v1608 = vadd.f32 %v1401, %v1487
  %v1609 = vadd.f32 %v1402, %v1513
  %v1610 = vxor.u32 %v1608, 2147483648
  %v1611 = vxor.u32 %v1609, 2147483648
  %v1612 = vmul.f32 %v1610, 1.442695
  %v1613 = vpow.pop %v1612
  %v1614 = vmul.f32 %v1611, 1.442695
  %v1615 = vpow.pop %v1614
  %v1616 = vadd.f32 %v1613, 1.0
  %v1617 = vadd.f32 %v1615, 1.0
  %v1618 = vrcp.pop %v1616
  %v1619 = vmul.f32 %v1616, %v1618
  %v1620 = vsub.f32 1.0, %v1619
  %v1621 = vmul.f32 %v1618, %v1620
  %v1622 = vadd.f32 %v1618, %v1621
  %vm1623 = vweird.f32 %v1616
  %vm1624 = vweird.f32 %v1618
  %vm1625 = vmor %vm1623, %vm1624
  %v1626 = vsel %vm1625, %v1618, %v1622
  %v1627 = vand.u32 2147483647, %v1616
  %vm1628 = vcmp.eq.f32.partialorder %v1627, 8.507059e+37
  %v1629 = vand.u32 %v1616, 2147483648
  %v1630 = vor.u32 1.1754944e-38, %v1629
  %v1631 = vsel %vm1628, %v1630, %v1626
  %v1632 = vmul.f32 1.0, %v1631
  %v1633 = vrcp.pop %v1617
  %v1634 = vmul.f32 %v1617, %v1633
  %v1635 = vsub.f32 1.0, %v1634
  %v1636 = vmul.f32 %v1633, %v1635
  %v1637 = vadd.f32 %v1633, %v1636
  %vm1638 = vweird.f32 %v1617
  %vm1639 = vweird.f32 %v1633
  %vm1640 = vmor %vm1638, %vm1639
  %v1641 = vsel %vm1640, %v1633, %v1637
  %v1642 = vand.u32 2147483647, %v1617
  %vm1643 = vcmp.eq.f32.partialorder %v1642, 8.507059e+37
  %v1644 = vand.u32 %v1617, 2147483648
  %v1645 = vor.u32 1.1754944e-38, %v1644
  %v1646 = vsel %vm1643, %v1645, %v1641
  %v1647 = vmul.f32 1.0, %v1646
  %v1648 = vadd.f32 %v1539, %v843
  %v1649 = vadd.f32 %v1565, %v844
  %v1650 = vmul.f32 %v1592, %v1648
  %v1651 = vmul.f32 %v1607, %v1649
  %v1652 = vadd.f32 %v1403, %v1650
  %v1653 = vadd.f32 %v1404, %v1651
  %v1654 = vtanh.pop %v1652
  %v1655 = vtanh.pop %v1653
  %v1656 = vsub.f32 1.0, %v1632
  %v1657 = vsub.f32 1.0, %v1647
  %v1658 = vmul.f32 %v1656, %v1654
  %v1659 = vmul.f32 %v1657, %v1655
  %v1660 = vmul.f32 %v1632, %v1395
  %v1661 = vmul.f32 %v1647, %v1396
  %v1662 = vadd.f32 %v1658, %v1660
  %v1663 = vadd.f32 %v1659, %v1661
  %v1664 = vpack.c.bf16 %v1663, %v1662
  %s1665 = scalar_lea.vmem %s0, 192
  %v1666 = vld [vmem:[%s1665] sm:$0xff]
  %v1667 = vld [vmem:[%s1665 + $0x8] sm:$0xff]
  %v1668 = vld [vmem:[%s1665 + $0x10] sm:$0xff]
  %v1669 = vld [vmem:[%s1665 + $0x18] sm:$0xff]
  %v1670 = vld [vmem:[%s1665 + $0x20] sm:$0xff]
  %v1671 = vld [vmem:[%s1665 + $0x28] sm:$0xff]
  %v1673 = vunpack.c.l.b16 %v1664
  %v1674 = vunpack.c.h.b16 %v1664
  %v1675 = vpack.c.b16 %v1673, %v1673
  %v1676 = vpack.c.b16 %v1674, %v1674
  %1679 = vmatpush.bf16.msra.mxu0 %v456
  %1680 = vmatpush.bf16.msra.mxu0 %v450
  %1681 = vmatpush.bf16.msra.mxu0 %v444
  %1682 = vmatpush.bf16.msra.mxu0 %v438
  %1683 = vmatpush.bf16.msra.mxu0 %v432
  %1684 = vmatpush.bf16.msra.mxu0 %v426
  %1685 = vmatpush.bf16.msra.mxu0 %v420
  %1686 = vmatpush.bf16.msra.mxu0 %v414
  %1687 = vmatmul.bf16.gmra.mxu0 %v1675
  %v1688 = vpop.f32.mrf.mxu0
  %v1689 = vadd.f32 0.0, %v1688
  %v1690 = vpop.f32.mrf.mxu0
  %1691 = vdwg.mxu0
  %1692 = vmatpush.bf16.msra.mxu0 %v504
  %1693 = vmatpush.bf16.msra.mxu0 %v498
  %1694 = vmatpush.bf16.msra.mxu0 %v492
  %1695 = vmatpush.bf16.msra.mxu0 %v486
  %1696 = vmatpush.bf16.msra.mxu0 %v480
  %1697 = vmatpush.bf16.msra.mxu0 %v474
  %1698 = vmatpush.bf16.msra.mxu0 %v468
  %1699 = vmatpush.bf16.msra.mxu0 %v462
  %1700 = vmatmul.bf16.gmra.mxu0 %v1676
  %v1701 = vpop.f32.mrf.mxu0
  %v1702 = vadd.f32 %v1689, %v1701
  %v1703 = vpop.f32.mrf.mxu0
  %1704 = vdwg.mxu0
  %1705 = vmatpush.bf16.msra.mxu0 %v457
  %1706 = vmatpush.bf16.msra.mxu0 %v451
  %1707 = vmatpush.bf16.msra.mxu0 %v445
  %1708 = vmatpush.bf16.msra.mxu0 %v439
  %1709 = vmatpush.bf16.msra.mxu0 %v433
  %1710 = vmatpush.bf16.msra.mxu0 %v427
  %1711 = vmatpush.bf16.msra.mxu0 %v421
  %1712 = vmatpush.bf16.msra.mxu0 %v415
  %1713 = vmatmul.bf16.gmra.mxu0 %v1675
  %v1714 = vpop.f32.mrf.mxu0
  %v1715 = vadd.f32 0.0, %v1714
  %v1716 = vpop.f32.mrf.mxu0
  %1717 = vdwg.mxu0
  %1718 = vmatpush.bf16.msra.mxu0 %v505
  %1719 = vmatpush.bf16.msra.mxu0 %v499
  %1720 = vmatpush.bf16.msra.mxu0 %v493
  %1721 = vmatpush.bf16.msra.mxu0 %v487
  %1722 = vmatpush.bf16.msra.mxu0 %v481
  %1723 = vmatpush.bf16.msra.mxu0 %v475
  %1724 = vmatpush.bf16.msra.mxu0 %v469
  %1725 = vmatpush.bf16.msra.mxu0 %v463
  %1726 = vmatmul.bf16.gmra.mxu0 %v1676
  %v1727 = vpop.f32.mrf.mxu0
  %v1728 = vadd.f32 %v1715, %v1727
  %v1729 = vpop.f32.mrf.mxu0
  %1730 = vdwg.mxu0
  %1731 = vmatpush.bf16.msra.mxu0 %v458
  %1732 = vmatpush.bf16.msra.mxu0 %v452
  %1733 = vmatpush.bf16.msra.mxu0 %v446
  %1734 = vmatpush.bf16.msra.mxu0 %v440
  %1735 = vmatpush.bf16.msra.mxu0 %v434
  %1736 = vmatpush.bf16.msra.mxu0 %v428
  %1737 = vmatpush.bf16.msra.mxu0 %v422
  %1738 = vmatpush.bf16.msra.mxu0 %v416
  %1739 = vmatmul.bf16.gmra.mxu0 %v1675
  %v1740 = vpop.f32.mrf.mxu0
  %v1741 = vadd.f32 0.0, %v1740
  %v1742 = vpop.f32.mrf.mxu0
  %1743 = vdwg.mxu0
  %1744 = vmatpush.bf16.msra.mxu0 %v506
  %1745 = vmatpush.bf16.msra.mxu0 %v500
  %1746 = vmatpush.bf16.msra.mxu0 %v494
  %1747 = vmatpush.bf16.msra.mxu0 %v488
  %1748 = vmatpush.bf16.msra.mxu0 %v482
  %1749 = vmatpush.bf16.msra.mxu0 %v476
  %1750 = vmatpush.bf16.msra.mxu0 %v470
  %1751 = vmatpush.bf16.msra.mxu0 %v464
  %1752 = vmatmul.bf16.gmra.mxu0 %v1676
  %v1753 = vpop.f32.mrf.mxu0
  %v1754 = vadd.f32 %v1741, %v1753
  %v1755 = vpop.f32.mrf.mxu0
  %1756 = vdwg.mxu0
  %1757 = vmatpush.bf16.msra.mxu0 %v459
  %1758 = vmatpush.bf16.msra.mxu0 %v453
  %1759 = vmatpush.bf16.msra.mxu0 %v447
  %1760 = vmatpush.bf16.msra.mxu0 %v441
  %1761 = vmatpush.bf16.msra.mxu0 %v435
  %1762 = vmatpush.bf16.msra.mxu0 %v429
  %1763 = vmatpush.bf16.msra.mxu0 %v423
  %1764 = vmatpush.bf16.msra.mxu0 %v417
  %1765 = vmatmul.bf16.gmra.mxu0 %v1675
  %v1766 = vpop.f32.mrf.mxu0
  %v1767 = vadd.f32 0.0, %v1766
  %v1768 = vpop.f32.mrf.mxu0
  %1769 = vdwg.mxu0
  %1770 = vmatpush.bf16.msra.mxu0 %v507
  %1771 = vmatpush.bf16.msra.mxu0 %v501
  %1772 = vmatpush.bf16.msra.mxu0 %v495
  %1773 = vmatpush.bf16.msra.mxu0 %v489
  %1774 = vmatpush.bf16.msra.mxu0 %v483
  %1775 = vmatpush.bf16.msra.mxu0 %v477
  %1776 = vmatpush.bf16.msra.mxu0 %v471
  %1777 = vmatpush.bf16.msra.mxu0 %v465
  %1778 = vmatmul.bf16.gmra.mxu0 %v1676
  %v1779 = vpop.f32.mrf.mxu0
  %v1780 = vadd.f32 %v1767, %v1779
  %v1781 = vpop.f32.mrf.mxu0
  %1782 = vdwg.mxu0
  %1783 = vmatpush.bf16.msra.mxu0 %v460
  %1784 = vmatpush.bf16.msra.mxu0 %v454
  %1785 = vmatpush.bf16.msra.mxu0 %v448
  %1786 = vmatpush.bf16.msra.mxu0 %v442
  %1787 = vmatpush.bf16.msra.mxu0 %v436
  %1788 = vmatpush.bf16.msra.mxu0 %v430
  %1789 = vmatpush.bf16.msra.mxu0 %v424
  %1790 = vmatpush.bf16.msra.mxu0 %v418
  %1791 = vmatmul.bf16.gmra.mxu0 %v1675
  %v1792 = vpop.f32.mrf.mxu0
  %v1793 = vadd.f32 0.0, %v1792
  %v1794 = vpop.f32.mrf.mxu0
  %1795 = vdwg.mxu0
  %1796 = vmatpush.bf16.msra.mxu0 %v508
  %1797 = vmatpush.bf16.msra.mxu0 %v502
  %1798 = vmatpush.bf16.msra.mxu0 %v496
  %1799 = vmatpush.bf16.msra.mxu0 %v490
  %1800 = vmatpush.bf16.msra.mxu0 %v484
  %1801 = vmatpush.bf16.msra.mxu0 %v478
  %1802 = vmatpush.bf16.msra.mxu0 %v472
  %1803 = vmatpush.bf16.msra.mxu0 %v466
  %1804 = vmatmul.bf16.gmra.mxu0 %v1676
  %v1805 = vpop.f32.mrf.mxu0
  %v1806 = vadd.f32 %v1793, %v1805
  %v1807 = vpop.f32.mrf.mxu0
  %1808 = vdwg.mxu0
  %1809 = vmatpush.bf16.msra.mxu0 %v461
  %1810 = vmatpush.bf16.msra.mxu0 %v455
  %1811 = vmatpush.bf16.msra.mxu0 %v449
  %1812 = vmatpush.bf16.msra.mxu0 %v443
  %1813 = vmatpush.bf16.msra.mxu0 %v437
  %1814 = vmatpush.bf16.msra.mxu0 %v431
  %1815 = vmatpush.bf16.msra.mxu0 %v425
  %1816 = vmatpush.bf16.msra.mxu0 %v419
  %1817 = vmatmul.bf16.gmra.mxu0 %v1675
  %v1818 = vpop.f32.mrf.mxu0
  %v1819 = vadd.f32 0.0, %v1818
  %v1820 = vpop.f32.mrf.mxu0
  %1821 = vdwg.mxu0
  %1822 = vmatpush.bf16.msra.mxu0 %v509
  %1823 = vmatpush.bf16.msra.mxu0 %v503
  %1824 = vmatpush.bf16.msra.mxu0 %v497
  %1825 = vmatpush.bf16.msra.mxu0 %v491
  %1826 = vmatpush.bf16.msra.mxu0 %v485
  %1827 = vmatpush.bf16.msra.mxu0 %v479
  %1828 = vmatpush.bf16.msra.mxu0 %v473
  %1829 = vmatpush.bf16.msra.mxu0 %v467
  %1830 = vmatmul.bf16.gmra.mxu0 %v1676
  %v1831 = vpop.f32.mrf.mxu0
  %v1832 = vadd.f32 %v1819, %v1831
  %v1833 = vpop.f32.mrf.mxu0
  %1834 = vdwg.mxu0
  %v1835 = vadd.f32 %v1666, %v1702
  %v1836 = vadd.f32 %v1667, %v1728
  %v1837 = vxor.u32 %v1835, 2147483648
  %v1838 = vxor.u32 %v1836, 2147483648
  %v1839 = vmul.f32 %v1837, 1.442695
  %v1840 = vpow.pop %v1839
  %v1841 = vmul.f32 %v1838, 1.442695
  %v1842 = vpow.pop %v1841
  %v1843 = vadd.f32 %v1840, 1.0
  %v1844 = vadd.f32 %v1842, 1.0
  %v1845 = vrcp.pop %v1843
  %v1846 = vmul.f32 %v1843, %v1845
  %v1847 = vsub.f32 1.0, %v1846
  %v1848 = vmul.f32 %v1845, %v1847
  %v1849 = vadd.f32 %v1845, %v1848
  %vm1850 = vweird.f32 %v1843
  %vm1851 = vweird.f32 %v1845
  %vm1852 = vmor %vm1850, %vm1851
  %v1853 = vsel %vm1852, %v1845, %v1849
  %v1854 = vand.u32 2147483647, %v1843
  %vm1855 = vcmp.eq.f32.partialorder %v1854, 8.507059e+37
  %v1856 = vand.u32 %v1843, 2147483648
  %v1857 = vor.u32 1.1754944e-38, %v1856
  %v1858 = vsel %vm1855, %v1857, %v1853
  %v1859 = vmul.f32 1.0, %v1858
  %v1860 = vrcp.pop %v1844
  %v1861 = vmul.f32 %v1844, %v1860
  %v1862 = vsub.f32 1.0, %v1861
  %v1863 = vmul.f32 %v1860, %v1862
  %v1864 = vadd.f32 %v1860, %v1863
  %vm1865 = vweird.f32 %v1844
  %vm1866 = vweird.f32 %v1860
  %vm1867 = vmor %vm1865, %vm1866
  %v1868 = vsel %vm1867, %v1860, %v1864
  %v1869 = vand.u32 2147483647, %v1844
  %vm1870 = vcmp.eq.f32.partialorder %v1869, 8.507059e+37
  %v1871 = vand.u32 %v1844, 2147483648
  %v1872 = vor.u32 1.1754944e-38, %v1871
  %v1873 = vsel %vm1870, %v1872, %v1868
  %v1874 = vmul.f32 1.0, %v1873
  %v1875 = vadd.f32 %v1668, %v1754
  %v1876 = vadd.f32 %v1669, %v1780
  %v1877 = vxor.u32 %v1875, 2147483648
  %v1878 = vxor.u32 %v1876, 2147483648
  %v1879 = vmul.f32 %v1877, 1.442695
  %v1880 = vpow.pop %v1879
  %v1881 = vmul.f32 %v1878, 1.442695
  %v1882 = vpow.pop %v1881
  %v1883 = vadd.f32 %v1880, 1.0
  %v1884 = vadd.f32 %v1882, 1.0
  %v1885 = vrcp.pop %v1883
  %v1886 = vmul.f32 %v1883, %v1885
  %v1887 = vsub.f32 1.0, %v1886
  %v1888 = vmul.f32 %v1885, %v1887
  %v1889 = vadd.f32 %v1885, %v1888
  %vm1890 = vweird.f32 %v1883
  %vm1891 = vweird.f32 %v1885
  %vm1892 = vmor %vm1890, %vm1891
  %v1893 = vsel %vm1892, %v1885, %v1889
  %v1894 = vand.u32 2147483647, %v1883
  %vm1895 = vcmp.eq.f32.partialorder %v1894, 8.507059e+37
  %v1896 = vand.u32 %v1883, 2147483648
  %v1897 = vor.u32 1.1754944e-38, %v1896
  %v1898 = vsel %vm1895, %v1897, %v1893
  %v1899 = vmul.f32 1.0, %v1898
  %v1900 = vrcp.pop %v1884
  %v1901 = vmul.f32 %v1884, %v1900
  %v1902 = vsub.f32 1.0, %v1901
  %v1903 = vmul.f32 %v1900, %v1902
  %v1904 = vadd.f32 %v1900, %v1903
  %vm1905 = vweird.f32 %v1884
  %vm1906 = vweird.f32 %v1900
  %vm1907 = vmor %vm1905, %vm1906
  %v1908 = vsel %vm1907, %v1900, %v1904
  %v1909 = vand.u32 2147483647, %v1884
  %vm1910 = vcmp.eq.f32.partialorder %v1909, 8.507059e+37
  %v1911 = vand.u32 %v1884, 2147483648
  %v1912 = vor.u32 1.1754944e-38, %v1911
  %v1913 = vsel %vm1910, %v1912, %v1908
  %v1914 = vmul.f32 1.0, %v1913
  %v1915 = vadd.f32 %v1806, %v843
  %v1916 = vadd.f32 %v1832, %v844
  %v1917 = vmul.f32 %v1859, %v1915
  %v1918 = vmul.f32 %v1874, %v1916
  %v1919 = vadd.f32 %v1670, %v1917
  %v1920 = vadd.f32 %v1671, %v1918
  %v1921 = vtanh.pop %v1919
  %v1922 = vtanh.pop %v1920
  %v1923 = vsub.f32 1.0, %v1899
  %v1924 = vsub.f32 1.0, %v1914
  %v1925 = vmul.f32 %v1923, %v1921
  %v1926 = vmul.f32 %v1924, %v1922
  %v1927 = vmul.f32 %v1899, %v1662
  %v1928 = vmul.f32 %v1914, %v1663
  %v1929 = vadd.f32 %v1925, %v1927
  %v1930 = vadd.f32 %v1926, %v1928
  %v1931 = vpack.c.bf16 %v1930, %v1929
  %s1932 = scalar_lea.vmem %s0, 240
  %v1933 = vld [vmem:[%s1932] sm:$0xff]
  %v1934 = vld [vmem:[%s1932 + $0x8] sm:$0xff]
  %v1935 = vld [vmem:[%s1932 + $0x10] sm:$0xff]
  %v1936 = vld [vmem:[%s1932 + $0x18] sm:$0xff]
  %v1937 = vld [vmem:[%s1932 + $0x20] sm:$0xff]
  %v1938 = vld [vmem:[%s1932 + $0x28] sm:$0xff]
  %v1940 = vunpack.c.l.b16 %v1931
  %v1941 = vunpack.c.h.b16 %v1931
  %v1942 = vpack.c.b16 %v1940, %v1940
  %v1943 = vpack.c.b16 %v1941, %v1941
  %1946 = vmatpush.bf16.msra.mxu0 %v456
  %1947 = vmatpush.bf16.msra.mxu0 %v450
  %1948 = vmatpush.bf16.msra.mxu0 %v444
  %1949 = vmatpush.bf16.msra.mxu0 %v438
  %1950 = vmatpush.bf16.msra.mxu0 %v432
  %1951 = vmatpush.bf16.msra.mxu0 %v426
  %1952 = vmatpush.bf16.msra.mxu0 %v420
  %1953 = vmatpush.bf16.msra.mxu0 %v414
  %1954 = vmatmul.bf16.gmra.mxu0 %v1942
  %v1955 = vpop.f32.mrf.mxu0
  %v1956 = vadd.f32 0.0, %v1955
  %v1957 = vpop.f32.mrf.mxu0
  %1958 = vdwg.mxu0
  %1959 = vmatpush.bf16.msra.mxu0 %v504
  %1960 = vmatpush.bf16.msra.mxu0 %v498
  %1961 = vmatpush.bf16.msra.mxu0 %v492
  %1962 = vmatpush.bf16.msra.mxu0 %v486
  %1963 = vmatpush.bf16.msra.mxu0 %v480
  %1964 = vmatpush.bf16.msra.mxu0 %v474
  %1965 = vmatpush.bf16.msra.mxu0 %v468
  %1966 = vmatpush.bf16.msra.mxu0 %v462
  %1967 = vmatmul.bf16.gmra.mxu0 %v1943
  %v1968 = vpop.f32.mrf.mxu0
  %v1969 = vadd.f32 %v1956, %v1968
  %v1970 = vpop.f32.mrf.mxu0
  %1971 = vdwg.mxu0
  %1972 = vmatpush.bf16.msra.mxu0 %v457
  %1973 = vmatpush.bf16.msra.mxu0 %v451
  %1974 = vmatpush.bf16.msra.mxu0 %v445
  %1975 = vmatpush.bf16.msra.mxu0 %v439
  %1976 = vmatpush.bf16.msra.mxu0 %v433
  %1977 = vmatpush.bf16.msra.mxu0 %v427
  %1978 = vmatpush.bf16.msra.mxu0 %v421
  %1979 = vmatpush.bf16.msra.mxu0 %v415
  %1980 = vmatmul.bf16.gmra.mxu0 %v1942
  %v1981 = vpop.f32.mrf.mxu0
  %v1982 = vadd.f32 0.0, %v1981
  %v1983 = vpop.f32.mrf.mxu0
  %1984 = vdwg.mxu0
  %1985 = vmatpush.bf16.msra.mxu0 %v505
  %1986 = vmatpush.bf16.msra.mxu0 %v499
  %1987 = vmatpush.bf16.msra.mxu0 %v493
  %1988 = vmatpush.bf16.msra.mxu0 %v487
  %1989 = vmatpush.bf16.msra.mxu0 %v481
  %1990 = vmatpush.bf16.msra.mxu0 %v475
  %1991 = vmatpush.bf16.msra.mxu0 %v469
  %1992 = vmatpush.bf16.msra.mxu0 %v463
  %1993 = vmatmul.bf16.gmra.mxu0 %v1943
  %v1994 = vpop.f32.mrf.mxu0
  %v1995 = vadd.f32 %v1982, %v1994
  %v1996 = vpop.f32.mrf.mxu0
  %1997 = vdwg.mxu0
  %1998 = vmatpush.bf16.msra.mxu0 %v458
  %1999 = vmatpush.bf16.msra.mxu0 %v452
  %2000 = vmatpush.bf16.msra.mxu0 %v446
  %2001 = vmatpush.bf16.msra.mxu0 %v440
  %2002 = vmatpush.bf16.msra.mxu0 %v434
  %2003 = vmatpush.bf16.msra.mxu0 %v428
  %2004 = vmatpush.bf16.msra.mxu0 %v422
  %2005 = vmatpush.bf16.msra.mxu0 %v416
  %2006 = vmatmul.bf16.gmra.mxu0 %v1942
  %v2007 = vpop.f32.mrf.mxu0
  %v2008 = vadd.f32 0.0, %v2007
  %v2009 = vpop.f32.mrf.mxu0
  %2010 = vdwg.mxu0
  %2011 = vmatpush.bf16.msra.mxu0 %v506
  %2012 = vmatpush.bf16.msra.mxu0 %v500
  %2013 = vmatpush.bf16.msra.mxu0 %v494
  %2014 = vmatpush.bf16.msra.mxu0 %v488
  %2015 = vmatpush.bf16.msra.mxu0 %v482
  %2016 = vmatpush.bf16.msra.mxu0 %v476
  %2017 = vmatpush.bf16.msra.mxu0 %v470
  %2018 = vmatpush.bf16.msra.mxu0 %v464
  %2019 = vmatmul.bf16.gmra.mxu0 %v1943
  %v2020 = vpop.f32.mrf.mxu0
  %v2021 = vadd.f32 %v2008, %v2020
  %v2022 = vpop.f32.mrf.mxu0
  %2023 = vdwg.mxu0
  %2024 = vmatpush.bf16.msra.mxu0 %v459
  %2025 = vmatpush.bf16.msra.mxu0 %v453
  %2026 = vmatpush.bf16.msra.mxu0 %v447
  %2027 = vmatpush.bf16.msra.mxu0 %v441
  %2028 = vmatpush.bf16.msra.mxu0 %v435
  %2029 = vmatpush.bf16.msra.mxu0 %v429
  %2030 = vmatpush.bf16.msra.mxu0 %v423
  %2031 = vmatpush.bf16.msra.mxu0 %v417
  %2032 = vmatmul.bf16.gmra.mxu0 %v1942
  %v2033 = vpop.f32.mrf.mxu0
  %v2034 = vadd.f32 0.0, %v2033
  %v2035 = vpop.f32.mrf.mxu0
  %2036 = vdwg.mxu0
  %2037 = vmatpush.bf16.msra.mxu0 %v507
  %2038 = vmatpush.bf16.msra.mxu0 %v501
  %2039 = vmatpush.bf16.msra.mxu0 %v495
  %2040 = vmatpush.bf16.msra.mxu0 %v489
  %2041 = vmatpush.bf16.msra.mxu0 %v483
  %2042 = vmatpush.bf16.msra.mxu0 %v477
  %2043 = vmatpush.bf16.msra.mxu0 %v471
  %2044 = vmatpush.bf16.msra.mxu0 %v465
  %2045 = vmatmul.bf16.gmra.mxu0 %v1943
  %v2046 = vpop.f32.mrf.mxu0
  %v2047 = vadd.f32 %v2034, %v2046
  %v2048 = vpop.f32.mrf.mxu0
  %2049 = vdwg.mxu0
  %2050 = vmatpush.bf16.msra.mxu0 %v460
  %2051 = vmatpush.bf16.msra.mxu0 %v454
  %2052 = vmatpush.bf16.msra.mxu0 %v448
  %2053 = vmatpush.bf16.msra.mxu0 %v442
  %2054 = vmatpush.bf16.msra.mxu0 %v436
  %2055 = vmatpush.bf16.msra.mxu0 %v430
  %2056 = vmatpush.bf16.msra.mxu0 %v424
  %2057 = vmatpush.bf16.msra.mxu0 %v418
  %2058 = vmatmul.bf16.gmra.mxu0 %v1942
  %v2059 = vpop.f32.mrf.mxu0
  %v2060 = vadd.f32 0.0, %v2059
  %v2061 = vpop.f32.mrf.mxu0
  %2062 = vdwg.mxu0
  %2063 = vmatpush.bf16.msra.mxu0 %v508
  %2064 = vmatpush.bf16.msra.mxu0 %v502
  %2065 = vmatpush.bf16.msra.mxu0 %v496
  %2066 = vmatpush.bf16.msra.mxu0 %v490
  %2067 = vmatpush.bf16.msra.mxu0 %v484
  %2068 = vmatpush.bf16.msra.mxu0 %v478
  %2069 = vmatpush.bf16.msra.mxu0 %v472
  %2070 = vmatpush.bf16.msra.mxu0 %v466
  %2071 = vmatmul.bf16.gmra.mxu0 %v1943
  %v2072 = vpop.f32.mrf.mxu0
  %v2073 = vadd.f32 %v2060, %v2072
  %v2074 = vpop.f32.mrf.mxu0
  %2075 = vdwg.mxu0
  %2076 = vmatpush.bf16.msra.mxu0 %v461
  %2077 = vmatpush.bf16.msra.mxu0 %v455
  %2078 = vmatpush.bf16.msra.mxu0 %v449
  %2079 = vmatpush.bf16.msra.mxu0 %v443
  %2080 = vmatpush.bf16.msra.mxu0 %v437
  %2081 = vmatpush.bf16.msra.mxu0 %v431
  %2082 = vmatpush.bf16.msra.mxu0 %v425
  %2083 = vmatpush.bf16.msra.mxu0 %v419
  %2084 = vmatmul.bf16.gmra.mxu0 %v1942
  %v2085 = vpop.f32.mrf.mxu0
  %v2086 = vadd.f32 0.0, %v2085
  %v2087 = vpop.f32.mrf.mxu0
  %2088 = vdwg.mxu0
  %2089 = vmatpush.bf16.msra.mxu0 %v509
  %2090 = vmatpush.bf16.msra.mxu0 %v503
  %2091 = vmatpush.bf16.msra.mxu0 %v497
  %2092 = vmatpush.bf16.msra.mxu0 %v491
  %2093 = vmatpush.bf16.msra.mxu0 %v485
  %2094 = vmatpush.bf16.msra.mxu0 %v479
  %2095 = vmatpush.bf16.msra.mxu0 %v473
  %2096 = vmatpush.bf16.msra.mxu0 %v467
  %2097 = vmatmul.bf16.gmra.mxu0 %v1943
  %v2098 = vpop.f32.mrf.mxu0
  %v2099 = vadd.f32 %v2086, %v2098
  %v2100 = vpop.f32.mrf.mxu0
  %2101 = vdwg.mxu0
  %v2102 = vadd.f32 %v1933, %v1969
  %v2103 = vadd.f32 %v1934, %v1995
  %v2104 = vxor.u32 %v2102, 2147483648
  %v2105 = vxor.u32 %v2103, 2147483648
  %v2106 = vmul.f32 %v2104, 1.442695
  %v2107 = vpow.pop %v2106
  %v2108 = vmul.f32 %v2105, 1.442695
  %v2109 = vpow.pop %v2108
  %v2110 = vadd.f32 %v2107, 1.0
  %v2111 = vadd.f32 %v2109, 1.0
  %v2112 = vrcp.pop %v2110
  %v2113 = vmul.f32 %v2110, %v2112
  %v2114 = vsub.f32 1.0, %v2113
  %v2115 = vmul.f32 %v2112, %v2114
  %v2116 = vadd.f32 %v2112, %v2115
  %vm2117 = vweird.f32 %v2110
  %vm2118 = vweird.f32 %v2112
  %vm2119 = vmor %vm2117, %vm2118
  %v2120 = vsel %vm2119, %v2112, %v2116
  %v2121 = vand.u32 2147483647, %v2110
  %vm2122 = vcmp.eq.f32.partialorder %v2121, 8.507059e+37
  %v2123 = vand.u32 %v2110, 2147483648
  %v2124 = vor.u32 1.1754944e-38, %v2123
  %v2125 = vsel %vm2122, %v2124, %v2120
  %v2126 = vmul.f32 1.0, %v2125
  %v2127 = vrcp.pop %v2111
  %v2128 = vmul.f32 %v2111, %v2127
  %v2129 = vsub.f32 1.0, %v2128
  %v2130 = vmul.f32 %v2127, %v2129
  %v2131 = vadd.f32 %v2127, %v2130
  %vm2132 = vweird.f32 %v2111
  %vm2133 = vweird.f32 %v2127
  %vm2134 = vmor %vm2132, %vm2133
  %v2135 = vsel %vm2134, %v2127, %v2131
  %v2136 = vand.u32 2147483647, %v2111
  %vm2137 = vcmp.eq.f32.partialorder %v2136, 8.507059e+37
  %v2138 = vand.u32 %v2111, 2147483648
  %v2139 = vor.u32 1.1754944e-38, %v2138
  %v2140 = vsel %vm2137, %v2139, %v2135
  %v2141 = vmul.f32 1.0, %v2140
  %v2142 = vadd.f32 %v1935, %v2021
  %v2143 = vadd.f32 %v1936, %v2047
  %v2144 = vxor.u32 %v2142, 2147483648
  %v2145 = vxor.u32 %v2143, 2147483648
  %v2146 = vmul.f32 %v2144, 1.442695
  %v2147 = vpow.pop %v2146
  %v2148 = vmul.f32 %v2145, 1.442695
  %v2149 = vpow.pop %v2148
  %v2150 = vadd.f32 %v2147, 1.0
  %v2151 = vadd.f32 %v2149, 1.0
  %v2152 = vrcp.pop %v2150
  %v2153 = vmul.f32 %v2150, %v2152
  %v2154 = vsub.f32 1.0, %v2153
  %v2155 = vmul.f32 %v2152, %v2154
  %v2156 = vadd.f32 %v2152, %v2155
  %vm2157 = vweird.f32 %v2150
  %vm2158 = vweird.f32 %v2152
  %vm2159 = vmor %vm2157, %vm2158
  %v2160 = vsel %vm2159, %v2152, %v2156
  %v2161 = vand.u32 2147483647, %v2150
  %vm2162 = vcmp.eq.f32.partialorder %v2161, 8.507059e+37
  %v2163 = vand.u32 %v2150, 2147483648
  %v2164 = vor.u32 1.1754944e-38, %v2163
  %v2165 = vsel %vm2162, %v2164, %v2160
  %v2166 = vmul.f32 1.0, %v2165
  %v2167 = vrcp.pop %v2151
  %v2168 = vmul.f32 %v2151, %v2167
  %v2169 = vsub.f32 1.0, %v2168
  %v2170 = vmul.f32 %v2167, %v2169
  %v2171 = vadd.f32 %v2167, %v2170
  %vm2172 = vweird.f32 %v2151
  %vm2173 = vweird.f32 %v2167
  %vm2174 = vmor %vm2172, %vm2173
  %v2175 = vsel %vm2174, %v2167, %v2171
  %v2176 = vand.u32 2147483647, %v2151
  %vm2177 = vcmp.eq.f32.partialorder %v2176, 8.507059e+37
  %v2178 = vand.u32 %v2151, 2147483648
  %v2179 = vor.u32 1.1754944e-38, %v2178
  %v2180 = vsel %vm2177, %v2179, %v2175
  %v2181 = vmul.f32 1.0, %v2180
  %v2182 = vadd.f32 %v2073, %v843
  %v2183 = vadd.f32 %v2099, %v844
  %v2184 = vmul.f32 %v2126, %v2182
  %v2185 = vmul.f32 %v2141, %v2183
  %v2186 = vadd.f32 %v1937, %v2184
  %v2187 = vadd.f32 %v1938, %v2185
  %v2188 = vtanh.pop %v2186
  %v2189 = vtanh.pop %v2187
  %v2190 = vsub.f32 1.0, %v2166
  %v2191 = vsub.f32 1.0, %v2181
  %v2192 = vmul.f32 %v2190, %v2188
  %v2193 = vmul.f32 %v2191, %v2189
  %v2194 = vmul.f32 %v2166, %v1929
  %v2195 = vmul.f32 %v2181, %v1930
  %v2196 = vadd.f32 %v2192, %v2194
  %v2197 = vadd.f32 %v2193, %v2195
  %v2198 = vpack.c.bf16 %v2197, %v2196
  %s2199 = scalar_lea.vmem %s0, 288
  %v2200 = vld [vmem:[%s2199] sm:$0xff]
  %v2201 = vld [vmem:[%s2199 + $0x8] sm:$0xff]
  %v2202 = vld [vmem:[%s2199 + $0x10] sm:$0xff]
  %v2203 = vld [vmem:[%s2199 + $0x18] sm:$0xff]
  %v2204 = vld [vmem:[%s2199 + $0x20] sm:$0xff]
  %v2205 = vld [vmem:[%s2199 + $0x28] sm:$0xff]
  %v2207 = vunpack.c.l.b16 %v2198
  %v2208 = vunpack.c.h.b16 %v2198
  %v2209 = vpack.c.b16 %v2207, %v2207
  %v2210 = vpack.c.b16 %v2208, %v2208
  %2213 = vmatpush.bf16.msra.mxu0 %v456
  %2214 = vmatpush.bf16.msra.mxu0 %v450
  %2215 = vmatpush.bf16.msra.mxu0 %v444
  %2216 = vmatpush.bf16.msra.mxu0 %v438
  %2217 = vmatpush.bf16.msra.mxu0 %v432
  %2218 = vmatpush.bf16.msra.mxu0 %v426
  %2219 = vmatpush.bf16.msra.mxu0 %v420
  %2220 = vmatpush.bf16.msra.mxu0 %v414
  %2221 = vmatmul.bf16.gmra.mxu0 %v2209
  %v2222 = vpop.f32.mrf.mxu0
  %v2223 = vadd.f32 0.0, %v2222
  %v2224 = vpop.f32.mrf.mxu0
  %2225 = vdwg.mxu0
  %2226 = vmatpush.bf16.msra.mxu0 %v504
  %2227 = vmatpush.bf16.msra.mxu0 %v498
  %2228 = vmatpush.bf16.msra.mxu0 %v492
  %2229 = vmatpush.bf16.msra.mxu0 %v486
  %2230 = vmatpush.bf16.msra.mxu0 %v480
  %2231 = vmatpush.bf16.msra.mxu0 %v474
  %2232 = vmatpush.bf16.msra.mxu0 %v468
  %2233 = vmatpush.bf16.msra.mxu0 %v462
  %2234 = vmatmul.bf16.gmra.mxu0 %v2210
  %v2235 = vpop.f32.mrf.mxu0
  %v2236 = vadd.f32 %v2223, %v2235
  %v2237 = vpop.f32.mrf.mxu0
  %2238 = vdwg.mxu0
  %2239 = vmatpush.bf16.msra.mxu0 %v457
  %2240 = vmatpush.bf16.msra.mxu0 %v451
  %2241 = vmatpush.bf16.msra.mxu0 %v445
  %2242 = vmatpush.bf16.msra.mxu0 %v439
  %2243 = vmatpush.bf16.msra.mxu0 %v433
  %2244 = vmatpush.bf16.msra.mxu0 %v427
  %2245 = vmatpush.bf16.msra.mxu0 %v421
  %2246 = vmatpush.bf16.msra.mxu0 %v415
  %2247 = vmatmul.bf16.gmra.mxu0 %v2209
  %v2248 = vpop.f32.mrf.mxu0
  %v2249 = vadd.f32 0.0, %v2248
  %v2250 = vpop.f32.mrf.mxu0
  %2251 = vdwg.mxu0
  %2252 = vmatpush.bf16.msra.mxu0 %v505
  %2253 = vmatpush.bf16.msra.mxu0 %v499
  %2254 = vmatpush.bf16.msra.mxu0 %v493
  %2255 = vmatpush.bf16.msra.mxu0 %v487
  %2256 = vmatpush.bf16.msra.mxu0 %v481
  %2257 = vmatpush.bf16.msra.mxu0 %v475
  %2258 = vmatpush.bf16.msra.mxu0 %v469
  %2259 = vmatpush.bf16.msra.mxu0 %v463
  %2260 = vmatmul.bf16.gmra.mxu0 %v2210
  %v2261 = vpop.f32.mrf.mxu0
  %v2262 = vadd.f32 %v2249, %v2261
  %v2263 = vpop.f32.mrf.mxu0
  %2264 = vdwg.mxu0
  %2265 = vmatpush.bf16.msra.mxu0 %v458
  %2266 = vmatpush.bf16.msra.mxu0 %v452
  %2267 = vmatpush.bf16.msra.mxu0 %v446
  %2268 = vmatpush.bf16.msra.mxu0 %v440
  %2269 = vmatpush.bf16.msra.mxu0 %v434
  %2270 = vmatpush.bf16.msra.mxu0 %v428
  %2271 = vmatpush.bf16.msra.mxu0 %v422
  %2272 = vmatpush.bf16.msra.mxu0 %v416
  %2273 = vmatmul.bf16.gmra.mxu0 %v2209
  %v2274 = vpop.f32.mrf.mxu0
  %v2275 = vadd.f32 0.0, %v2274
  %v2276 = vpop.f32.mrf.mxu0
  %2277 = vdwg.mxu0
  %2278 = vmatpush.bf16.msra.mxu0 %v506
  %2279 = vmatpush.bf16.msra.mxu0 %v500
  %2280 = vmatpush.bf16.msra.mxu0 %v494
  %2281 = vmatpush.bf16.msra.mxu0 %v488
  %2282 = vmatpush.bf16.msra.mxu0 %v482
  %2283 = vmatpush.bf16.msra.mxu0 %v476
  %2284 = vmatpush.bf16.msra.mxu0 %v470
  %2285 = vmatpush.bf16.msra.mxu0 %v464
  %2286 = vmatmul.bf16.gmra.mxu0 %v2210
  %v2287 = vpop.f32.mrf.mxu0
  %v2288 = vadd.f32 %v2275, %v2287
  %v2289 = vpop.f32.mrf.mxu0
  %2290 = vdwg.mxu0
  %2291 = vmatpush.bf16.msra.mxu0 %v459
  %2292 = vmatpush.bf16.msra.mxu0 %v453
  %2293 = vmatpush.bf16.msra.mxu0 %v447
  %2294 = vmatpush.bf16.msra.mxu0 %v441
  %2295 = vmatpush.bf16.msra.mxu0 %v435
  %2296 = vmatpush.bf16.msra.mxu0 %v429
  %2297 = vmatpush.bf16.msra.mxu0 %v423
  %2298 = vmatpush.bf16.msra.mxu0 %v417
  %2299 = vmatmul.bf16.gmra.mxu0 %v2209
  %v2300 = vpop.f32.mrf.mxu0
  %v2301 = vadd.f32 0.0, %v2300
  %v2302 = vpop.f32.mrf.mxu0
  %2303 = vdwg.mxu0
  %2304 = vmatpush.bf16.msra.mxu0 %v507
  %2305 = vmatpush.bf16.msra.mxu0 %v501
  %2306 = vmatpush.bf16.msra.mxu0 %v495
  %2307 = vmatpush.bf16.msra.mxu0 %v489
  %2308 = vmatpush.bf16.msra.mxu0 %v483
  %2309 = vmatpush.bf16.msra.mxu0 %v477
  %2310 = vmatpush.bf16.msra.mxu0 %v471
  %2311 = vmatpush.bf16.msra.mxu0 %v465
  %2312 = vmatmul.bf16.gmra.mxu0 %v2210
  %v2313 = vpop.f32.mrf.mxu0
  %v2314 = vadd.f32 %v2301, %v2313
  %v2315 = vpop.f32.mrf.mxu0
  %2316 = vdwg.mxu0
  %2317 = vmatpush.bf16.msra.mxu0 %v460
  %2318 = vmatpush.bf16.msra.mxu0 %v454
  %2319 = vmatpush.bf16.msra.mxu0 %v448
  %2320 = vmatpush.bf16.msra.mxu0 %v442
  %2321 = vmatpush.bf16.msra.mxu0 %v436
  %2322 = vmatpush.bf16.msra.mxu0 %v430
  %2323 = vmatpush.bf16.msra.mxu0 %v424
  %2324 = vmatpush.bf16.msra.mxu0 %v418
  %2325 = vmatmul.bf16.gmra.mxu0 %v2209
  %v2326 = vpop.f32.mrf.mxu0
  %v2327 = vadd.f32 0.0, %v2326
  %v2328 = vpop.f32.mrf.mxu0
  %2329 = vdwg.mxu0
  %2330 = vmatpush.bf16.msra.mxu0 %v508
  %2331 = vmatpush.bf16.msra.mxu0 %v502
  %2332 = vmatpush.bf16.msra.mxu0 %v496
  %2333 = vmatpush.bf16.msra.mxu0 %v490
  %2334 = vmatpush.bf16.msra.mxu0 %v484
  %2335 = vmatpush.bf16.msra.mxu0 %v478
  %2336 = vmatpush.bf16.msra.mxu0 %v472
  %2337 = vmatpush.bf16.msra.mxu0 %v466
  %2338 = vmatmul.bf16.gmra.mxu0 %v2210
  %v2339 = vpop.f32.mrf.mxu0
  %v2340 = vadd.f32 %v2327, %v2339
  %v2341 = vpop.f32.mrf.mxu0
  %2342 = vdwg.mxu0
  %2343 = vmatpush.bf16.msra.mxu0 %v461
  %2344 = vmatpush.bf16.msra.mxu0 %v455
  %2345 = vmatpush.bf16.msra.mxu0 %v449
  %2346 = vmatpush.bf16.msra.mxu0 %v443
  %2347 = vmatpush.bf16.msra.mxu0 %v437
  %2348 = vmatpush.bf16.msra.mxu0 %v431
  %2349 = vmatpush.bf16.msra.mxu0 %v425
  %2350 = vmatpush.bf16.msra.mxu0 %v419
  %2351 = vmatmul.bf16.gmra.mxu0 %v2209
  %v2352 = vpop.f32.mrf.mxu0
  %v2353 = vadd.f32 0.0, %v2352
  %v2354 = vpop.f32.mrf.mxu0
  %2355 = vdwg.mxu0
  %2356 = vmatpush.bf16.msra.mxu0 %v509
  %2357 = vmatpush.bf16.msra.mxu0 %v503
  %2358 = vmatpush.bf16.msra.mxu0 %v497
  %2359 = vmatpush.bf16.msra.mxu0 %v491
  %2360 = vmatpush.bf16.msra.mxu0 %v485
  %2361 = vmatpush.bf16.msra.mxu0 %v479
  %2362 = vmatpush.bf16.msra.mxu0 %v473
  %2363 = vmatpush.bf16.msra.mxu0 %v467
  %2364 = vmatmul.bf16.gmra.mxu0 %v2210
  %v2365 = vpop.f32.mrf.mxu0
  %v2366 = vadd.f32 %v2353, %v2365
  %v2367 = vpop.f32.mrf.mxu0
  %2368 = vdwg.mxu0
  %v2369 = vadd.f32 %v2200, %v2236
  %v2370 = vadd.f32 %v2201, %v2262
  %v2371 = vxor.u32 %v2369, 2147483648
  %v2372 = vxor.u32 %v2370, 2147483648
  %v2373 = vmul.f32 %v2371, 1.442695
  %v2374 = vpow.pop %v2373
  %v2375 = vmul.f32 %v2372, 1.442695
  %v2376 = vpow.pop %v2375
  %v2377 = vadd.f32 %v2374, 1.0
  %v2378 = vadd.f32 %v2376, 1.0
  %v2379 = vrcp.pop %v2377
  %v2380 = vmul.f32 %v2377, %v2379
  %v2381 = vsub.f32 1.0, %v2380
  %v2382 = vmul.f32 %v2379, %v2381
  %v2383 = vadd.f32 %v2379, %v2382
  %vm2384 = vweird.f32 %v2377
  %vm2385 = vweird.f32 %v2379
  %vm2386 = vmor %vm2384, %vm2385
  %v2387 = vsel %vm2386, %v2379, %v2383
  %v2388 = vand.u32 2147483647, %v2377
  %vm2389 = vcmp.eq.f32.partialorder %v2388, 8.507059e+37
  %v2390 = vand.u32 %v2377, 2147483648
  %v2391 = vor.u32 1.1754944e-38, %v2390
  %v2392 = vsel %vm2389, %v2391, %v2387
  %v2393 = vmul.f32 1.0, %v2392
  %v2394 = vrcp.pop %v2378
  %v2395 = vmul.f32 %v2378, %v2394
  %v2396 = vsub.f32 1.0, %v2395
  %v2397 = vmul.f32 %v2394, %v2396
  %v2398 = vadd.f32 %v2394, %v2397
  %vm2399 = vweird.f32 %v2378
  %vm2400 = vweird.f32 %v2394
  %vm2401 = vmor %vm2399, %vm2400
  %v2402 = vsel %vm2401, %v2394, %v2398
  %v2403 = vand.u32 2147483647, %v2378
  %vm2404 = vcmp.eq.f32.partialorder %v2403, 8.507059e+37
  %v2405 = vand.u32 %v2378, 2147483648
  %v2406 = vor.u32 1.1754944e-38, %v2405
  %v2407 = vsel %vm2404, %v2406, %v2402
  %v2408 = vmul.f32 1.0, %v2407
  %v2409 = vadd.f32 %v2202, %v2288
  %v2410 = vadd.f32 %v2203, %v2314
  %v2411 = vxor.u32 %v2409, 2147483648
  %v2412 = vxor.u32 %v2410, 2147483648
  %v2413 = vmul.f32 %v2411, 1.442695
  %v2414 = vpow.pop %v2413
  %v2415 = vmul.f32 %v2412, 1.442695
  %v2416 = vpow.pop %v2415
  %v2417 = vadd.f32 %v2414, 1.0
  %v2418 = vadd.f32 %v2416, 1.0
  %v2419 = vrcp.pop %v2417
  %v2420 = vmul.f32 %v2417, %v2419
  %v2421 = vsub.f32 1.0, %v2420
  %v2422 = vmul.f32 %v2419, %v2421
  %v2423 = vadd.f32 %v2419, %v2422
  %vm2424 = vweird.f32 %v2417
  %vm2425 = vweird.f32 %v2419
  %vm2426 = vmor %vm2424, %vm2425
  %v2427 = vsel %vm2426, %v2419, %v2423
  %v2428 = vand.u32 2147483647, %v2417
  %vm2429 = vcmp.eq.f32.partialorder %v2428, 8.507059e+37
  %v2430 = vand.u32 %v2417, 2147483648
  %v2431 = vor.u32 1.1754944e-38, %v2430
  %v2432 = vsel %vm2429, %v2431, %v2427
  %v2433 = vmul.f32 1.0, %v2432
  %v2434 = vrcp.pop %v2418
  %v2435 = vmul.f32 %v2418, %v2434
  %v2436 = vsub.f32 1.0, %v2435
  %v2437 = vmul.f32 %v2434, %v2436
  %v2438 = vadd.f32 %v2434, %v2437
  %vm2439 = vweird.f32 %v2418
  %vm2440 = vweird.f32 %v2434
  %vm2441 = vmor %vm2439, %vm2440
  %v2442 = vsel %vm2441, %v2434, %v2438
  %v2443 = vand.u32 2147483647, %v2418
  %vm2444 = vcmp.eq.f32.partialorder %v2443, 8.507059e+37
  %v2445 = vand.u32 %v2418, 2147483648
  %v2446 = vor.u32 1.1754944e-38, %v2445
  %v2447 = vsel %vm2444, %v2446, %v2442
  %v2448 = vmul.f32 1.0, %v2447
  %v2449 = vadd.f32 %v2340, %v843
  %v2450 = vadd.f32 %v2366, %v844
  %v2451 = vmul.f32 %v2393, %v2449
  %v2452 = vmul.f32 %v2408, %v2450
  %v2453 = vadd.f32 %v2204, %v2451
  %v2454 = vadd.f32 %v2205, %v2452
  %v2455 = vtanh.pop %v2453
  %v2456 = vtanh.pop %v2454
  %v2457 = vsub.f32 1.0, %v2433
  %v2458 = vsub.f32 1.0, %v2448
  %v2459 = vmul.f32 %v2457, %v2455
  %v2460 = vmul.f32 %v2458, %v2456
  %v2461 = vmul.f32 %v2433, %v2196
  %v2462 = vmul.f32 %v2448, %v2197
  %v2463 = vadd.f32 %v2459, %v2461
  %v2464 = vadd.f32 %v2460, %v2462
  %v2465 = vpack.c.bf16 %v2464, %v2463
  %s2466 = scalar_lea.vmem %s0, 336
  %v2467 = vld [vmem:[%s2466] sm:$0xff]
  %v2468 = vld [vmem:[%s2466 + $0x8] sm:$0xff]
  %v2469 = vld [vmem:[%s2466 + $0x10] sm:$0xff]
  %v2470 = vld [vmem:[%s2466 + $0x18] sm:$0xff]
  %v2471 = vld [vmem:[%s2466 + $0x20] sm:$0xff]
  %v2472 = vld [vmem:[%s2466 + $0x28] sm:$0xff]
  %v2474 = vunpack.c.l.b16 %v2465
  %v2475 = vunpack.c.h.b16 %v2465
  %v2476 = vpack.c.b16 %v2474, %v2474
  %v2477 = vpack.c.b16 %v2475, %v2475
  %2480 = vmatpush.bf16.msra.mxu0 %v456
  %2481 = vmatpush.bf16.msra.mxu0 %v450
  %2482 = vmatpush.bf16.msra.mxu0 %v444
  %2483 = vmatpush.bf16.msra.mxu0 %v438
  %2484 = vmatpush.bf16.msra.mxu0 %v432
  %2485 = vmatpush.bf16.msra.mxu0 %v426
  %2486 = vmatpush.bf16.msra.mxu0 %v420
  %2487 = vmatpush.bf16.msra.mxu0 %v414
  %2488 = vmatmul.bf16.gmra.mxu0 %v2476
  %v2489 = vpop.f32.mrf.mxu0
  %v2490 = vadd.f32 0.0, %v2489
  %v2491 = vpop.f32.mrf.mxu0
  %2492 = vdwg.mxu0
  %2493 = vmatpush.bf16.msra.mxu0 %v504
  %2494 = vmatpush.bf16.msra.mxu0 %v498
  %2495 = vmatpush.bf16.msra.mxu0 %v492
  %2496 = vmatpush.bf16.msra.mxu0 %v486
  %2497 = vmatpush.bf16.msra.mxu0 %v480
  %2498 = vmatpush.bf16.msra.mxu0 %v474
  %2499 = vmatpush.bf16.msra.mxu0 %v468
  %2500 = vmatpush.bf16.msra.mxu0 %v462
  %2501 = vmatmul.bf16.gmra.mxu0 %v2477
  %v2502 = vpop.f32.mrf.mxu0
  %v2503 = vadd.f32 %v2490, %v2502
  %v2504 = vpop.f32.mrf.mxu0
  %2505 = vdwg.mxu0
  %2506 = vmatpush.bf16.msra.mxu0 %v457
  %2507 = vmatpush.bf16.msra.mxu0 %v451
  %2508 = vmatpush.bf16.msra.mxu0 %v445
  %2509 = vmatpush.bf16.msra.mxu0 %v439
  %2510 = vmatpush.bf16.msra.mxu0 %v433
  %2511 = vmatpush.bf16.msra.mxu0 %v427
  %2512 = vmatpush.bf16.msra.mxu0 %v421
  %2513 = vmatpush.bf16.msra.mxu0 %v415
  %2514 = vmatmul.bf16.gmra.mxu0 %v2476
  %v2515 = vpop.f32.mrf.mxu0
  %v2516 = vadd.f32 0.0, %v2515
  %v2517 = vpop.f32.mrf.mxu0
  %2518 = vdwg.mxu0
  %2519 = vmatpush.bf16.msra.mxu0 %v505
  %2520 = vmatpush.bf16.msra.mxu0 %v499
  %2521 = vmatpush.bf16.msra.mxu0 %v493
  %2522 = vmatpush.bf16.msra.mxu0 %v487
  %2523 = vmatpush.bf16.msra.mxu0 %v481
  %2524 = vmatpush.bf16.msra.mxu0 %v475
  %2525 = vmatpush.bf16.msra.mxu0 %v469
  %2526 = vmatpush.bf16.msra.mxu0 %v463
  %2527 = vmatmul.bf16.gmra.mxu0 %v2477
  %v2528 = vpop.f32.mrf.mxu0
  %v2529 = vadd.f32 %v2516, %v2528
  %v2530 = vpop.f32.mrf.mxu0
  %2531 = vdwg.mxu0
  %2532 = vmatpush.bf16.msra.mxu0 %v458
  %2533 = vmatpush.bf16.msra.mxu0 %v452
  %2534 = vmatpush.bf16.msra.mxu0 %v446
  %2535 = vmatpush.bf16.msra.mxu0 %v440
  %2536 = vmatpush.bf16.msra.mxu0 %v434
  %2537 = vmatpush.bf16.msra.mxu0 %v428
  %2538 = vmatpush.bf16.msra.mxu0 %v422
  %2539 = vmatpush.bf16.msra.mxu0 %v416
  %2540 = vmatmul.bf16.gmra.mxu0 %v2476
  %v2541 = vpop.f32.mrf.mxu0
  %v2542 = vadd.f32 0.0, %v2541
  %v2543 = vpop.f32.mrf.mxu0
  %2544 = vdwg.mxu0
  %2545 = vmatpush.bf16.msra.mxu0 %v506
  %2546 = vmatpush.bf16.msra.mxu0 %v500
  %2547 = vmatpush.bf16.msra.mxu0 %v494
  %2548 = vmatpush.bf16.msra.mxu0 %v488
  %2549 = vmatpush.bf16.msra.mxu0 %v482
  %2550 = vmatpush.bf16.msra.mxu0 %v476
  %2551 = vmatpush.bf16.msra.mxu0 %v470
  %2552 = vmatpush.bf16.msra.mxu0 %v464
  %2553 = vmatmul.bf16.gmra.mxu0 %v2477
  %v2554 = vpop.f32.mrf.mxu0
  %v2555 = vadd.f32 %v2542, %v2554
  %v2556 = vpop.f32.mrf.mxu0
  %2557 = vdwg.mxu0
  %2558 = vmatpush.bf16.msra.mxu0 %v459
  %2559 = vmatpush.bf16.msra.mxu0 %v453
  %2560 = vmatpush.bf16.msra.mxu0 %v447
  %2561 = vmatpush.bf16.msra.mxu0 %v441
  %2562 = vmatpush.bf16.msra.mxu0 %v435
  %2563 = vmatpush.bf16.msra.mxu0 %v429
  %2564 = vmatpush.bf16.msra.mxu0 %v423
  %2565 = vmatpush.bf16.msra.mxu0 %v417
  %2566 = vmatmul.bf16.gmra.mxu0 %v2476
  %v2567 = vpop.f32.mrf.mxu0
  %v2568 = vadd.f32 0.0, %v2567
  %v2569 = vpop.f32.mrf.mxu0
  %2570 = vdwg.mxu0
  %2571 = vmatpush.bf16.msra.mxu0 %v507
  %2572 = vmatpush.bf16.msra.mxu0 %v501
  %2573 = vmatpush.bf16.msra.mxu0 %v495
  %2574 = vmatpush.bf16.msra.mxu0 %v489
  %2575 = vmatpush.bf16.msra.mxu0 %v483
  %2576 = vmatpush.bf16.msra.mxu0 %v477
  %2577 = vmatpush.bf16.msra.mxu0 %v471
  %2578 = vmatpush.bf16.msra.mxu0 %v465
  %2579 = vmatmul.bf16.gmra.mxu0 %v2477
  %v2580 = vpop.f32.mrf.mxu0
  %v2581 = vadd.f32 %v2568, %v2580
  %v2582 = vpop.f32.mrf.mxu0
  %2583 = vdwg.mxu0
  %2584 = vmatpush.bf16.msra.mxu0 %v460
  %2585 = vmatpush.bf16.msra.mxu0 %v454
  %2586 = vmatpush.bf16.msra.mxu0 %v448
  %2587 = vmatpush.bf16.msra.mxu0 %v442
  %2588 = vmatpush.bf16.msra.mxu0 %v436
  %2589 = vmatpush.bf16.msra.mxu0 %v430
  %2590 = vmatpush.bf16.msra.mxu0 %v424
  %2591 = vmatpush.bf16.msra.mxu0 %v418
  %2592 = vmatmul.bf16.gmra.mxu0 %v2476
  %v2593 = vpop.f32.mrf.mxu0
  %v2594 = vadd.f32 0.0, %v2593
  %v2595 = vpop.f32.mrf.mxu0
  %2596 = vdwg.mxu0
  %2597 = vmatpush.bf16.msra.mxu0 %v508
  %2598 = vmatpush.bf16.msra.mxu0 %v502
  %2599 = vmatpush.bf16.msra.mxu0 %v496
  %2600 = vmatpush.bf16.msra.mxu0 %v490
  %2601 = vmatpush.bf16.msra.mxu0 %v484
  %2602 = vmatpush.bf16.msra.mxu0 %v478
  %2603 = vmatpush.bf16.msra.mxu0 %v472
  %2604 = vmatpush.bf16.msra.mxu0 %v466
  %2605 = vmatmul.bf16.gmra.mxu0 %v2477
  %v2606 = vpop.f32.mrf.mxu0
  %v2607 = vadd.f32 %v2594, %v2606
  %v2608 = vpop.f32.mrf.mxu0
  %2609 = vdwg.mxu0
  %2610 = vmatpush.bf16.msra.mxu0 %v461
  %2611 = vmatpush.bf16.msra.mxu0 %v455
  %2612 = vmatpush.bf16.msra.mxu0 %v449
  %2613 = vmatpush.bf16.msra.mxu0 %v443
  %2614 = vmatpush.bf16.msra.mxu0 %v437
  %2615 = vmatpush.bf16.msra.mxu0 %v431
  %2616 = vmatpush.bf16.msra.mxu0 %v425
  %2617 = vmatpush.bf16.msra.mxu0 %v419
  %2618 = vmatmul.bf16.gmra.mxu0 %v2476
  %v2619 = vpop.f32.mrf.mxu0
  %v2620 = vadd.f32 0.0, %v2619
  %v2621 = vpop.f32.mrf.mxu0
  %2622 = vdwg.mxu0
  %2623 = vmatpush.bf16.msra.mxu0 %v509
  %2624 = vmatpush.bf16.msra.mxu0 %v503
  %2625 = vmatpush.bf16.msra.mxu0 %v497
  %2626 = vmatpush.bf16.msra.mxu0 %v491
  %2627 = vmatpush.bf16.msra.mxu0 %v485
  %2628 = vmatpush.bf16.msra.mxu0 %v479
  %2629 = vmatpush.bf16.msra.mxu0 %v473
  %2630 = vmatpush.bf16.msra.mxu0 %v467
  %2631 = vmatmul.bf16.gmra.mxu0 %v2477
  %v2632 = vpop.f32.mrf.mxu0
  %v2633 = vadd.f32 %v2620, %v2632
  %v2634 = vpop.f32.mrf.mxu0
  %2635 = vdwg.mxu0
  %v2636 = vadd.f32 %v2467, %v2503
  %v2637 = vadd.f32 %v2468, %v2529
  %v2638 = vxor.u32 %v2636, 2147483648
  %v2639 = vxor.u32 %v2637, 2147483648
  %v2640 = vmul.f32 %v2638, 1.442695
  %v2641 = vpow.pop %v2640
  %v2642 = vmul.f32 %v2639, 1.442695
  %v2643 = vpow.pop %v2642
  %v2644 = vadd.f32 %v2641, 1.0
  %v2645 = vadd.f32 %v2643, 1.0
  %v2646 = vrcp.pop %v2644
  %v2647 = vmul.f32 %v2644, %v2646
  %v2648 = vsub.f32 1.0, %v2647
  %v2649 = vmul.f32 %v2646, %v2648
  %v2650 = vadd.f32 %v2646, %v2649
  %vm2651 = vweird.f32 %v2644
  %vm2652 = vweird.f32 %v2646
  %vm2653 = vmor %vm2651, %vm2652
  %v2654 = vsel %vm2653, %v2646, %v2650
  %v2655 = vand.u32 2147483647, %v2644
  %vm2656 = vcmp.eq.f32.partialorder %v2655, 8.507059e+37
  %v2657 = vand.u32 %v2644, 2147483648
  %v2658 = vor.u32 1.1754944e-38, %v2657
  %v2659 = vsel %vm2656, %v2658, %v2654
  %v2660 = vmul.f32 1.0, %v2659
  %v2661 = vrcp.pop %v2645
  %v2662 = vmul.f32 %v2645, %v2661
  %v2663 = vsub.f32 1.0, %v2662
  %v2664 = vmul.f32 %v2661, %v2663
  %v2665 = vadd.f32 %v2661, %v2664
  %vm2666 = vweird.f32 %v2645
  %vm2667 = vweird.f32 %v2661
  %vm2668 = vmor %vm2666, %vm2667
  %v2669 = vsel %vm2668, %v2661, %v2665
  %v2670 = vand.u32 2147483647, %v2645
  %vm2671 = vcmp.eq.f32.partialorder %v2670, 8.507059e+37
  %v2672 = vand.u32 %v2645, 2147483648
  %v2673 = vor.u32 1.1754944e-38, %v2672
  %v2674 = vsel %vm2671, %v2673, %v2669
  %v2675 = vmul.f32 1.0, %v2674
  %v2676 = vadd.f32 %v2469, %v2555
  %v2677 = vadd.f32 %v2470, %v2581
  %v2678 = vxor.u32 %v2676, 2147483648
  %v2679 = vxor.u32 %v2677, 2147483648
  %v2680 = vmul.f32 %v2678, 1.442695
  %v2681 = vpow.pop %v2680
  %v2682 = vmul.f32 %v2679, 1.442695
  %v2683 = vpow.pop %v2682
  %v2684 = vadd.f32 %v2681, 1.0
  %v2685 = vadd.f32 %v2683, 1.0
  %v2686 = vrcp.pop %v2684
  %v2687 = vmul.f32 %v2684, %v2686
  %v2688 = vsub.f32 1.0, %v2687
  %v2689 = vmul.f32 %v2686, %v2688
  %v2690 = vadd.f32 %v2686, %v2689
  %vm2691 = vweird.f32 %v2684
  %vm2692 = vweird.f32 %v2686
  %vm2693 = vmor %vm2691, %vm2692
  %v2694 = vsel %vm2693, %v2686, %v2690
  %v2695 = vand.u32 2147483647, %v2684
  %vm2696 = vcmp.eq.f32.partialorder %v2695, 8.507059e+37
  %v2697 = vand.u32 %v2684, 2147483648
  %v2698 = vor.u32 1.1754944e-38, %v2697
  %v2699 = vsel %vm2696, %v2698, %v2694
  %v2700 = vmul.f32 1.0, %v2699
  %v2701 = vrcp.pop %v2685
  %v2702 = vmul.f32 %v2685, %v2701
  %v2703 = vsub.f32 1.0, %v2702
  %v2704 = vmul.f32 %v2701, %v2703
  %v2705 = vadd.f32 %v2701, %v2704
  %vm2706 = vweird.f32 %v2685
  %vm2707 = vweird.f32 %v2701
  %vm2708 = vmor %vm2706, %vm2707
  %v2709 = vsel %vm2708, %v2701, %v2705
  %v2710 = vand.u32 2147483647, %v2685
  %vm2711 = vcmp.eq.f32.partialorder %v2710, 8.507059e+37
  %v2712 = vand.u32 %v2685, 2147483648
  %v2713 = vor.u32 1.1754944e-38, %v2712
  %v2714 = vsel %vm2711, %v2713, %v2709
  %v2715 = vmul.f32 1.0, %v2714
  %v2716 = vadd.f32 %v2607, %v843
  %v2717 = vadd.f32 %v2633, %v844
  %v2718 = vmul.f32 %v2660, %v2716
  %v2719 = vmul.f32 %v2675, %v2717
  %v2720 = vadd.f32 %v2471, %v2718
  %v2721 = vadd.f32 %v2472, %v2719
  %v2722 = vtanh.pop %v2720
  %v2723 = vtanh.pop %v2721
  %v2724 = vsub.f32 1.0, %v2700
  %v2725 = vsub.f32 1.0, %v2715
  %v2726 = vmul.f32 %v2724, %v2722
  %v2727 = vmul.f32 %v2725, %v2723
  %v2728 = vmul.f32 %v2700, %v2463
  %v2729 = vmul.f32 %v2715, %v2464
  %v2730 = vadd.f32 %v2726, %v2728
  %v2731 = vadd.f32 %v2727, %v2729
  %v2732 = vpack.c.bf16 %v2731, %v2730
  %2733 = vst [vmem:[%s6] sm:$0xff] %v2730
  %2734 = vst [vmem:[%s6 + $0x8] sm:$0xff] %v2731
  %v2736 = vunpack.c.l.b16 %v2732
  %v2737 = vunpack.c.h.b16 %v2732
  %v2738 = vpack.c.b16 %v2736, %v2736
  %v2739 = vpack.c.b16 %v2737, %v2737
  %vm2740 = vcmask 1043456
  %v2743 = vsel %vm2740, %v874, %v1141
  %v2747 = vsel %vm2740, %v875, %v1142
  %v2751 = vsel %vm2740, %v1408, %v1675
  %v2755 = vsel %vm2740, %v1409, %v1676
  %v2759 = vsel %vm2740, %v1942, %v2209
  %v2763 = vsel %vm2740, %v1943, %v2210
  %v2767 = vsel %vm2740, %v2476, %v2738
  %v2771 = vsel %vm2740, %v2477, %v2739
  %v2773 = vld [vmem:[%s3] sm:$0xf]
  %v2774 = vld [vmem:[%s3 + $0x4] sm:$0xf]
  %v2775 = vld [vmem:[%s3 + $0x8] sm:$0xf]
  %v2776 = vld [vmem:[%s3 + $0xc] sm:$0xf]
  %v2777 = vld [vmem:[%s3 + $0x10] sm:$0xf]
  %v2778 = vld [vmem:[%s3 + $0x14] sm:$0xf]
  %v2779 = vld [vmem:[%s3 + $0x18] sm:$0xf]
  %v2780 = vld [vmem:[%s3 + $0x1c] sm:$0xf]
  %v2781 = vld [vmem:[%s3 + $0x20] sm:$0xf]
  %v2782 = vld [vmem:[%s3 + $0x24] sm:$0xf]
  %v2783 = vld [vmem:[%s3 + $0x28] sm:$0xf]
  %v2784 = vld [vmem:[%s3 + $0x2c] sm:$0xf]
  %v2785 = vld [vmem:[%s3 + $0x30] sm:$0xf]
  %v2786 = vld [vmem:[%s3 + $0x34] sm:$0xf]
  %v2787 = vld [vmem:[%s3 + $0x38] sm:$0xf]
  %v2788 = vld [vmem:[%s3 + $0x3c] sm:$0xf]
  %v2789 = vld [vmem:[%s3 + $0x40] sm:$0xf]
  %v2790 = vld [vmem:[%s3 + $0x44] sm:$0xf]
  %v2791 = vld [vmem:[%s3 + $0x48] sm:$0xf]
  %v2792 = vld [vmem:[%s3 + $0x4c] sm:$0xf]
  %v2793 = vld [vmem:[%s3 + $0x50] sm:$0xf]
  %v2794 = vld [vmem:[%s3 + $0x54] sm:$0xf]
  %v2795 = vld [vmem:[%s3 + $0x58] sm:$0xf]
  %v2796 = vld [vmem:[%s3 + $0x5c] sm:$0xf]
  %v2797 = vld [vmem:[%s3 + $0x60] sm:$0xf]
  %v2798 = vld [vmem:[%s3 + $0x64] sm:$0xf]
  %v2799 = vld [vmem:[%s3 + $0x68] sm:$0xf]
  %v2800 = vld [vmem:[%s3 + $0x6c] sm:$0xf]
  %v2801 = vld [vmem:[%s3 + $0x70] sm:$0xf]
  %v2802 = vld [vmem:[%s3 + $0x74] sm:$0xf]
  %v2803 = vld [vmem:[%s3 + $0x78] sm:$0xf]
  %v2804 = vld [vmem:[%s3 + $0x7c] sm:$0xf]
  %v2805 = vld [vmem:[%s4] sm:$0x1]
  %v2807 = vperm.slane %v2805, 0
  %v2841 = vunpack.c.l.b16 %v2773
  %v2842 = vunpack.c.l.b16 %v2774
  %v2843 = vunpack.c.l.b16 %v2775
  %v2844 = vunpack.c.l.b16 %v2776
  %v2845 = vunpack.c.l.b16 %v2777
  %v2846 = vunpack.c.l.b16 %v2778
  %v2847 = vunpack.c.l.b16 %v2779
  %v2848 = vunpack.c.l.b16 %v2780
  %v2849 = vunpack.c.l.b16 %v2781
  %v2850 = vunpack.c.l.b16 %v2782
  %v2851 = vunpack.c.l.b16 %v2783
  %v2852 = vunpack.c.l.b16 %v2784
  %v2853 = vunpack.c.l.b16 %v2785
  %v2854 = vunpack.c.l.b16 %v2786
  %v2855 = vunpack.c.l.b16 %v2787
  %v2856 = vunpack.c.l.b16 %v2788
  %v2857 = vunpack.c.l.b16 %v2789
  %v2858 = vunpack.c.l.b16 %v2790
  %v2859 = vunpack.c.l.b16 %v2791
  %v2860 = vunpack.c.l.b16 %v2792
  %v2861 = vunpack.c.l.b16 %v2793
  %v2862 = vunpack.c.l.b16 %v2794
  %v2863 = vunpack.c.l.b16 %v2795
  %v2864 = vunpack.c.l.b16 %v2796
  %v2865 = vunpack.c.l.b16 %v2797
  %v2866 = vunpack.c.l.b16 %v2798
  %v2867 = vunpack.c.l.b16 %v2799
  %v2868 = vunpack.c.l.b16 %v2800
  %v2869 = vunpack.c.l.b16 %v2801
  %v2870 = vunpack.c.l.b16 %v2802
  %v2871 = vunpack.c.l.b16 %v2803
  %v2872 = vunpack.c.l.b16 %v2804
  %v2873 = vpack.c.b16 %v2842, %v2841
  %v2874 = vpack.c.b16 %v2844, %v2843
  %v2875 = vpack.c.b16 %v2846, %v2845
  %v2876 = vpack.c.b16 %v2848, %v2847
  %v2877 = vpack.c.b16 %v2850, %v2849
  %v2878 = vpack.c.b16 %v2852, %v2851
  %v2879 = vpack.c.b16 %v2854, %v2853
  %v2880 = vpack.c.b16 %v2856, %v2855
  %v2881 = vpack.c.b16 %v2858, %v2857
  %v2882 = vpack.c.b16 %v2860, %v2859
  %v2883 = vpack.c.b16 %v2862, %v2861
  %v2884 = vpack.c.b16 %v2864, %v2863
  %v2885 = vpack.c.b16 %v2866, %v2865
  %v2886 = vpack.c.b16 %v2868, %v2867
  %v2887 = vpack.c.b16 %v2870, %v2869
  %v2888 = vpack.c.b16 %v2872, %v2871
  %2905 = vmatpush.bf16.msra.mxu0 %v2880
  %2906 = vmatpush.bf16.msra.mxu0 %v2879
  %2907 = vmatpush.bf16.msra.mxu0 %v2878
  %2908 = vmatpush.bf16.msra.mxu0 %v2877
  %2909 = vmatpush.bf16.msra.mxu0 %v2876
  %2910 = vmatpush.bf16.msra.mxu0 %v2875
  %2911 = vmatpush.bf16.msra.mxu0 %v2874
  %2912 = vmatpush.bf16.msra.mxu0 %v2873
  %2913 = vmatmul.bf16.gmra.mxu0 %v2743
  %v2914 = vpop.f32.mrf.mxu0
  %v2915 = vadd.f32 %v2807, %v2914
  %v2916 = vpop.f32.mrf.mxu0
  %v2917 = vadd.f32 %v2807, %v2916
  %2918 = vmatmul.bf16.gmra.mxu0 %v2751
  %v2919 = vpop.f32.mrf.mxu0
  %v2920 = vadd.f32 %v2807, %v2919
  %v2921 = vpop.f32.mrf.mxu0
  %v2922 = vadd.f32 %v2807, %v2921
  %2923 = vmatmul.bf16.gmra.mxu0 %v2759
  %v2924 = vpop.f32.mrf.mxu0
  %v2925 = vadd.f32 %v2807, %v2924
  %v2926 = vpop.f32.mrf.mxu0
  %v2927 = vadd.f32 %v2807, %v2926
  %2928 = vmatmul.bf16.gmra.mxu0 %v2767
  %v2929 = vpop.f32.mrf.mxu0
  %v2930 = vadd.f32 %v2807, %v2929
  %v2931 = vpop.f32.mrf.mxu0
  %v2932 = vadd.f32 %v2807, %v2931
  %2933 = vdwg.mxu0
  %2934 = vmatpush.bf16.msra.mxu0 %v2888
  %2935 = vmatpush.bf16.msra.mxu0 %v2887
  %2936 = vmatpush.bf16.msra.mxu0 %v2886
  %2937 = vmatpush.bf16.msra.mxu0 %v2885
  %2938 = vmatpush.bf16.msra.mxu0 %v2884
  %2939 = vmatpush.bf16.msra.mxu0 %v2883
  %2940 = vmatpush.bf16.msra.mxu0 %v2882
  %2941 = vmatpush.bf16.msra.mxu0 %v2881
  %2942 = vmatmul.bf16.gmra.mxu0 %v2747
  %v2943 = vpop.f32.mrf.mxu0
  %v2944 = vadd.f32 %v2915, %v2943
  %v2945 = vpop.f32.mrf.mxu0
  %v2946 = vadd.f32 %v2917, %v2945
  %2947 = vmatmul.bf16.gmra.mxu0 %v2755
  %v2948 = vpop.f32.mrf.mxu0
  %v2949 = vadd.f32 %v2920, %v2948
  %v2950 = vpop.f32.mrf.mxu0
  %v2951 = vadd.f32 %v2922, %v2950
  %2952 = vmatmul.bf16.gmra.mxu0 %v2763
  %v2953 = vpop.f32.mrf.mxu0
  %v2954 = vadd.f32 %v2925, %v2953
  %v2955 = vpop.f32.mrf.mxu0
  %v2956 = vadd.f32 %v2927, %v2955
  %2957 = vmatmul.bf16.gmra.mxu0 %v2771
  %v2958 = vpop.f32.mrf.mxu0
  %v2959 = vadd.f32 %v2930, %v2958
  %v2960 = vpop.f32.mrf.mxu0
  %v2961 = vadd.f32 %v2932, %v2960
  %2962 = vdwg.mxu0
  %2963 = vst [vmem:[%s5] sm:$0xff] %v2944
  %2964 = vst [vmem:[%s5 + $0x8] sm:$0xff] %v2946
  %2965 = vst [vmem:[%s5 + $0x10] sm:$0xff] %v2949
  %2966 = vst [vmem:[%s5 + $0x18] sm:$0xff] %v2951
  %2967 = vst [vmem:[%s5 + $0x20] sm:$0xff] %v2954
  %2968 = vst [vmem:[%s5 + $0x28] sm:$0xff] %v2956
  %2969 = vst [vmem:[%s5 + $0x30] sm:$0xff] %v2959
  %2970 = vst [vmem:[%s5 + $0x38] sm:$0xff] %v2961
  // Predicated region
  $region22: #{model5_forward.1} parent=0 // pred_check
    _
  $region23: #{model5_forward.1} parent=0 // pred_check_branch
    %2972 = sbr.rel (0) target = $region25
  $region24: #{model5_forward.1} parent=0 // pred_region
    _
  $region25: #{model5_forward.1} parent=0 // pred_fallthru
    _
  // Predicated region
  $region26: #{model5_forward.1} parent=0 // pred_check
    _
  $region27: #{model5_forward.1} parent=0 // pred_check_branch
    %2974 = sbr.rel (0) target = $region29
  $region28: #{model5_forward.1} parent=0 // pred_region
    _
  $region29: #{model5_forward.1} parent=0 // pred_fallthru
    _
  // Predicated region
  $region30: #{model5_forward.1} parent=0 // pred_check
    _
  $region31: #{model5_forward.1} parent=0 // pred_check_branch
    %2976 = sbr.rel (0) target = $region33
  $region32: #{model5_forward.1} parent=0 // pred_region
    _
  $region33: #{model5_forward.1} parent=0 // pred_fallthru
    _
  // Predicated region
  $region34: #{model5_forward.1} parent=0 // pred_check
    _
  $region35: #{model5_forward.1} parent=0 // pred_check_branch
    %2978 = sbr.rel (0) target = $region37
  $region36: #{model5_forward.1} parent=0 // pred_region
    _
  $region37: #{model5_forward.1} parent=0 // pred_fallthru
    _

</llo_original>
